<compile_context>
chip_gen: v7x
topology: tpu7x:2x2x1
jax: 0.10.0
libtpu: 0.0.40
codegen_flags: <defaults>
</compile_context>

<pallas_src>
import functools

import jax
import jax.numpy as jnp
from jax.experimental import pallas as pl
from jax.experimental.pallas import tpu as pltpu


# ----------------------------------------------------------------------------
# Fused per-block kernel: encoder(+Jacobian), decoder, all loss reductions,
# negative-sample generation and the batched second encoder pass.
# ----------------------------------------------------------------------------
def _loss_kernel(x_ref, xn_ref, mask_ref,
                 w1_ref, b1_ref, w2_ref, b2_ref, wjac_ref,
                 dw1_ref, db1_ref, dw2_ref, db2_ref,
                 out_ref, *, N, M, D, K, TD, alpha, eps):
    f32 = jnp.float32
    Pb = x_ref.shape[0]          # rows handled by this grid step (bn * M)
    P = N * M                    # global number of on-manifold points
    KD = K * D

    x = x_ref[...]               # (Pb, D)
    xn = xn_ref[...]             # (Pb, D)  next point in trajectory (0 at ends)
    m_valid = mask_ref[:, 0:1]   # (Pb, 1)  1 where a (p, p+1) pair exists
    m_start = mask_ref[:, 1:2]   # (Pb, 1)  1 at first point of a trajectory
    m_end2 = mask_ref[:, 2:3]    # (Pb, 1)  1 at second-to-last point

    w1 = w1_ref[...]             # (D, H)
    b1 = b1_ref[...]             # (1, H)
    w2 = w2_ref[...]             # (H, K)
    b2 = b2_ref[...]             # (1, K)
    wjac = wjac_ref[...]         # (H, K*D)

    # In-kernel selector constants (no extra input DMAs, no integer div/mod).
    jj = jax.lax.broadcasted_iota(jnp.int32, (KD, K), 0)
    kk = jax.lax.broadcasted_iota(jnp.int32, (KD, K), 1)
    selk = ((jj >= kk * D) & (jj < (kk + 1) * D)).astype(f32)     # sum_d within group k
    kk2 = jax.lax.broadcasted_iota(jnp.int32, (K, KD), 0)
    jj2 = jax.lax.broadcasted_iota(jnp.int32, (K, KD), 1)
    repk = ((jj2 >= kk2 * D) & (jj2 < (kk2 + 1) * D)).astype(f32)  # per-k scalar -> D lanes

    def encoder(pts):
        # pts (rows, D) -> out (rows, K), lane-dense jac (rows, K*D),
        #   jac[r, k*D + d] = d out_k / d pts_d
        a = jnp.tanh(jnp.dot(pts, w1, preferred_element_type=f32) + b1)
        o = jnp.dot(a, w2, preferred_element_type=f32) + b2
        j = jnp.dot(1.0 - a * a, wjac, preferred_element_type=f32)
        return o, j

    def sum_over_k(sq):
        # (rows, K*D) -> (rows, D): sum of the K groups (lane-slice VPU adds)
        acc = sq[:, 0:D]
        for k in range(1, K):
            acc = acc + sq[:, k * D:(k + 1) * D]
        return acc

    # ----------------------------- on-manifold pass -----------------------------
    out, jac = encoder(x)                                         # (Pb,K), (Pb,KD)

    # manifold_norm: L1 of the normal coords, mean over points.
    s_mnorm = jnp.sum(jnp.abs(out[:, TD:]))

    # reconstruction: decoder on tangent coords, per-point L2 error vs coords.
    ad = jnp.tanh(jnp.dot(out[:, :TD], dw1_ref[...],
                          preferred_element_type=f32) + db1_ref[...])
    rec = jnp.dot(ad, dw2_ref[...], preferred_element_type=f32) + db2_ref[...]
    diff = rec - x
    s_rec = jnp.sum(jnp.sqrt(jnp.sum(diff * diff, axis=-1, keepdims=True)))

    gsq = jac * jac
    gl_sq = jnp.dot(gsq, selk, preferred_element_type=f32)        # (Pb,K) sum over d
    gl = jnp.sqrt(gl_sq)                                          # ||grads[p,k,:]||
    gk = jnp.sqrt(sum_over_k(gsq))                                # (Pb,D) sum over k

    # manifold_eikonal: torch reduces dim=2 (the K axis of (N,M,K,D)).
    s_eik = jnp.sum(jnp.abs(gk - 1.0))

    # orthogonal: |<u_i, u_j>| over all off-diagonal pairs via K-1 cyclic rolls.
    inv_gl = jax.lax.rsqrt(gl_sq)                                 # torch parity: no eps
    u = jac * jnp.dot(inv_gl, repk, preferred_element_type=f32)   # (Pb, KD) unit rows
    s_orth = jnp.zeros((), f32)
    for s in range(1, K):
        u_roll = pltpu.roll(u, shift=s * D, axis=1)               # XLU, preserves d index
        inner = jnp.dot(u * u_roll, selk, preferred_element_type=f32)   # (Pb,K)
        s_orth = s_orth + jnp.sum(jnp.abs(inner))

    # -------------- one tall pass: negatives + next-point Jacobian --------------
    cand0 = (1.0 + eps) * x - eps * xn        # tube end at trajectory starts
    cand1 = (1.0 + eps) * xn - eps * x        # tube end at second-to-last points
    chunks = [xn, cand0, cand1]
    for k in range(K):
        d_k = eps * jac[:, k * D:(k + 1) * D]
        chunks.append(x + d_k)
        chunks.append(x - d_k)
    neg = jnp.concatenate(chunks, axis=0)     # ((2K+3)*Pb, D)
    o_n, j_n = encoder(neg)                   # (R, K), (R, K*D)

    # cosine between Jacobian rows of consecutive trajectory points.
    jac_next = j_n[:Pb]                                                     # (Pb,KD)
    gl_next = jnp.sqrt(jnp.dot(jac_next * jac_next, selk,
                               preferred_element_type=f32))                 # (Pb,K)
    dots = jnp.dot(jac * jac_next, selk, preferred_element_type=f32)        # (Pb,K)
    denom = gl * gl_next + (1.0 - m_valid)    # keep masked (pair-less) rows finite
    cosines = dots / denom
    vmask = m_valid > 0.5
    s_negcnt = jnp.sum(jnp.where(vmask & (cosines < 0.0), 1.0, 0.0))
    wcos = jnp.exp(-0.5 * cosines)
    s_cos = jnp.sum(jnp.where(vmask, jnp.abs(wcos * (1.0 - cosines)), 0.0))

    # non-manifold losses (rows [0, Pb) are the x_next helper chunk -> excluded;
    # cand0/cand1 chunks are only valid at trajectory start / second-to-last rows).
    l1 = jnp.sum(jnp.abs(o_n[:, TD:]), axis=-1, keepdims=True)              # (R,1)
    e = jnp.exp(-alpha * l1)
    t = jnp.sum(jnp.abs(jnp.sqrt(sum_over_k(j_n * j_n)) - 1.0),
                axis=-1, keepdims=True)                                     # (R,1)
    s_nmn = (jnp.sum(e[3 * Pb:])
             + jnp.sum(m_start * e[Pb:2 * Pb])
             + jnp.sum(m_end2 * e[2 * Pb:3 * Pb]))
    s_nmeik = (jnp.sum(t[3 * Pb:])
               + jnp.sum(m_start * t[Pb:2 * Pb])
               + jnp.sum(m_end2 * t[2 * Pb:3 * Pb]))

    # -------------------- normalize by global counts and pack -------------------
    n_neg = float(N * (2 + 2 * M * K))        # total negative samples (global)
    vals = [s_mnorm / float(P),
            s_rec / float(P),
            s_eik / float(P * D),
            s_orth / float(P * K * K),
            s_cos / float(N * (M - 1) * K),
            s_nmn / n_neg,
            s_nmeik / (n_neg * D),
            s_negcnt]
    row = jax.lax.broadcasted_iota(jnp.int32, (8, 128), 0)
    col = jax.lax.broadcasted_iota(jnp.int32, (8, 128), 1)
    acc = jnp.zeros((8, 128), f32)
    for idx, v in enumerate(vals):
        acc = acc + jnp.where((row == 0) & (col == idx), v, 0.0)
    out_ref[0] = acc


# ----------------------------------------------------------------------------
# Full Loss.forward wrapper
# ----------------------------------------------------------------------------
def loss_forward(weights, params, enc, dec, tangent_dims, batch,
                 max_rows_per_block=256):
    assert batch.ndim == 3, 'Batch must be 3D - (num_traj, num_points, dim)'
    assert weights['manifold_norm'] > 0 or weights['reconstruction'] > 0
    N, M, D = batch.shape
    assert M > 1, 'This function is only implemented for sequences of at least 2 points'
    P = N * M

    w1, b1, w2, b2 = enc
    dw1, db1, dw2, db2 = dec
    H = w1.shape[1]
    K = w2.shape[1]
    Hd = dw1.shape[1]
    TD = int(tangent_dims)

    f32 = jnp.float32
    batch = batch.astype(f32)
    w1 = w1.astype(f32); b1 = b1.astype(f32)
    w2 = w2.astype(f32); b2 = b2.astype(f32)
    dw1 = dw1.astype(f32); db1 = db1.astype(f32)
    dw2 = dw2.astype(f32); db2 = db2.astype(f32)

    # Precomputed Jacobian weights:  wjac[j, k*D + d] = w2[j, k] * w1[d, j]
    wjac = (w2[:, :, None] * w1.T[:, None, :]).reshape(H, K * D)

    x = batch.reshape(P, D)
    # Per-trajectory shifted copy (next point); zero at trajectory ends (masked).
    x_next = jnp.concatenate(
        [batch[:, 1:, :], jnp.zeros((N, 1, D), f32)], axis=1).reshape(P, D)

    m = jnp.arange(P) % M
    masks = jnp.stack([(m != (M - 1)).astype(f32),    # valid consecutive pair
                       (m == 0).astype(f32),          # trajectory start
                       (m == (M - 2)).astype(f32),    # second-to-last point
                       jnp.zeros((P,), f32)], axis=1)  # (P, 4) (lane pad)

    # ------- trajectory-block tiling (bounds VMEM, feeds both v7x cores) -------
    bn = max(1, min(N, max_rows_per_block // max(M, 1)))
    if N > 1:
        bn = min(bn, max(1, N // 2))          # at least two blocks when possible
    while N % bn != 0:
        bn -= 1
    if (bn * M) % 8 != 0 and bn != N:
        bn = N                                # single full-array block is always legal
    num_blocks = N // bn
    Pb = bn * M

    kernel = functools.partial(
        _loss_kernel, N=N, M=M, D=D, K=K, TD=TD,
        alpha=float(params['non_manifold_alpha']),
        eps=float(params['non_manifold_eps']))

    def full_spec(shape):
        return pl.BlockSpec(shape, lambda i: (0,) * len(shape))

    in_specs = [
        pl.BlockSpec((Pb, D), lambda i: (i, 0)),      # x
        pl.BlockSpec((Pb, D), lambda i: (i, 0)),      # x_next
        pl.BlockSpec((Pb, 4), lambda i: (i, 0)),      # masks
        full_spec((D, H)), full_spec((1, H)),
        full_spec((H, K)), full_spec((1, K)),
        full_spec((H, K * D)),
        full_spec((TD, Hd)), full_spec((1, Hd)),
        full_spec((Hd, D)), full_spec((1, D)),
    ]
    out_spec = pl.BlockSpec((1, 8, 128), lambda i: (i, 0, 0))

    enc_rows = (2 * K + 4) * P        # main pass + negatives (+ x_next helper)
    cost = pl.CostEstimate(
        flops=int(2 * enc_rows * (D * H + H * K + H * K * D)
                  + 2 * P * (TD * Hd + Hd * D)
                  + 2 * P * K * D * 3 * K),
        transcendentals=int(enc_rows * H + P * Hd + (2 * K + 3) * P + P * K),
        bytes_accessed=int(4 * (2 * P * D + 4 * P + D * H + H + H * K + K
                                + H * K * D + TD * Hd + Hd + Hd * D + D
                                + num_blocks * 8 * 128)))

    res = pl.pallas_call(
        kernel,
        out_shape=jax.ShapeDtypeStruct((num_blocks, 8, 128), jnp.float32),
        grid=(num_blocks,),
        in_specs=in_specs,
        out_specs=out_spec,
        compiler_params=pltpu.CompilerParams(dimension_semantics=("parallel",)),
        cost_estimate=cost,
    )(x, x_next, masks,
      w1, b1.reshape(1, H), w2, b2.reshape(1, K), wjac,
      dw1, db1.reshape(1, Hd), dw2, db2.reshape(1, D))

    totals = jnp.sum(res, axis=0)[0, :8]      # per-block partials are pre-normalized

    losses = {}
    if weights['manifold_norm'] > 0:
        losses['manifold_norm'] = totals[0]
    if weights['reconstruction'] > 0:
        losses['reconstruction'] = totals[1]
    if weights['manifold_eikonal'] > 0:
        losses['manifold_eikonal'] = totals[2]
    if weights['orthogonal'] > 0:
        losses['orthogonal'] = totals[3]
    if weights['cosine'] > 0:
        losses['cosine'] = totals[4]
    if weights['non_manifold_norm'] > 0:
        losses['non_manifold_norm'] = totals[5]
    if weights['non_manifold_eikonal'] > 0:
        losses['non_manifold_eikonal'] = totals[6]
    # TODO(synk): manifold_div / non_manifold_div need directional_div
    # (second-order autograd through the encoder); geodesic / neg_hess_norm
    # need manifold.distance / manifold.metric_tensor, which the module does
    # not define -- their weights are 0 here.
    neg_count = totals[7]
    return losses, neg_count


if __name__ == "__main__":
    # N trajectories, M points each, dim D; encoder D->H->K, decoder TD->H->D.
    # K*D = 128 keeps the Jacobian lane-dense across exactly one vreg width.
    N, M, D, H, K, TD = 2, 8, 16, 32, 8, 2

    key = jax.random.PRNGKey(0)
    ks = jax.random.split(key, 9)
    enc = (jax.random.normal(ks[0], (D, H), jnp.float32) * 0.3,
           jax.random.normal(ks[1], (H,), jnp.float32) * 0.1,
           jax.random.normal(ks[2], (H, K), jnp.float32) * 0.3,
           jax.random.normal(ks[3], (K,), jnp.float32) * 0.1)
    dec = (jax.random.normal(ks[4], (TD, H), jnp.float32) * 0.3,
           jax.random.normal(ks[5], (H,), jnp.float32) * 0.1,
           jax.random.normal(ks[6], (H, D), jnp.float32) * 0.3,
           jax.random.normal(ks[7], (D,), jnp.float32) * 0.1)
    batch = jax.random.normal(ks[8], (N, M, D), jnp.float32)

    weights = dict(manifold_norm=1.0, reconstruction=1.0, manifold_eikonal=1.0,
                   orthogonal=1.0, cosine=1.0, manifold_div=0.0,
                   non_manifold_norm=1.0, non_manifold_eikonal=1.0,
                   non_manifold_div=0.0, geodesic=0.0, neg_hess_norm=0.0)
    params = dict(non_manifold_alpha=1.0, non_manifold_eps=0.1)

    losses, neg_count = loss_forward(weights, params, enc, dec, TD, batch)
    losses = jax.tree_util.tree_map(jax.block_until_ready, losses)
    neg_count = jax.block_until_ready(neg_count)

    print(f'Number of entries where cosine is negative: {int(neg_count)}')
    for name, val in losses.items():
        print(f'{name}: {float(val):.6f}')
    print("KERNEL_OK")
</pallas_src>

<mosaic_0001>
module attributes {stable_mosaic.version = 11 : i64} {
  func.func @_loss_kernel(%arg0: i32, %arg1: memref<8x16xf32, #tpu.memory_space<vmem>>, %arg2: memref<8x16xf32, #tpu.memory_space<vmem>>, %arg3: memref<8x4xf32, #tpu.memory_space<vmem>>, %arg4: memref<16x32xf32, #tpu.memory_space<vmem>>, %arg5: memref<1x32xf32, #tpu.memory_space<vmem>>, %arg6: memref<32x8xf32, #tpu.memory_space<vmem>>, %arg7: memref<1x8xf32, #tpu.memory_space<vmem>>, %arg8: memref<32x128xf32, #tpu.memory_space<vmem>>, %arg9: memref<2x32xf32, #tpu.memory_space<vmem>>, %arg10: memref<1x32xf32, #tpu.memory_space<vmem>>, %arg11: memref<32x16xf32, #tpu.memory_space<vmem>>, %arg12: memref<1x16xf32, #tpu.memory_space<vmem>>, %arg13: memref<1x8x128xf32, #tpu.memory_space<vmem>>) attributes {dimension_semantics = [#tpu.dimension_semantics<parallel>], iteration_bounds = array<i64: 2>, scalar_prefetch = 0 : i64, scratch_operands = 0 : i64, tpu.core_type = #tpu.core_type<tc>, window_params = [{transform_indices = @transform_0, window_bounds = array<i64: 8, 16>}, {transform_indices = @transform_1, window_bounds = array<i64: 8, 16>}, {transform_indices = @transform_2, window_bounds = array<i64: 8, 4>}, {pipeline_mode = #tpu.pipeline_mode<synchronous>, transform_indices = @transform_3, window_bounds = array<i64: 16, 32>}, {pipeline_mode = #tpu.pipeline_mode<synchronous>, transform_indices = @transform_4, window_bounds = array<i64: 1, 32>}, {pipeline_mode = #tpu.pipeline_mode<synchronous>, transform_indices = @transform_5, window_bounds = array<i64: 32, 8>}, {pipeline_mode = #tpu.pipeline_mode<synchronous>, transform_indices = @transform_6, window_bounds = array<i64: 1, 8>}, {pipeline_mode = #tpu.pipeline_mode<synchronous>, transform_indices = @transform_7, window_bounds = array<i64: 32, 128>}, {pipeline_mode = #tpu.pipeline_mode<synchronous>, transform_indices = @transform_8, window_bounds = array<i64: 2, 32>}, {pipeline_mode = #tpu.pipeline_mode<synchronous>, transform_indices = @transform_9, window_bounds = array<i64: 1, 32>}, {pipeline_mode = #tpu.pipeline_mode<synchronous>, transform_indices = @transform_10, window_bounds = array<i64: 32, 16>}, {pipeline_mode = #tpu.pipeline_mode<synchronous>, transform_indices = @transform_11, window_bounds = array<i64: 1, 16>}, {transform_indices = @transform_12, window_bounds = array<i64: 1, 8, 128>}]} {
    %c0 = arith.constant 0 : index
    %c0_0 = arith.constant 0 : index
    %0 = vector.load %arg1[%c0, %c0_0] : memref<8x16xf32, #tpu.memory_space<vmem>>, vector<8x16xf32>
    %c0_1 = arith.constant 0 : index
    %c0_2 = arith.constant 0 : index
    %1 = vector.load %arg2[%c0_1, %c0_2] : memref<8x16xf32, #tpu.memory_space<vmem>>, vector<8x16xf32>
    %c0_3 = arith.constant 0 : index
    %c0_4 = arith.constant 0 : index
    %2 = vector.load %arg3[%c0_3, %c0_4] : memref<8x4xf32, #tpu.memory_space<vmem>>, vector<8x1xf32>
    %c0_5 = arith.constant 0 : index
    %c1 = arith.constant 1 : index
    %3 = vector.load %arg3[%c0_5, %c1] : memref<8x4xf32, #tpu.memory_space<vmem>>, vector<8x1xf32>
    %c0_6 = arith.constant 0 : index
    %c2 = arith.constant 2 : index
    %4 = vector.load %arg3[%c0_6, %c2] : memref<8x4xf32, #tpu.memory_space<vmem>>, vector<8x1xf32>
    %c0_7 = arith.constant 0 : index
    %c0_8 = arith.constant 0 : index
    %5 = vector.load %arg4[%c0_7, %c0_8] : memref<16x32xf32, #tpu.memory_space<vmem>>, vector<16x32xf32>
    %c0_9 = arith.constant 0 : index
    %c0_10 = arith.constant 0 : index
    %6 = vector.load %arg5[%c0_9, %c0_10] : memref<1x32xf32, #tpu.memory_space<vmem>>, vector<1x32xf32>
    %c0_11 = arith.constant 0 : index
    %c0_12 = arith.constant 0 : index
    %7 = vector.load %arg6[%c0_11, %c0_12] : memref<32x8xf32, #tpu.memory_space<vmem>>, vector<32x8xf32>
    %c0_13 = arith.constant 0 : index
    %c0_14 = arith.constant 0 : index
    %8 = vector.load %arg7[%c0_13, %c0_14] : memref<1x8xf32, #tpu.memory_space<vmem>>, vector<1x8xf32>
    %c0_15 = arith.constant 0 : index
    %c0_16 = arith.constant 0 : index
    %9 = vector.load %arg8[%c0_15, %c0_16] : memref<32x128xf32, #tpu.memory_space<vmem>>, vector<32x128xf32>
    %10 = tpu.iota {dimensions = array<i32: 0>} : vector<128x8xi32>
    %11 = tpu.iota {dimensions = array<i32: 1>} : vector<128x8xi32>
    %c16_i32 = arith.constant 16 : i32
    %12 = vector.broadcast %c16_i32 : i32 to vector<128x8xi32>
    %13 = arith.muli %11, %12 : vector<128x8xi32>
    %14 = arith.cmpi sge, %10, %13 : vector<128x8xi32>
    %c1_i32 = arith.constant 1 : i32
    %15 = vector.broadcast %c1_i32 : i32 to vector<128x8xi32>
    %16 = arith.addi %11, %15 : vector<128x8xi32>
    %c16_i32_17 = arith.constant 16 : i32
    %17 = vector.broadcast %c16_i32_17 : i32 to vector<128x8xi32>
    %18 = arith.muli %16, %17 : vector<128x8xi32>
    %19 = arith.cmpi slt, %10, %18 : vector<128x8xi32>
    %20 = arith.andi %14, %19 : vector<128x8xi1>
    %21 = arith.extui %20 : vector<128x8xi1> to vector<128x8xi32>
    %22 = arith.sitofp %21 : vector<128x8xi32> to vector<128x8xf32>
    %23 = tpu.iota {dimensions = array<i32: 0>} : vector<8x128xi32>
    %24 = tpu.iota {dimensions = array<i32: 1>} : vector<8x128xi32>
    %c16_i32_18 = arith.constant 16 : i32
    %25 = vector.broadcast %c16_i32_18 : i32 to vector<8x128xi32>
    %26 = arith.muli %23, %25 : vector<8x128xi32>
    %27 = arith.cmpi sge, %24, %26 : vector<8x128xi32>
    %c1_i32_19 = arith.constant 1 : i32
    %28 = vector.broadcast %c1_i32_19 : i32 to vector<8x128xi32>
    %29 = arith.addi %23, %28 : vector<8x128xi32>
    %c16_i32_20 = arith.constant 16 : i32
    %30 = vector.broadcast %c16_i32_20 : i32 to vector<8x128xi32>
    %31 = arith.muli %29, %30 : vector<8x128xi32>
    %32 = arith.cmpi slt, %24, %31 : vector<8x128xi32>
    %33 = arith.andi %27, %32 : vector<8x128xi1>
    %34 = arith.extui %33 : vector<8x128xi1> to vector<8x128xi32>
    %35 = arith.sitofp %34 : vector<8x128xi32> to vector<8x128xf32>
    %cst = arith.constant dense<0.000000e+00> : vector<8x32xf32>
    %36 = tpu.matmul %0, %5, %cst {dimension_numbers = #tpu.dot_dimension_numbers<[1], [0], [0], [1], [0, 0, 1, 1], [], []>} : vector<8x16xf32>, vector<16x32xf32>, vector<8x32xf32> -> vector<8x32xf32>
    %37 = vector.broadcast %6 : vector<1x32xf32> to vector<8x32xf32>
    %38 = arith.addf %36, %37 : vector<8x32xf32>
    %39 = math.tanh %38 : vector<8x32xf32>
    %cst_21 = arith.constant dense<0.000000e+00> : vector<8x8xf32>
    %40 = tpu.matmul %39, %7, %cst_21 {dimension_numbers = #tpu.dot_dimension_numbers<[1], [0], [0], [1], [0, 0, 1, 1], [], []>} : vector<8x32xf32>, vector<32x8xf32>, vector<8x8xf32> -> vector<8x8xf32>
    %41 = vector.broadcast %8 : vector<1x8xf32> to vector<8x8xf32>
    %42 = arith.addf %40, %41 : vector<8x8xf32>
    %43 = arith.mulf %39, %39 : vector<8x32xf32>
    %cst_22 = arith.constant 1.000000e+00 : f32
    %44 = vector.broadcast %cst_22 : f32 to vector<8x32xf32>
    %45 = arith.subf %44, %43 : vector<8x32xf32>
    %cst_23 = arith.constant dense<0.000000e+00> : vector<8x128xf32>
    %46 = tpu.matmul %45, %9, %cst_23 {dimension_numbers = #tpu.dot_dimension_numbers<[1], [0], [0], [1], [0, 0, 1, 1], [], []>} : vector<8x32xf32>, vector<32x128xf32>, vector<8x128xf32> -> vector<8x128xf32>
    %47 = vector.extract_strided_slice %42 {offsets = [0, 2], sizes = [8, 6], strides = [1, 1]} : vector<8x8xf32> to vector<8x6xf32>
    %48 = math.absf %47 : vector<8x6xf32>
    %49 = vector.shape_cast %48 : vector<8x6xf32> to vector<1x8x6xf32>
    %cst_24 = arith.constant dense<0.000000e+00> : vector<1xf32>
    %50 = vector.multi_reduction <add>, %49, %cst_24 [1, 2] : vector<1x8x6xf32> to vector<1xf32>
    %51 = vector.shape_cast %50 : vector<1xf32> to vector<1x1x1xf32>
    %52 = vector.extract %51[0, 0, 0] : f32 from vector<1x1x1xf32>
    %53 = vector.extract_strided_slice %42 {offsets = [0, 0], sizes = [8, 2], strides = [1, 1]} : vector<8x8xf32> to vector<8x2xf32>
    %c0_25 = arith.constant 0 : index
    %c0_26 = arith.constant 0 : index
    %54 = vector.load %arg9[%c0_25, %c0_26] : memref<2x32xf32, #tpu.memory_space<vmem>>, vector<2x32xf32>
    %cst_27 = arith.constant dense<0.000000e+00> : vector<8x32xf32>
    %55 = tpu.matmul %53, %54, %cst_27 {dimension_numbers = #tpu.dot_dimension_numbers<[1], [0], [0], [1], [0, 0, 1, 1], [], []>} : vector<8x2xf32>, vector<2x32xf32>, vector<8x32xf32> -> vector<8x32xf32>
    %c0_28 = arith.constant 0 : index
    %c0_29 = arith.constant 0 : index
    %56 = vector.load %arg10[%c0_28, %c0_29] : memref<1x32xf32, #tpu.memory_space<vmem>>, vector<1x32xf32>
    %57 = vector.broadcast %56 : vector<1x32xf32> to vector<8x32xf32>
    %58 = arith.addf %55, %57 : vector<8x32xf32>
    %59 = math.tanh %58 : vector<8x32xf32>
    %c0_30 = arith.constant 0 : index
    %c0_31 = arith.constant 0 : index
    %60 = vector.load %arg11[%c0_30, %c0_31] : memref<32x16xf32, #tpu.memory_space<vmem>>, vector<32x16xf32>
    %cst_32 = arith.constant dense<0.000000e+00> : vector<8x16xf32>
    %61 = tpu.matmul %59, %60, %cst_32 {dimension_numbers = #tpu.dot_dimension_numbers<[1], [0], [0], [1], [0, 0, 1, 1], [], []>} : vector<8x32xf32>, vector<32x16xf32>, vector<8x16xf32> -> vector<8x16xf32>
    %c0_33 = arith.constant 0 : index
    %c0_34 = arith.constant 0 : index
    %62 = vector.load %arg12[%c0_33, %c0_34] : memref<1x16xf32, #tpu.memory_space<vmem>>, vector<1x16xf32>
    %63 = vector.broadcast %62 : vector<1x16xf32> to vector<8x16xf32>
    %64 = arith.addf %61, %63 : vector<8x16xf32>
    %65 = arith.subf %64, %0 : vector<8x16xf32>
    %66 = arith.mulf %65, %65 : vector<8x16xf32>
    %cst_35 = arith.constant dense<0.000000e+00> : vector<8xf32>
    %67 = vector.multi_reduction <add>, %66, %cst_35 [1] : vector<8x16xf32> to vector<8xf32>
    %68 = vector.shape_cast %67 : vector<8xf32> to vector<8x1xf32>
    %69 = math.sqrt %68 : vector<8x1xf32>
    %70 = vector.shape_cast %69 : vector<8x1xf32> to vector<1x8x1xf32>
    %cst_36 = arith.constant dense<0.000000e+00> : vector<1xf32>
    %71 = vector.multi_reduction <add>, %70, %cst_36 [1, 2] : vector<1x8x1xf32> to vector<1xf32>
    %72 = vector.shape_cast %71 : vector<1xf32> to vector<1x1x1xf32>
    %73 = vector.extract %72[0, 0, 0] : f32 from vector<1x1x1xf32>
    %74 = arith.mulf %46, %46 : vector<8x128xf32>
    %cst_37 = arith.constant dense<0.000000e+00> : vector<8x8xf32>
    %75 = tpu.matmul %74, %22, %cst_37 {dimension_numbers = #tpu.dot_dimension_numbers<[1], [0], [0], [1], [0, 0, 1, 1], [], []>} : vector<8x128xf32>, vector<128x8xf32>, vector<8x8xf32> -> vector<8x8xf32>
    %76 = math.sqrt %75 : vector<8x8xf32>
    %77 = vector.extract_strided_slice %74 {offsets = [0, 0], sizes = [8, 16], strides = [1, 1]} : vector<8x128xf32> to vector<8x16xf32>
    %78 = vector.extract_strided_slice %74 {offsets = [0, 16], sizes = [8, 16], strides = [1, 1]} : vector<8x128xf32> to vector<8x16xf32>
    %79 = arith.addf %77, %78 : vector<8x16xf32>
    %80 = vector.extract_strided_slice %74 {offsets = [0, 32], sizes = [8, 16], strides = [1, 1]} : vector<8x128xf32> to vector<8x16xf32>
    %81 = arith.addf %79, %80 : vector<8x16xf32>
    %82 = vector.extract_strided_slice %74 {offsets = [0, 48], sizes = [8, 16], strides = [1, 1]} : vector<8x128xf32> to vector<8x16xf32>
    %83 = arith.addf %81, %82 : vector<8x16xf32>
    %84 = vector.extract_strided_slice %74 {offsets = [0, 64], sizes = [8, 16], strides = [1, 1]} : vector<8x128xf32> to vector<8x16xf32>
    %85 = arith.addf %83, %84 : vector<8x16xf32>
    %86 = vector.extract_strided_slice %74 {offsets = [0, 80], sizes = [8, 16], strides = [1, 1]} : vector<8x128xf32> to vector<8x16xf32>
    %87 = arith.addf %85, %86 : vector<8x16xf32>
    %88 = vector.extract_strided_slice %74 {offsets = [0, 96], sizes = [8, 16], strides = [1, 1]} : vector<8x128xf32> to vector<8x16xf32>
    %89 = arith.addf %87, %88 : vector<8x16xf32>
    %90 = vector.extract_strided_slice %74 {offsets = [0, 112], sizes = [8, 16], strides = [1, 1]} : vector<8x128xf32> to vector<8x16xf32>
    %91 = arith.addf %89, %90 : vector<8x16xf32>
    %92 = math.sqrt %91 : vector<8x16xf32>
    %cst_38 = arith.constant 1.000000e+00 : f32
    %93 = vector.broadcast %cst_38 : f32 to vector<8x16xf32>
    %94 = arith.subf %92, %93 : vector<8x16xf32>
    %95 = math.absf %94 : vector<8x16xf32>
    %96 = vector.shape_cast %95 : vector<8x16xf32> to vector<1x8x16xf32>
    %cst_39 = arith.constant dense<0.000000e+00> : vector<1xf32>
    %97 = vector.multi_reduction <add>, %96, %cst_39 [1, 2] : vector<1x8x16xf32> to vector<1xf32>
    %98 = vector.shape_cast %97 : vector<1xf32> to vector<1x1x1xf32>
    %99 = vector.extract %98[0, 0, 0] : f32 from vector<1x1x1xf32>
    %100 = math.rsqrt %75 : vector<8x8xf32>
    %cst_40 = arith.constant dense<0.000000e+00> : vector<8x128xf32>
    %101 = tpu.matmul %100, %35, %cst_40 {dimension_numbers = #tpu.dot_dimension_numbers<[1], [0], [0], [1], [0, 0, 1, 1], [], []>} : vector<8x8xf32>, vector<8x128xf32>, vector<8x128xf32> -> vector<8x128xf32>
    %102 = arith.mulf %46, %101 : vector<8x128xf32>
    %c16_i32_41 = arith.constant 16 : i32
    %103 = tpu.dynamic_rotate %102 by %c16_i32_41 dim 1 : vector<8x128xf32>, i32 -> vector<8x128xf32>
    %104 = arith.mulf %102, %103 : vector<8x128xf32>
    %cst_42 = arith.constant dense<0.000000e+00> : vector<8x8xf32>
    %105 = tpu.matmul %104, %22, %cst_42 {dimension_numbers = #tpu.dot_dimension_numbers<[1], [0], [0], [1], [0, 0, 1, 1], [], []>} : vector<8x128xf32>, vector<128x8xf32>, vector<8x8xf32> -> vector<8x8xf32>
    %106 = math.absf %105 : vector<8x8xf32>
    %107 = vector.shape_cast %106 : vector<8x8xf32> to vector<1x8x8xf32>
    %cst_43 = arith.constant dense<0.000000e+00> : vector<1xf32>
    %108 = vector.multi_reduction <add>, %107, %cst_43 [1, 2] : vector<1x8x8xf32> to vector<1xf32>
    %109 = vector.shape_cast %108 : vector<1xf32> to vector<1x1x1xf32>
    %110 = vector.extract %109[0, 0, 0] : f32 from vector<1x1x1xf32>
    %cst_44 = arith.constant 0.000000e+00 : f32
    %111 = arith.addf %cst_44, %110 : f32
    %c32_i32 = arith.constant 32 : i32
    %112 = tpu.dynamic_rotate %102 by %c32_i32 dim 1 : vector<8x128xf32>, i32 -> vector<8x128xf32>
    %113 = arith.mulf %102, %112 : vector<8x128xf32>
    %cst_45 = arith.constant dense<0.000000e+00> : vector<8x8xf32>
    %114 = tpu.matmul %113, %22, %cst_45 {dimension_numbers = #tpu.dot_dimension_numbers<[1], [0], [0], [1], [0, 0, 1, 1], [], []>} : vector<8x128xf32>, vector<128x8xf32>, vector<8x8xf32> -> vector<8x8xf32>
    %115 = math.absf %114 : vector<8x8xf32>
    %116 = vector.shape_cast %115 : vector<8x8xf32> to vector<1x8x8xf32>
    %cst_46 = arith.constant dense<0.000000e+00> : vector<1xf32>
    %117 = vector.multi_reduction <add>, %116, %cst_46 [1, 2] : vector<1x8x8xf32> to vector<1xf32>
    %118 = vector.shape_cast %117 : vector<1xf32> to vector<1x1x1xf32>
    %119 = vector.extract %118[0, 0, 0] : f32 from vector<1x1x1xf32>
    %120 = arith.addf %111, %119 : f32
    %c48_i32 = arith.constant 48 : i32
    %121 = tpu.dynamic_rotate %102 by %c48_i32 dim 1 : vector<8x128xf32>, i32 -> vector<8x128xf32>
    %122 = arith.mulf %102, %121 : vector<8x128xf32>
    %cst_47 = arith.constant dense<0.000000e+00> : vector<8x8xf32>
    %123 = tpu.matmul %122, %22, %cst_47 {dimension_numbers = #tpu.dot_dimension_numbers<[1], [0], [0], [1], [0, 0, 1, 1], [], []>} : vector<8x128xf32>, vector<128x8xf32>, vector<8x8xf32> -> vector<8x8xf32>
    %124 = math.absf %123 : vector<8x8xf32>
    %125 = vector.shape_cast %124 : vector<8x8xf32> to vector<1x8x8xf32>
    %cst_48 = arith.constant dense<0.000000e+00> : vector<1xf32>
    %126 = vector.multi_reduction <add>, %125, %cst_48 [1, 2] : vector<1x8x8xf32> to vector<1xf32>
    %127 = vector.shape_cast %126 : vector<1xf32> to vector<1x1x1xf32>
    %128 = vector.extract %127[0, 0, 0] : f32 from vector<1x1x1xf32>
    %129 = arith.addf %120, %128 : f32
    %c64_i32 = arith.constant 64 : i32
    %130 = tpu.dynamic_rotate %102 by %c64_i32 dim 1 : vector<8x128xf32>, i32 -> vector<8x128xf32>
    %131 = arith.mulf %102, %130 : vector<8x128xf32>
    %cst_49 = arith.constant dense<0.000000e+00> : vector<8x8xf32>
    %132 = tpu.matmul %131, %22, %cst_49 {dimension_numbers = #tpu.dot_dimension_numbers<[1], [0], [0], [1], [0, 0, 1, 1], [], []>} : vector<8x128xf32>, vector<128x8xf32>, vector<8x8xf32> -> vector<8x8xf32>
    %133 = math.absf %132 : vector<8x8xf32>
    %134 = vector.shape_cast %133 : vector<8x8xf32> to vector<1x8x8xf32>
    %cst_50 = arith.constant dense<0.000000e+00> : vector<1xf32>
    %135 = vector.multi_reduction <add>, %134, %cst_50 [1, 2] : vector<1x8x8xf32> to vector<1xf32>
    %136 = vector.shape_cast %135 : vector<1xf32> to vector<1x1x1xf32>
    %137 = vector.extract %136[0, 0, 0] : f32 from vector<1x1x1xf32>
    %138 = arith.addf %129, %137 : f32
    %c80_i32 = arith.constant 80 : i32
    %139 = tpu.dynamic_rotate %102 by %c80_i32 dim 1 : vector<8x128xf32>, i32 -> vector<8x128xf32>
    %140 = arith.mulf %102, %139 : vector<8x128xf32>
    %cst_51 = arith.constant dense<0.000000e+00> : vector<8x8xf32>
    %141 = tpu.matmul %140, %22, %cst_51 {dimension_numbers = #tpu.dot_dimension_numbers<[1], [0], [0], [1], [0, 0, 1, 1], [], []>} : vector<8x128xf32>, vector<128x8xf32>, vector<8x8xf32> -> vector<8x8xf32>
    %142 = math.absf %141 : vector<8x8xf32>
    %143 = vector.shape_cast %142 : vector<8x8xf32> to vector<1x8x8xf32>
    %cst_52 = arith.constant dense<0.000000e+00> : vector<1xf32>
    %144 = vector.multi_reduction <add>, %143, %cst_52 [1, 2] : vector<1x8x8xf32> to vector<1xf32>
    %145 = vector.shape_cast %144 : vector<1xf32> to vector<1x1x1xf32>
    %146 = vector.extract %145[0, 0, 0] : f32 from vector<1x1x1xf32>
    %147 = arith.addf %138, %146 : f32
    %c96_i32 = arith.constant 96 : i32
    %148 = tpu.dynamic_rotate %102 by %c96_i32 dim 1 : vector<8x128xf32>, i32 -> vector<8x128xf32>
    %149 = arith.mulf %102, %148 : vector<8x128xf32>
    %cst_53 = arith.constant dense<0.000000e+00> : vector<8x8xf32>
    %150 = tpu.matmul %149, %22, %cst_53 {dimension_numbers = #tpu.dot_dimension_numbers<[1], [0], [0], [1], [0, 0, 1, 1], [], []>} : vector<8x128xf32>, vector<128x8xf32>, vector<8x8xf32> -> vector<8x8xf32>
    %151 = math.absf %150 : vector<8x8xf32>
    %152 = vector.shape_cast %151 : vector<8x8xf32> to vector<1x8x8xf32>
    %cst_54 = arith.constant dense<0.000000e+00> : vector<1xf32>
    %153 = vector.multi_reduction <add>, %152, %cst_54 [1, 2] : vector<1x8x8xf32> to vector<1xf32>
    %154 = vector.shape_cast %153 : vector<1xf32> to vector<1x1x1xf32>
    %155 = vector.extract %154[0, 0, 0] : f32 from vector<1x1x1xf32>
    %156 = arith.addf %147, %155 : f32
    %c112_i32 = arith.constant 112 : i32
    %157 = tpu.dynamic_rotate %102 by %c112_i32 dim 1 : vector<8x128xf32>, i32 -> vector<8x128xf32>
    %158 = arith.mulf %102, %157 : vector<8x128xf32>
    %cst_55 = arith.constant dense<0.000000e+00> : vector<8x8xf32>
    %159 = tpu.matmul %158, %22, %cst_55 {dimension_numbers = #tpu.dot_dimension_numbers<[1], [0], [0], [1], [0, 0, 1, 1], [], []>} : vector<8x128xf32>, vector<128x8xf32>, vector<8x8xf32> -> vector<8x8xf32>
    %160 = math.absf %159 : vector<8x8xf32>
    %161 = vector.shape_cast %160 : vector<8x8xf32> to vector<1x8x8xf32>
    %cst_56 = arith.constant dense<0.000000e+00> : vector<1xf32>
    %162 = vector.multi_reduction <add>, %161, %cst_56 [1, 2] : vector<1x8x8xf32> to vector<1xf32>
    %163 = vector.shape_cast %162 : vector<1xf32> to vector<1x1x1xf32>
    %164 = vector.extract %163[0, 0, 0] : f32 from vector<1x1x1xf32>
    %165 = arith.addf %156, %164 : f32
    %cst_57 = arith.constant 1.100000e+00 : f32
    %166 = vector.broadcast %cst_57 : f32 to vector<8x16xf32>
    %167 = arith.mulf %166, %0 : vector<8x16xf32>
    %cst_58 = arith.constant 1.000000e-01 : f32
    %168 = vector.broadcast %cst_58 : f32 to vector<8x16xf32>
    %169 = arith.mulf %168, %1 : vector<8x16xf32>
    %170 = arith.subf %167, %169 : vector<8x16xf32>
    %cst_59 = arith.constant 1.100000e+00 : f32
    %171 = vector.broadcast %cst_59 : f32 to vector<8x16xf32>
    %172 = arith.mulf %171, %1 : vector<8x16xf32>
    %cst_60 = arith.constant 1.000000e-01 : f32
    %173 = vector.broadcast %cst_60 : f32 to vector<8x16xf32>
    %174 = arith.mulf %173, %0 : vector<8x16xf32>
    %175 = arith.subf %172, %174 : vector<8x16xf32>
    %176 = vector.extract_strided_slice %46 {offsets = [0, 0], sizes = [8, 16], strides = [1, 1]} : vector<8x128xf32> to vector<8x16xf32>
    %cst_61 = arith.constant 1.000000e-01 : f32
    %177 = vector.broadcast %cst_61 : f32 to vector<8x16xf32>
    %178 = arith.mulf %177, %176 : vector<8x16xf32>
    %179 = arith.addf %0, %178 : vector<8x16xf32>
    %180 = arith.subf %0, %178 : vector<8x16xf32>
    %181 = vector.extract_strided_slice %46 {offsets = [0, 16], sizes = [8, 16], strides = [1, 1]} : vector<8x128xf32> to vector<8x16xf32>
    %cst_62 = arith.constant 1.000000e-01 : f32
    %182 = vector.broadcast %cst_62 : f32 to vector<8x16xf32>
    %183 = arith.mulf %182, %181 : vector<8x16xf32>
    %184 = arith.addf %0, %183 : vector<8x16xf32>
    %185 = arith.subf %0, %183 : vector<8x16xf32>
    %186 = vector.extract_strided_slice %46 {offsets = [0, 32], sizes = [8, 16], strides = [1, 1]} : vector<8x128xf32> to vector<8x16xf32>
    %cst_63 = arith.constant 1.000000e-01 : f32
    %187 = vector.broadcast %cst_63 : f32 to vector<8x16xf32>
    %188 = arith.mulf %187, %186 : vector<8x16xf32>
    %189 = arith.addf %0, %188 : vector<8x16xf32>
    %190 = arith.subf %0, %188 : vector<8x16xf32>
    %191 = vector.extract_strided_slice %46 {offsets = [0, 48], sizes = [8, 16], strides = [1, 1]} : vector<8x128xf32> to vector<8x16xf32>
    %cst_64 = arith.constant 1.000000e-01 : f32
    %192 = vector.broadcast %cst_64 : f32 to vector<8x16xf32>
    %193 = arith.mulf %192, %191 : vector<8x16xf32>
    %194 = arith.addf %0, %193 : vector<8x16xf32>
    %195 = arith.subf %0, %193 : vector<8x16xf32>
    %196 = vector.extract_strided_slice %46 {offsets = [0, 64], sizes = [8, 16], strides = [1, 1]} : vector<8x128xf32> to vector<8x16xf32>
    %cst_65 = arith.constant 1.000000e-01 : f32
    %197 = vector.broadcast %cst_65 : f32 to vector<8x16xf32>
    %198 = arith.mulf %197, %196 : vector<8x16xf32>
    %199 = arith.addf %0, %198 : vector<8x16xf32>
    %200 = arith.subf %0, %198 : vector<8x16xf32>
    %201 = vector.extract_strided_slice %46 {offsets = [0, 80], sizes = [8, 16], strides = [1, 1]} : vector<8x128xf32> to vector<8x16xf32>
    %cst_66 = arith.constant 1.000000e-01 : f32
    %202 = vector.broadcast %cst_66 : f32 to vector<8x16xf32>
    %203 = arith.mulf %202, %201 : vector<8x16xf32>
    %204 = arith.addf %0, %203 : vector<8x16xf32>
    %205 = arith.subf %0, %203 : vector<8x16xf32>
    %206 = vector.extract_strided_slice %46 {offsets = [0, 96], sizes = [8, 16], strides = [1, 1]} : vector<8x128xf32> to vector<8x16xf32>
    %cst_67 = arith.constant 1.000000e-01 : f32
    %207 = vector.broadcast %cst_67 : f32 to vector<8x16xf32>
    %208 = arith.mulf %207, %206 : vector<8x16xf32>
    %209 = arith.addf %0, %208 : vector<8x16xf32>
    %210 = arith.subf %0, %208 : vector<8x16xf32>
    %211 = vector.extract_strided_slice %46 {offsets = [0, 112], sizes = [8, 16], strides = [1, 1]} : vector<8x128xf32> to vector<8x16xf32>
    %cst_68 = arith.constant 1.000000e-01 : f32
    %212 = vector.broadcast %cst_68 : f32 to vector<8x16xf32>
    %213 = arith.mulf %212, %211 : vector<8x16xf32>
    %214 = arith.addf %0, %213 : vector<8x16xf32>
    %215 = arith.subf %0, %213 : vector<8x16xf32>
    %216 = tpu.concatenate %1, %170, %175, %179, %180, %184, %185, %189, %190, %194, %195, %199, %200, %204, %205, %209 in 0 : vector<8x16xf32>, vector<8x16xf32>, vector<8x16xf32>, vector<8x16xf32>, vector<8x16xf32>, vector<8x16xf32>, vector<8x16xf32>, vector<8x16xf32>, vector<8x16xf32>, vector<8x16xf32>, vector<8x16xf32>, vector<8x16xf32>, vector<8x16xf32>, vector<8x16xf32>, vector<8x16xf32>, vector<8x16xf32> -> vector<128x16xf32>
    %217 = tpu.concatenate %210, %214, %215 in 0 : vector<8x16xf32>, vector<8x16xf32>, vector<8x16xf32> -> vector<24x16xf32>
    %218 = tpu.concatenate %216, %217 in 0 : vector<128x16xf32>, vector<24x16xf32> -> vector<152x16xf32>
    %cst_69 = arith.constant dense<0.000000e+00> : vector<152x32xf32>
    %219 = tpu.matmul %218, %5, %cst_69 {dimension_numbers = #tpu.dot_dimension_numbers<[1], [0], [0], [1], [0, 0, 1, 1], [], []>} : vector<152x16xf32>, vector<16x32xf32>, vector<152x32xf32> -> vector<152x32xf32>
    %220 = vector.broadcast %6 : vector<1x32xf32> to vector<152x32xf32>
    %221 = arith.addf %219, %220 : vector<152x32xf32>
    %222 = math.tanh %221 : vector<152x32xf32>
    %cst_70 = arith.constant dense<0.000000e+00> : vector<152x8xf32>
    %223 = tpu.matmul %222, %7, %cst_70 {dimension_numbers = #tpu.dot_dimension_numbers<[1], [0], [0], [1], [0, 0, 1, 1], [], []>} : vector<152x32xf32>, vector<32x8xf32>, vector<152x8xf32> -> vector<152x8xf32>
    %224 = vector.broadcast %8 : vector<1x8xf32> to vector<152x8xf32>
    %225 = arith.addf %223, %224 : vector<152x8xf32>
    %226 = arith.mulf %222, %222 : vector<152x32xf32>
    %cst_71 = arith.constant 1.000000e+00 : f32
    %227 = vector.broadcast %cst_71 : f32 to vector<152x32xf32>
    %228 = arith.subf %227, %226 : vector<152x32xf32>
    %cst_72 = arith.constant dense<0.000000e+00> : vector<152x128xf32>
    %229 = tpu.matmul %228, %9, %cst_72 {dimension_numbers = #tpu.dot_dimension_numbers<[1], [0], [0], [1], [0, 0, 1, 1], [], []>} : vector<152x32xf32>, vector<32x128xf32>, vector<152x128xf32> -> vector<152x128xf32>
    %230 = vector.extract_strided_slice %229 {offsets = [0, 0], sizes = [8, 128], strides = [1, 1]} : vector<152x128xf32> to vector<8x128xf32>
    %231 = arith.mulf %230, %230 : vector<8x128xf32>
    %cst_73 = arith.constant dense<0.000000e+00> : vector<8x8xf32>
    %232 = tpu.matmul %231, %22, %cst_73 {dimension_numbers = #tpu.dot_dimension_numbers<[1], [0], [0], [1], [0, 0, 1, 1], [], []>} : vector<8x128xf32>, vector<128x8xf32>, vector<8x8xf32> -> vector<8x8xf32>
    %233 = math.sqrt %232 : vector<8x8xf32>
    %234 = arith.mulf %46, %230 : vector<8x128xf32>
    %cst_74 = arith.constant dense<0.000000e+00> : vector<8x8xf32>
    %235 = tpu.matmul %234, %22, %cst_74 {dimension_numbers = #tpu.dot_dimension_numbers<[1], [0], [0], [1], [0, 0, 1, 1], [], []>} : vector<8x128xf32>, vector<128x8xf32>, vector<8x8xf32> -> vector<8x8xf32>
    %236 = arith.mulf %76, %233 : vector<8x8xf32>
    %cst_75 = arith.constant 1.000000e+00 : f32
    %237 = vector.broadcast %cst_75 : f32 to vector<8x1xf32>
    %238 = arith.subf %237, %2 : vector<8x1xf32>
    %239 = vector.broadcast %238 : vector<8x1xf32> to vector<8x8xf32>
    %240 = arith.addf %236, %239 : vector<8x8xf32>
    %241 = arith.divf %235, %240 : vector<8x8xf32>
    %cst_76 = arith.constant 5.000000e-01 : f32
    %242 = vector.broadcast %cst_76 : f32 to vector<8x1xf32>
    %243 = arith.cmpf ogt, %2, %242 : vector<8x1xf32>
    %cst_77 = arith.constant 0.000000e+00 : f32
    %244 = vector.broadcast %cst_77 : f32 to vector<8x8xf32>
    %245 = arith.cmpf olt, %241, %244 : vector<8x8xf32>
    %246 = vector.broadcast %243 : vector<8x1xi1> to vector<8x8xi1>
    %247 = arith.andi %246, %245 : vector<8x8xi1>
    %cst_78 = arith.constant 1.000000e+00 : f32
    %cst_79 = arith.constant 0.000000e+00 : f32
    %248 = vector.broadcast %cst_78 : f32 to vector<8x8xf32>
    %249 = vector.broadcast %cst_79 : f32 to vector<8x8xf32>
    %250 = arith.select %247, %248, %249 : vector<8x8xi1>, vector<8x8xf32>
    %251 = vector.shape_cast %250 : vector<8x8xf32> to vector<1x8x8xf32>
    %cst_80 = arith.constant dense<0.000000e+00> : vector<1xf32>
    %252 = vector.multi_reduction <add>, %251, %cst_80 [1, 2] : vector<1x8x8xf32> to vector<1xf32>
    %253 = vector.shape_cast %252 : vector<1xf32> to vector<1x1x1xf32>
    %254 = vector.extract %253[0, 0, 0] : f32 from vector<1x1x1xf32>
    %cst_81 = arith.constant -5.000000e-01 : f32
    %255 = vector.broadcast %cst_81 : f32 to vector<8x8xf32>
    %256 = arith.mulf %255, %241 : vector<8x8xf32>
    %257 = math.exp %256 : vector<8x8xf32>
    %cst_82 = arith.constant 1.000000e+00 : f32
    %258 = vector.broadcast %cst_82 : f32 to vector<8x8xf32>
    %259 = arith.subf %258, %241 : vector<8x8xf32>
    %260 = arith.mulf %257, %259 : vector<8x8xf32>
    %261 = math.absf %260 : vector<8x8xf32>
    %cst_83 = arith.constant 0.000000e+00 : f32
    %262 = vector.shape_cast %243 : vector<8x1xi1> to vector<8x1xi1>
    %263 = vector.broadcast %262 : vector<8x1xi1> to vector<8x8xi1>
    %264 = vector.broadcast %cst_83 : f32 to vector<8x8xf32>
    %265 = arith.select %263, %261, %264 : vector<8x8xi1>, vector<8x8xf32>
    %266 = vector.shape_cast %265 : vector<8x8xf32> to vector<1x8x8xf32>
    %cst_84 = arith.constant dense<0.000000e+00> : vector<1xf32>
    %267 = vector.multi_reduction <add>, %266, %cst_84 [1, 2] : vector<1x8x8xf32> to vector<1xf32>
    %268 = vector.shape_cast %267 : vector<1xf32> to vector<1x1x1xf32>
    %269 = vector.extract %268[0, 0, 0] : f32 from vector<1x1x1xf32>
    %270 = vector.extract_strided_slice %225 {offsets = [0, 2], sizes = [152, 6], strides = [1, 1]} : vector<152x8xf32> to vector<152x6xf32>
    %271 = math.absf %270 : vector<152x6xf32>
    %cst_85 = arith.constant dense<0.000000e+00> : vector<152xf32>
    %272 = vector.multi_reduction <add>, %271, %cst_85 [1] : vector<152x6xf32> to vector<152xf32>
    %273 = vector.shape_cast %272 : vector<152xf32> to vector<152x1xf32>
    %cst_86 = arith.constant -1.000000e+00 : f32
    %274 = vector.broadcast %cst_86 : f32 to vector<152x1xf32>
    %275 = arith.mulf %274, %273 : vector<152x1xf32>
    %276 = math.exp %275 : vector<152x1xf32>
    %277 = arith.mulf %229, %229 : vector<152x128xf32>
    %278 = vector.extract_strided_slice %277 {offsets = [0, 0], sizes = [152, 16], strides = [1, 1]} : vector<152x128xf32> to vector<152x16xf32>
    %279 = vector.extract_strided_slice %277 {offsets = [0, 16], sizes = [152, 16], strides = [1, 1]} : vector<152x128xf32> to vector<152x16xf32>
    %280 = arith.addf %278, %279 : vector<152x16xf32>
    %281 = vector.extract_strided_slice %277 {offsets = [0, 32], sizes = [152, 16], strides = [1, 1]} : vector<152x128xf32> to vector<152x16xf32>
    %282 = arith.addf %280, %281 : vector<152x16xf32>
    %283 = vector.extract_strided_slice %277 {offsets = [0, 48], sizes = [152, 16], strides = [1, 1]} : vector<152x128xf32> to vector<152x16xf32>
    %284 = arith.addf %282, %283 : vector<152x16xf32>
    %285 = vector.extract_strided_slice %277 {offsets = [0, 64], sizes = [152, 16], strides = [1, 1]} : vector<152x128xf32> to vector<152x16xf32>
    %286 = arith.addf %284, %285 : vector<152x16xf32>
    %287 = vector.extract_strided_slice %277 {offsets = [0, 80], sizes = [152, 16], strides = [1, 1]} : vector<152x128xf32> to vector<152x16xf32>
    %288 = arith.addf %286, %287 : vector<152x16xf32>
    %289 = vector.extract_strided_slice %277 {offsets = [0, 96], sizes = [152, 16], strides = [1, 1]} : vector<152x128xf32> to vector<152x16xf32>
    %290 = arith.addf %288, %289 : vector<152x16xf32>
    %291 = vector.extract_strided_slice %277 {offsets = [0, 112], sizes = [152, 16], strides = [1, 1]} : vector<152x128xf32> to vector<152x16xf32>
    %292 = arith.addf %290, %291 : vector<152x16xf32>
    %293 = math.sqrt %292 : vector<152x16xf32>
    %cst_87 = arith.constant 1.000000e+00 : f32
    %294 = vector.broadcast %cst_87 : f32 to vector<152x16xf32>
    %295 = arith.subf %293, %294 : vector<152x16xf32>
    %296 = math.absf %295 : vector<152x16xf32>
    %cst_88 = arith.constant dense<0.000000e+00> : vector<152xf32>
    %297 = vector.multi_reduction <add>, %296, %cst_88 [1] : vector<152x16xf32> to vector<152xf32>
    %298 = vector.shape_cast %297 : vector<152xf32> to vector<152x1xf32>
    %299 = vector.extract_strided_slice %276 {offsets = [24, 0], sizes = [128, 1], strides = [1, 1]} : vector<152x1xf32> to vector<128x1xf32>
    %300 = vector.shape_cast %299 : vector<128x1xf32> to vector<1x128x1xf32>
    %cst_89 = arith.constant dense<0.000000e+00> : vector<1xf32>
    %301 = vector.multi_reduction <add>, %300, %cst_89 [1, 2] : vector<1x128x1xf32> to vector<1xf32>
    %302 = vector.shape_cast %301 : vector<1xf32> to vector<1x1x1xf32>
    %303 = vector.extract %302[0, 0, 0] : f32 from vector<1x1x1xf32>
    %304 = vector.extract_strided_slice %276 {offsets = [8, 0], sizes = [8, 1], strides = [1, 1]} : vector<152x1xf32> to vector<8x1xf32>
    %305 = arith.mulf %3, %304 : vector<8x1xf32>
    %306 = vector.shape_cast %305 : vector<8x1xf32> to vector<1x8x1xf32>
    %cst_90 = arith.constant dense<0.000000e+00> : vector<1xf32>
    %307 = vector.multi_reduction <add>, %306, %cst_90 [1, 2] : vector<1x8x1xf32> to vector<1xf32>
    %308 = vector.shape_cast %307 : vector<1xf32> to vector<1x1x1xf32>
    %309 = vector.extract %308[0, 0, 0] : f32 from vector<1x1x1xf32>
    %310 = arith.addf %303, %309 : f32
    %311 = vector.extract_strided_slice %276 {offsets = [16, 0], sizes = [8, 1], strides = [1, 1]} : vector<152x1xf32> to vector<8x1xf32>
    %312 = arith.mulf %4, %311 : vector<8x1xf32>
    %313 = vector.shape_cast %312 : vector<8x1xf32> to vector<1x8x1xf32>
    %cst_91 = arith.constant dense<0.000000e+00> : vector<1xf32>
    %314 = vector.multi_reduction <add>, %313, %cst_91 [1, 2] : vector<1x8x1xf32> to vector<1xf32>
    %315 = vector.shape_cast %314 : vector<1xf32> to vector<1x1x1xf32>
    %316 = vector.extract %315[0, 0, 0] : f32 from vector<1x1x1xf32>
    %317 = arith.addf %310, %316 : f32
    %318 = vector.extract_strided_slice %298 {offsets = [24, 0], sizes = [128, 1], strides = [1, 1]} : vector<152x1xf32> to vector<128x1xf32>
    %319 = vector.shape_cast %318 : vector<128x1xf32> to vector<1x128x1xf32>
    %cst_92 = arith.constant dense<0.000000e+00> : vector<1xf32>
    %320 = vector.multi_reduction <add>, %319, %cst_92 [1, 2] : vector<1x128x1xf32> to vector<1xf32>
    %321 = vector.shape_cast %320 : vector<1xf32> to vector<1x1x1xf32>
    %322 = vector.extract %321[0, 0, 0] : f32 from vector<1x1x1xf32>
    %323 = vector.extract_strided_slice %298 {offsets = [8, 0], sizes = [8, 1], strides = [1, 1]} : vector<152x1xf32> to vector<8x1xf32>
    %324 = arith.mulf %3, %323 : vector<8x1xf32>
    %325 = vector.shape_cast %324 : vector<8x1xf32> to vector<1x8x1xf32>
    %cst_93 = arith.constant dense<0.000000e+00> : vector<1xf32>
    %326 = vector.multi_reduction <add>, %325, %cst_93 [1, 2] : vector<1x8x1xf32> to vector<1xf32>
    %327 = vector.shape_cast %326 : vector<1xf32> to vector<1x1x1xf32>
    %328 = vector.extract %327[0, 0, 0] : f32 from vector<1x1x1xf32>
    %329 = arith.addf %322, %328 : f32
    %330 = vector.extract_strided_slice %298 {offsets = [16, 0], sizes = [8, 1], strides = [1, 1]} : vector<152x1xf32> to vector<8x1xf32>
    %331 = arith.mulf %4, %330 : vector<8x1xf32>
    %332 = vector.shape_cast %331 : vector<8x1xf32> to vector<1x8x1xf32>
    %cst_94 = arith.constant dense<0.000000e+00> : vector<1xf32>
    %333 = vector.multi_reduction <add>, %332, %cst_94 [1, 2] : vector<1x8x1xf32> to vector<1xf32>
    %334 = vector.shape_cast %333 : vector<1xf32> to vector<1x1x1xf32>
    %335 = vector.extract %334[0, 0, 0] : f32 from vector<1x1x1xf32>
    %336 = arith.addf %329, %335 : f32
    %cst_95 = arith.constant 1.600000e+01 : f32
    %337 = arith.divf %52, %cst_95 : f32
    %cst_96 = arith.constant 1.600000e+01 : f32
    %338 = arith.divf %73, %cst_96 : f32
    %cst_97 = arith.constant 2.560000e+02 : f32
    %339 = arith.divf %99, %cst_97 : f32
    %cst_98 = arith.constant 1.024000e+03 : f32
    %340 = arith.divf %165, %cst_98 : f32
    %cst_99 = arith.constant 1.120000e+02 : f32
    %341 = arith.divf %269, %cst_99 : f32
    %cst_100 = arith.constant 2.600000e+02 : f32
    %342 = arith.divf %317, %cst_100 : f32
    %cst_101 = arith.constant 4.160000e+03 : f32
    %343 = arith.divf %336, %cst_101 : f32
    %344 = tpu.iota {dimensions = array<i32: 0>} : vector<8x128xi32>
    %345 = tpu.iota {dimensions = array<i32: 1>} : vector<8x128xi32>
    %cst_102 = arith.constant 0.000000e+00 : f32
    %346 = vector.broadcast %cst_102 : f32 to vector<8x128xf32>
    %c0_i32 = arith.constant 0 : i32
    %347 = vector.broadcast %c0_i32 : i32 to vector<8x128xi32>
    %348 = arith.cmpi eq, %344, %347 : vector<8x128xi32>
    %c0_i32_103 = arith.constant 0 : i32
    %349 = vector.broadcast %c0_i32_103 : i32 to vector<8x128xi32>
    %350 = arith.cmpi eq, %345, %349 : vector<8x128xi32>
    %351 = arith.andi %348, %350 : vector<8x128xi1>
    %cst_104 = arith.constant 0.000000e+00 : f32
    %352 = vector.broadcast %337 : f32 to vector<8x128xf32>
    %353 = vector.broadcast %cst_104 : f32 to vector<8x128xf32>
    %354 = arith.select %351, %352, %353 : vector<8x128xi1>, vector<8x128xf32>
    %355 = arith.addf %346, %354 : vector<8x128xf32>
    %c0_i32_105 = arith.constant 0 : i32
    %356 = vector.broadcast %c0_i32_105 : i32 to vector<8x128xi32>
    %357 = arith.cmpi eq, %344, %356 : vector<8x128xi32>
    %c1_i32_106 = arith.constant 1 : i32
    %358 = vector.broadcast %c1_i32_106 : i32 to vector<8x128xi32>
    %359 = arith.cmpi eq, %345, %358 : vector<8x128xi32>
    %360 = arith.andi %357, %359 : vector<8x128xi1>
    %cst_107 = arith.constant 0.000000e+00 : f32
    %361 = vector.broadcast %338 : f32 to vector<8x128xf32>
    %362 = vector.broadcast %cst_107 : f32 to vector<8x128xf32>
    %363 = arith.select %360, %361, %362 : vector<8x128xi1>, vector<8x128xf32>
    %364 = arith.addf %355, %363 : vector<8x128xf32>
    %c0_i32_108 = arith.constant 0 : i32
    %365 = vector.broadcast %c0_i32_108 : i32 to vector<8x128xi32>
    %366 = arith.cmpi eq, %344, %365 : vector<8x128xi32>
    %c2_i32 = arith.constant 2 : i32
    %367 = vector.broadcast %c2_i32 : i32 to vector<8x128xi32>
    %368 = arith.cmpi eq, %345, %367 : vector<8x128xi32>
    %369 = arith.andi %366, %368 : vector<8x128xi1>
    %cst_109 = arith.constant 0.000000e+00 : f32
    %370 = vector.broadcast %339 : f32 to vector<8x128xf32>
    %371 = vector.broadcast %cst_109 : f32 to vector<8x128xf32>
    %372 = arith.select %369, %370, %371 : vector<8x128xi1>, vector<8x128xf32>
    %373 = arith.addf %364, %372 : vector<8x128xf32>
    %c0_i32_110 = arith.constant 0 : i32
    %374 = vector.broadcast %c0_i32_110 : i32 to vector<8x128xi32>
    %375 = arith.cmpi eq, %344, %374 : vector<8x128xi32>
    %c3_i32 = arith.constant 3 : i32
    %376 = vector.broadcast %c3_i32 : i32 to vector<8x128xi32>
    %377 = arith.cmpi eq, %345, %376 : vector<8x128xi32>
    %378 = arith.andi %375, %377 : vector<8x128xi1>
    %cst_111 = arith.constant 0.000000e+00 : f32
    %379 = vector.broadcast %340 : f32 to vector<8x128xf32>
    %380 = vector.broadcast %cst_111 : f32 to vector<8x128xf32>
    %381 = arith.select %378, %379, %380 : vector<8x128xi1>, vector<8x128xf32>
    %382 = arith.addf %373, %381 : vector<8x128xf32>
    %c0_i32_112 = arith.constant 0 : i32
    %383 = vector.broadcast %c0_i32_112 : i32 to vector<8x128xi32>
    %384 = arith.cmpi eq, %344, %383 : vector<8x128xi32>
    %c4_i32 = arith.constant 4 : i32
    %385 = vector.broadcast %c4_i32 : i32 to vector<8x128xi32>
    %386 = arith.cmpi eq, %345, %385 : vector<8x128xi32>
    %387 = arith.andi %384, %386 : vector<8x128xi1>
    %cst_113 = arith.constant 0.000000e+00 : f32
    %388 = vector.broadcast %341 : f32 to vector<8x128xf32>
    %389 = vector.broadcast %cst_113 : f32 to vector<8x128xf32>
    %390 = arith.select %387, %388, %389 : vector<8x128xi1>, vector<8x128xf32>
    %391 = arith.addf %382, %390 : vector<8x128xf32>
    %c0_i32_114 = arith.constant 0 : i32
    %392 = vector.broadcast %c0_i32_114 : i32 to vector<8x128xi32>
    %393 = arith.cmpi eq, %344, %392 : vector<8x128xi32>
    %c5_i32 = arith.constant 5 : i32
    %394 = vector.broadcast %c5_i32 : i32 to vector<8x128xi32>
    %395 = arith.cmpi eq, %345, %394 : vector<8x128xi32>
    %396 = arith.andi %393, %395 : vector<8x128xi1>
    %cst_115 = arith.constant 0.000000e+00 : f32
    %397 = vector.broadcast %342 : f32 to vector<8x128xf32>
    %398 = vector.broadcast %cst_115 : f32 to vector<8x128xf32>
    %399 = arith.select %396, %397, %398 : vector<8x128xi1>, vector<8x128xf32>
    %400 = arith.addf %391, %399 : vector<8x128xf32>
    %c0_i32_116 = arith.constant 0 : i32
    %401 = vector.broadcast %c0_i32_116 : i32 to vector<8x128xi32>
    %402 = arith.cmpi eq, %344, %401 : vector<8x128xi32>
    %c6_i32 = arith.constant 6 : i32
    %403 = vector.broadcast %c6_i32 : i32 to vector<8x128xi32>
    %404 = arith.cmpi eq, %345, %403 : vector<8x128xi32>
    %405 = arith.andi %402, %404 : vector<8x128xi1>
    %cst_117 = arith.constant 0.000000e+00 : f32
    %406 = vector.broadcast %343 : f32 to vector<8x128xf32>
    %407 = vector.broadcast %cst_117 : f32 to vector<8x128xf32>
    %408 = arith.select %405, %406, %407 : vector<8x128xi1>, vector<8x128xf32>
    %409 = arith.addf %400, %408 : vector<8x128xf32>
    %c0_i32_118 = arith.constant 0 : i32
    %410 = vector.broadcast %c0_i32_118 : i32 to vector<8x128xi32>
    %411 = arith.cmpi eq, %344, %410 : vector<8x128xi32>
    %c7_i32 = arith.constant 7 : i32
    %412 = vector.broadcast %c7_i32 : i32 to vector<8x128xi32>
    %413 = arith.cmpi eq, %345, %412 : vector<8x128xi32>
    %414 = arith.andi %411, %413 : vector<8x128xi1>
    %cst_119 = arith.constant 0.000000e+00 : f32
    %415 = vector.broadcast %254 : f32 to vector<8x128xf32>
    %416 = vector.broadcast %cst_119 : f32 to vector<8x128xf32>
    %417 = arith.select %414, %415, %416 : vector<8x128xi1>, vector<8x128xf32>
    %418 = arith.addf %409, %417 : vector<8x128xf32>
    %c0_120 = arith.constant 0 : index
    %c0_121 = arith.constant 0 : index
    %c0_122 = arith.constant 0 : index
    %419 = vector.load %arg13[%c0_120, %c0_121, %c0_122] : memref<1x8x128xf32, #tpu.memory_space<vmem>>, vector<1x8x128xf32>
    %420 = vector.shape_cast %419 : vector<1x8x128xf32> to vector<8x128xf32>
    %421 = vector.shape_cast %418 : vector<8x128xf32> to vector<1x8x128xf32>
    tpu.vector_store %arg13[%c0_120, %c0_121, %c0_122], %421 {strides = array<i32>} : memref<1x8x128xf32, #tpu.memory_space<vmem>>, vector<1x8x128xf32>,
    return
  }
  func.func @transform_0(%arg0: i32) -> (i32, i32) {
    %c0_i32 = arith.constant 0 : i32
    %c0_i32_0 = arith.constant 0 : i32
    return %arg0, %c0_i32 : i32, i32
  }
  func.func @transform_1(%arg0: i32) -> (i32, i32) {
    %c0_i32 = arith.constant 0 : i32
    %c0_i32_0 = arith.constant 0 : i32
    return %arg0, %c0_i32 : i32, i32
  }
  func.func @transform_2(%arg0: i32) -> (i32, i32) {
    %c0_i32 = arith.constant 0 : i32
    %c0_i32_0 = arith.constant 0 : i32
    return %arg0, %c0_i32 : i32, i32
  }
  func.func @transform_3(%arg0: i32) -> (i32, i32) {
    %c0_i32 = arith.constant 0 : i32
    %c0_i32_0 = arith.constant 0 : i32
    %c0_i32_1 = arith.constant 0 : i32
    return %c0_i32, %c0_i32_0 : i32, i32
  }
  func.func @transform_4(%arg0: i32) -> (i32, i32) {
    %c0_i32 = arith.constant 0 : i32
    %c0_i32_0 = arith.constant 0 : i32
    %c0_i32_1 = arith.constant 0 : i32
    return %c0_i32, %c0_i32_0 : i32, i32
  }
  func.func @transform_5(%arg0: i32) -> (i32, i32) {
    %c0_i32 = arith.constant 0 : i32
    %c0_i32_0 = arith.constant 0 : i32
    %c0_i32_1 = arith.constant 0 : i32
    return %c0_i32, %c0_i32_0 : i32, i32
  }
  func.func @transform_6(%arg0: i32) -> (i32, i32) {
    %c0_i32 = arith.constant 0 : i32
    %c0_i32_0 = arith.constant 0 : i32
    %c0_i32_1 = arith.constant 0 : i32
    return %c0_i32, %c0_i32_0 : i32, i32
  }
  func.func @transform_7(%arg0: i32) -> (i32, i32) {
    %c0_i32 = arith.constant 0 : i32
    %c0_i32_0 = arith.constant 0 : i32
    %c0_i32_1 = arith.constant 0 : i32
    return %c0_i32, %c0_i32_0 : i32, i32
  }
  func.func @transform_8(%arg0: i32) -> (i32, i32) {
    %c0_i32 = arith.constant 0 : i32
    %c0_i32_0 = arith.constant 0 : i32
    %c0_i32_1 = arith.constant 0 : i32
    return %c0_i32, %c0_i32_0 : i32, i32
  }
  func.func @transform_9(%arg0: i32) -> (i32, i32) {
    %c0_i32 = arith.constant 0 : i32
    %c0_i32_0 = arith.constant 0 : i32
    %c0_i32_1 = arith.constant 0 : i32
    return %c0_i32, %c0_i32_0 : i32, i32
  }
  func.func @transform_10(%arg0: i32) -> (i32, i32) {
    %c0_i32 = arith.constant 0 : i32
    %c0_i32_0 = arith.constant 0 : i32
    %c0_i32_1 = arith.constant 0 : i32
    return %c0_i32, %c0_i32_0 : i32, i32
  }
  func.func @transform_11(%arg0: i32) -> (i32, i32) {
    %c0_i32 = arith.constant 0 : i32
    %c0_i32_0 = arith.constant 0 : i32
    %c0_i32_1 = arith.constant 0 : i32
    return %c0_i32, %c0_i32_0 : i32, i32
  }
  func.func @transform_12(%arg0: i32) -> (i32, i32, i32) {
    %c0_i32 = arith.constant 0 : i32
    %c0_i32_0 = arith.constant 0 : i32
    %c0_i32_1 = arith.constant 0 : i32
    return %arg0, %c0_i32, %c0_i32_0 : i32, i32, i32
  }
}

</mosaic_0001>

<llo_original>
// kernel: tpu_custom_call.1
$region0: #{tpu_custom_call.1}
  #allocation0 [shape = 'u32[]', space=smem, size = 0x4, offset = 0x4, fixed_abs, tag = 'smem constant byte address 0x4 - core index']
  #allocation1 [shape = 'u32[144,128]{1,0:T(1,128)}', space=vmem, size = 0x12000, scoped, tag = 'internal scratch']
  %s0 = inlined_call_operand.vmem [shape: f32[16,16], index: 0, kind: input, shape index: {}]
  %s1 = inlined_call_operand.vmem [shape: f32[16,16], index: 1, kind: input, shape index: {}]
  %s2 = inlined_call_operand.vmem [shape: f32[16,4], index: 2, kind: input, shape index: {}]
  %s3 = inlined_call_operand.vmem [shape: f32[16,32], index: 3, kind: input, shape index: {}]
  %s4 = inlined_call_operand.vmem [shape: f32[1,32], index: 4, kind: input, shape index: {}]
  %s5 = inlined_call_operand.vmem [shape: f32[32,8], index: 5, kind: input, shape index: {}]
  %s6 = inlined_call_operand.vmem [shape: f32[1,8], index: 6, kind: input, shape index: {}]
  %s7 = inlined_call_operand.vmem [shape: f32[32,128], index: 7, kind: input, shape index: {}]
  %s8 = inlined_call_operand.vmem [shape: f32[2,32], index: 8, kind: input, shape index: {}]
  %s9 = inlined_call_operand.vmem [shape: f32[1,32], index: 9, kind: input, shape index: {}]
  %s10 = inlined_call_operand.vmem [shape: f32[32,16], index: 10, kind: input, shape index: {}]
  %s11 = inlined_call_operand.vmem [shape: f32[1,16], index: 11, kind: input, shape index: {}]
  %s12 = inlined_call_operand.hbm [shape: f32[2,8,128], index: 12, kind: output, shape index: {}]
  %s13 = sld [smem:[#allocation0]]
  $region81: #{tpu_custom_call.1} parent=0
    _
  %s15 = ssub.s32 1, %s13
  %s16 = scalar_select 0, %s15, %s13
  $region1: #{tpu_custom_call.1} parent=0
    #allocation2 [shape = 'u8[8192]{0}', space=vmem, size = 0x2000, scoped, tag = 'output window, operand 0']
    #allocation3 [shape = 's32[2]{0}', space=sflag, size = 0x8, scoped, tag = 'scoped memory for tpu_custom_call.1']
    %17 = vsyncpa [#allocation3], 0
    %s18 = scalar_lea.sflag [#allocation3], 1
    %19 = vsyncpa %s18, 0
    loop: start=0, step=1, limit=4
    $region2: #{tpu_custom_call.1} parent=1 // loop_pre_header
      _
    $region3: #{tpu_custom_call.1} parent=1 // loop_header
      %s21 = sphi 0, %s25
      %p22 = scmp.ge.s32.totalorder %s21, 4
      %s31 = sphi 0, %s33
      %s34 = sphi 0, %s31
      %s35 = sphi 0, %s34
      %s51 = sphi 0, %s35
      %s57 = sphi 0, %s59
      %s60 = sphi 0, %s57
      %s61 = sphi 0, %s60
      %s77 = sphi 0, %s61
      %s83 = sphi 0, %s85
      %s86 = sphi 0, %s83
      %s87 = sphi 0, %s86
      %s103 = sphi 0, %s87
      %s107 = sphi 0, %s107
      %s109 = sphi 0, %s107
      %s110 = sphi 0, %s109
      %s124 = sphi 0, %s110
      %s128 = sphi 0, %s128
      %s130 = sphi 0, %s128
      %s131 = sphi 0, %s130
      %s145 = sphi 0, %s131
      %s149 = sphi 0, %s149
      %s151 = sphi 0, %s149
      %s152 = sphi 0, %s151
      %s166 = sphi 0, %s152
      %s170 = sphi 0, %s170
      %s172 = sphi 0, %s170
      %s173 = sphi 0, %s172
      %s187 = sphi 0, %s173
      %s191 = sphi 0, %s191
      %s193 = sphi 0, %s191
      %s194 = sphi 0, %s193
      %s208 = sphi 0, %s194
      %s212 = sphi 0, %s212
      %s214 = sphi 0, %s212
      %s215 = sphi 0, %s214
      %s229 = sphi 0, %s215
      %s233 = sphi 0, %s233
      %s235 = sphi 0, %s233
      %s236 = sphi 0, %s235
      %s250 = sphi 0, %s236
      %s254 = sphi 0, %s254
      %s256 = sphi 0, %s254
      %s257 = sphi 0, %s256
      %s271 = sphi 0, %s257
      %s275 = sphi 0, %s275
      %s277 = sphi 0, %s275
      %s278 = sphi 0, %s277
      %s292 = sphi 0, %s278
      %s298 = sphi 0, %s300
      %s301 = sphi 0, %s298
      %s302 = sphi 0, %s301
      %s318 = sphi 0, %s302
    $region4: #{tpu_custom_call.1} parent=1 // loop_header_branch
      %24 = sbr.rel (%p22) target = $region8
    $region5: #{tpu_custom_call.1} parent=1 // loop_body
      %s26 = ssub.s32 %s21, 1
      %s27 = ssub.s32 %s21, 2
      %s28 = sadd.s32 %s21, 1
      %s29 = ssub.s32 %s21, %s28
      %p30 = scmp.eq.s32.totalorder %s29, 0
      %s32 = sadd.s32 %s31, 1
      %s33 = scalar_select %p30, %s31, %s32
      %p36 = pneg %p30
      %p37 = scmp.eq.s32.totalorder %s21, 1
      %p38 = por %p36, %p37
      %p39 = scmp.ne.s32.totalorder %s31, %s34
      %p40 = scmp.eq.s32.totalorder %s21, 0
      %p41 = por %p39, %p40
      %p42 = scmp.ne.s32.totalorder %s31, %s34
      %p43 = scmp.eq.s32.totalorder %s26, 1
      %p44 = por %p42, %p43
      %p45 = scmp.ne.s32.totalorder %s34, %s35
      %p46 = scmp.eq.s32.totalorder %s26, 0
      %p47 = por %p45, %p46
      %p48 = scmp.ne.s32.totalorder %s34, %s35
      %p49 = scmp.eq.s32.totalorder %s27, 1
      %p50 = por %p48, %p49
      %p52 = scmp.ne.s32.totalorder %s35, %s51
      %p53 = scmp.eq.s32.totalorder %s27, 0
      %p54 = por %p52, %p53
      %s55 = ssub.s32 %s21, %s28
      %p56 = scmp.eq.s32.totalorder %s55, 0
      %s58 = sadd.s32 %s57, 1
      %s59 = scalar_select %p56, %s57, %s58
      %p62 = pneg %p56
      %p63 = scmp.eq.s32.totalorder %s21, 1
      %p64 = por %p62, %p63
      %p65 = scmp.ne.s32.totalorder %s57, %s60
      %p66 = scmp.eq.s32.totalorder %s21, 0
      %p67 = por %p65, %p66
      %p68 = scmp.ne.s32.totalorder %s57, %s60
      %p69 = scmp.eq.s32.totalorder %s26, 1
      %p70 = por %p68, %p69
      %p71 = scmp.ne.s32.totalorder %s60, %s61
      %p72 = scmp.eq.s32.totalorder %s26, 0
      %p73 = por %p71, %p72
      %p74 = scmp.ne.s32.totalorder %s60, %s61
      %p75 = scmp.eq.s32.totalorder %s27, 1
      %p76 = por %p74, %p75
      %p78 = scmp.ne.s32.totalorder %s61, %s77
      %p79 = scmp.eq.s32.totalorder %s27, 0
      %p80 = por %p78, %p79
      %s81 = ssub.s32 %s21, %s28
      %p82 = scmp.eq.s32.totalorder %s81, 0
      %s84 = sadd.s32 %s83, 1
      %s85 = scalar_select %p82, %s83, %s84
      %p88 = pneg %p82
      %p89 = scmp.eq.s32.totalorder %s21, 1
      %p90 = por %p88, %p89
      %p91 = scmp.ne.s32.totalorder %s83, %s86
      %p92 = scmp.eq.s32.totalorder %s21, 0
      %p93 = por %p91, %p92
      %p94 = scmp.ne.s32.totalorder %s83, %s86
      %p95 = scmp.eq.s32.totalorder %s26, 1
      %p96 = por %p94, %p95
      %p97 = scmp.ne.s32.totalorder %s86, %s87
      %p98 = scmp.eq.s32.totalorder %s26, 0
      %p99 = por %p97, %p98
      %p100 = scmp.ne.s32.totalorder %s86, %s87
      %p101 = scmp.eq.s32.totalorder %s27, 1
      %p102 = por %p100, %p101
      %p104 = scmp.ne.s32.totalorder %s87, %s103
      %p105 = scmp.eq.s32.totalorder %s27, 0
      %p106 = por %p104, %p105
      %s108 = sadd.s32 %s107, 1
      %p111 = scmp.eq.s32.totalorder %s21, 1
      %p112 = scmp.ne.s32.totalorder %s107, %s109
      %p113 = scmp.eq.s32.totalorder %s21, 0
      %p114 = por %p112, %p113
      %p115 = scmp.ne.s32.totalorder %s107, %s109
      %p116 = scmp.eq.s32.totalorder %s26, 1
      %p117 = por %p115, %p116
      %p118 = scmp.ne.s32.totalorder %s109, %s110
      %p119 = scmp.eq.s32.totalorder %s26, 0
      %p120 = por %p118, %p119
      %p121 = scmp.ne.s32.totalorder %s109, %s110
      %p122 = scmp.eq.s32.totalorder %s27, 1
      %p123 = por %p121, %p122
      %p125 = scmp.ne.s32.totalorder %s110, %s124
      %p126 = scmp.eq.s32.totalorder %s27, 0
      %p127 = por %p125, %p126
      %s129 = sadd.s32 %s128, 1
      %p132 = scmp.eq.s32.totalorder %s21, 1
      %p133 = scmp.ne.s32.totalorder %s128, %s130
      %p134 = scmp.eq.s32.totalorder %s21, 0
      %p135 = por %p133, %p134
      %p136 = scmp.ne.s32.totalorder %s128, %s130
      %p137 = scmp.eq.s32.totalorder %s26, 1
      %p138 = por %p136, %p137
      %p139 = scmp.ne.s32.totalorder %s130, %s131
      %p140 = scmp.eq.s32.totalorder %s26, 0
      %p141 = por %p139, %p140
      %p142 = scmp.ne.s32.totalorder %s130, %s131
      %p143 = scmp.eq.s32.totalorder %s27, 1
      %p144 = por %p142, %p143
      %p146 = scmp.ne.s32.totalorder %s131, %s145
      %p147 = scmp.eq.s32.totalorder %s27, 0
      %p148 = por %p146, %p147
      %s150 = sadd.s32 %s149, 1
      %p153 = scmp.eq.s32.totalorder %s21, 1
      %p154 = scmp.ne.s32.totalorder %s149, %s151
      %p155 = scmp.eq.s32.totalorder %s21, 0
      %p156 = por %p154, %p155
      %p157 = scmp.ne.s32.totalorder %s149, %s151
      %p158 = scmp.eq.s32.totalorder %s26, 1
      %p159 = por %p157, %p158
      %p160 = scmp.ne.s32.totalorder %s151, %s152
      %p161 = scmp.eq.s32.totalorder %s26, 0
      %p162 = por %p160, %p161
      %p163 = scmp.ne.s32.totalorder %s151, %s152
      %p164 = scmp.eq.s32.totalorder %s27, 1
      %p165 = por %p163, %p164
      %p167 = scmp.ne.s32.totalorder %s152, %s166
      %p168 = scmp.eq.s32.totalorder %s27, 0
      %p169 = por %p167, %p168
      %s171 = sadd.s32 %s170, 1
      %p174 = scmp.eq.s32.totalorder %s21, 1
      %p175 = scmp.ne.s32.totalorder %s170, %s172
      %p176 = scmp.eq.s32.totalorder %s21, 0
      %p177 = por %p175, %p176
      %p178 = scmp.ne.s32.totalorder %s170, %s172
      %p179 = scmp.eq.s32.totalorder %s26, 1
      %p180 = por %p178, %p179
      %p181 = scmp.ne.s32.totalorder %s172, %s173
      %p182 = scmp.eq.s32.totalorder %s26, 0
      %p183 = por %p181, %p182
      %p184 = scmp.ne.s32.totalorder %s172, %s173
      %p185 = scmp.eq.s32.totalorder %s27, 1
      %p186 = por %p184, %p185
      %p188 = scmp.ne.s32.totalorder %s173, %s187
      %p189 = scmp.eq.s32.totalorder %s27, 0
      %p190 = por %p188, %p189
      %s192 = sadd.s32 %s191, 1
      %p195 = scmp.eq.s32.totalorder %s21, 1
      %p196 = scmp.ne.s32.totalorder %s191, %s193
      %p197 = scmp.eq.s32.totalorder %s21, 0
      %p198 = por %p196, %p197
      %p199 = scmp.ne.s32.totalorder %s191, %s193
      %p200 = scmp.eq.s32.totalorder %s26, 1
      %p201 = por %p199, %p200
      %p202 = scmp.ne.s32.totalorder %s193, %s194
      %p203 = scmp.eq.s32.totalorder %s26, 0
      %p204 = por %p202, %p203
      %p205 = scmp.ne.s32.totalorder %s193, %s194
      %p206 = scmp.eq.s32.totalorder %s27, 1
      %p207 = por %p205, %p206
      %p209 = scmp.ne.s32.totalorder %s194, %s208
      %p210 = scmp.eq.s32.totalorder %s27, 0
      %p211 = por %p209, %p210
      %s213 = sadd.s32 %s212, 1
      %p216 = scmp.eq.s32.totalorder %s21, 1
      %p217 = scmp.ne.s32.totalorder %s212, %s214
      %p218 = scmp.eq.s32.totalorder %s21, 0
      %p219 = por %p217, %p218
      %p220 = scmp.ne.s32.totalorder %s212, %s214
      %p221 = scmp.eq.s32.totalorder %s26, 1
      %p222 = por %p220, %p221
      %p223 = scmp.ne.s32.totalorder %s214, %s215
      %p224 = scmp.eq.s32.totalorder %s26, 0
      %p225 = por %p223, %p224
      %p226 = scmp.ne.s32.totalorder %s214, %s215
      %p227 = scmp.eq.s32.totalorder %s27, 1
      %p228 = por %p226, %p227
      %p230 = scmp.ne.s32.totalorder %s215, %s229
      %p231 = scmp.eq.s32.totalorder %s27, 0
      %p232 = por %p230, %p231
      %s234 = sadd.s32 %s233, 1
      %p237 = scmp.eq.s32.totalorder %s21, 1
      %p238 = scmp.ne.s32.totalorder %s233, %s235
      %p239 = scmp.eq.s32.totalorder %s21, 0
      %p240 = por %p238, %p239
      %p241 = scmp.ne.s32.totalorder %s233, %s235
      %p242 = scmp.eq.s32.totalorder %s26, 1
      %p243 = por %p241, %p242
      %p244 = scmp.ne.s32.totalorder %s235, %s236
      %p245 = scmp.eq.s32.totalorder %s26, 0
      %p246 = por %p244, %p245
      %p247 = scmp.ne.s32.totalorder %s235, %s236
      %p248 = scmp.eq.s32.totalorder %s27, 1
      %p249 = por %p247, %p248
      %p251 = scmp.ne.s32.totalorder %s236, %s250
      %p252 = scmp.eq.s32.totalorder %s27, 0
      %p253 = por %p251, %p252
      %s255 = sadd.s32 %s254, 1
      %p258 = scmp.eq.s32.totalorder %s21, 1
      %p259 = scmp.ne.s32.totalorder %s254, %s256
      %p260 = scmp.eq.s32.totalorder %s21, 0
      %p261 = por %p259, %p260
      %p262 = scmp.ne.s32.totalorder %s254, %s256
      %p263 = scmp.eq.s32.totalorder %s26, 1
      %p264 = por %p262, %p263
      %p265 = scmp.ne.s32.totalorder %s256, %s257
      %p266 = scmp.eq.s32.totalorder %s26, 0
      %p267 = por %p265, %p266
      %p268 = scmp.ne.s32.totalorder %s256, %s257
      %p269 = scmp.eq.s32.totalorder %s27, 1
      %p270 = por %p268, %p269
      %p272 = scmp.ne.s32.totalorder %s257, %s271
      %p273 = scmp.eq.s32.totalorder %s27, 0
      %p274 = por %p272, %p273
      %s276 = sadd.s32 %s275, 1
      %p279 = scmp.eq.s32.totalorder %s21, 1
      %p280 = scmp.ne.s32.totalorder %s275, %s277
      %p281 = scmp.eq.s32.totalorder %s21, 0
      %p282 = por %p280, %p281
      %p283 = scmp.ne.s32.totalorder %s275, %s277
      %p284 = scmp.eq.s32.totalorder %s26, 1
      %p285 = por %p283, %p284
      %p286 = scmp.ne.s32.totalorder %s277, %s278
      %p287 = scmp.eq.s32.totalorder %s26, 0
      %p288 = por %p286, %p287
      %p289 = scmp.ne.s32.totalorder %s277, %s278
      %p290 = scmp.eq.s32.totalorder %s27, 1
      %p291 = por %p289, %p290
      %p293 = scmp.ne.s32.totalorder %s278, %s292
      %p294 = scmp.eq.s32.totalorder %s27, 0
      %p295 = por %p293, %p294
      %s296 = ssub.s32 %s21, %s28
      %p297 = scmp.eq.s32.totalorder %s296, 0
      %s299 = sadd.s32 %s298, 1
      %s300 = scalar_select %p297, %s298, %s299
      %p303 = pneg %p297
      %p304 = scmp.eq.s32.totalorder %s21, 1
      %p305 = por %p303, %p304
      %p306 = scmp.ne.s32.totalorder %s298, %s301
      %p307 = scmp.eq.s32.totalorder %s21, 0
      %p308 = por %p306, %p307
      %p309 = scmp.ne.s32.totalorder %s298, %s301
      %p310 = scmp.eq.s32.totalorder %s26, 1
      %p311 = por %p309, %p310
      %p312 = scmp.ne.s32.totalorder %s301, %s302
      %p313 = scmp.eq.s32.totalorder %s26, 0
      %p314 = por %p312, %p313
      %p315 = scmp.ne.s32.totalorder %s301, %s302
      %p316 = scmp.eq.s32.totalorder %s27, 1
      %p317 = por %p315, %p316
      %p319 = scmp.ne.s32.totalorder %s302, %s318
      %p320 = scmp.eq.s32.totalorder %s27, 0
      %p321 = por %p319, %p320
      %p322 = scmp.le.s32.totalorder 1, %s21
      %p323 = scmp.lt.s32.totalorder %s21, 3
      %p324 = pnand %p322, %p323
      %p325 = pneg %p324
      // Predicated region
      $region9: #{tpu_custom_call.1} parent=5 // pred_check
        _
      $region10: #{tpu_custom_call.1} parent=5 // pred_check_branch
        %327 = sbr.rel (%p324) target = $region12
      $region11: #{tpu_custom_call.1} parent=5 // pred_region
        %s328 = ssub.s32 %s21, 1
        // Predicated region
        $region13: #{tpu_custom_call.1} parent=11 // pred_check
          %p329 = pneg %p120
        $region14: #{tpu_custom_call.1} parent=11 // pred_check_branch
          %331 = sbr.rel (%p329) target = $region16
        $region15: #{tpu_custom_call.1} parent=11 // pred_region
          _
        $region16: #{tpu_custom_call.1} parent=11 // pred_fallthru
          _
        // Predicated region
        $region17: #{tpu_custom_call.1} parent=11 // pred_check
          %p332 = pneg %p141
        $region18: #{tpu_custom_call.1} parent=11 // pred_check_branch
          %334 = sbr.rel (%p332) target = $region20
        $region19: #{tpu_custom_call.1} parent=11 // pred_region
          _
        $region20: #{tpu_custom_call.1} parent=11 // pred_fallthru
          _
        // Predicated region
        $region21: #{tpu_custom_call.1} parent=11 // pred_check
          %p335 = pneg %p162
        $region22: #{tpu_custom_call.1} parent=11 // pred_check_branch
          %337 = sbr.rel (%p335) target = $region24
        $region23: #{tpu_custom_call.1} parent=11 // pred_region
          _
        $region24: #{tpu_custom_call.1} parent=11 // pred_fallthru
          _
        // Predicated region
        $region25: #{tpu_custom_call.1} parent=11 // pred_check
          %p338 = pneg %p183
        $region26: #{tpu_custom_call.1} parent=11 // pred_check_branch
          %340 = sbr.rel (%p338) target = $region28
        $region27: #{tpu_custom_call.1} parent=11 // pred_region
          _
        $region28: #{tpu_custom_call.1} parent=11 // pred_fallthru
          _
        // Predicated region
        $region29: #{tpu_custom_call.1} parent=11 // pred_check
          %p341 = pneg %p204
        $region30: #{tpu_custom_call.1} parent=11 // pred_check_branch
          %343 = sbr.rel (%p341) target = $region32
        $region31: #{tpu_custom_call.1} parent=11 // pred_region
          _
        $region32: #{tpu_custom_call.1} parent=11 // pred_fallthru
          _
        // Predicated region
        $region33: #{tpu_custom_call.1} parent=11 // pred_check
          %p344 = pneg %p225
        $region34: #{tpu_custom_call.1} parent=11 // pred_check_branch
          %346 = sbr.rel (%p344) target = $region36
        $region35: #{tpu_custom_call.1} parent=11 // pred_region
          _
        $region36: #{tpu_custom_call.1} parent=11 // pred_fallthru
          _
        // Predicated region
        $region37: #{tpu_custom_call.1} parent=11 // pred_check
          %p347 = pneg %p246
        $region38: #{tpu_custom_call.1} parent=11 // pred_check_branch
          %349 = sbr.rel (%p347) target = $region40
        $region39: #{tpu_custom_call.1} parent=11 // pred_region
          _
        $region40: #{tpu_custom_call.1} parent=11 // pred_fallthru
          _
        // Predicated region
        $region41: #{tpu_custom_call.1} parent=11 // pred_check
          %p350 = pneg %p267
        $region42: #{tpu_custom_call.1} parent=11 // pred_check_branch
          %352 = sbr.rel (%p350) target = $region44
        $region43: #{tpu_custom_call.1} parent=11 // pred_region
          _
        $region44: #{tpu_custom_call.1} parent=11 // pred_fallthru
          _
        // Predicated region
        $region45: #{tpu_custom_call.1} parent=11 // pred_check
          %p353 = pneg %p288
        $region46: #{tpu_custom_call.1} parent=11 // pred_check_branch
          %355 = sbr.rel (%p353) target = $region48
        $region47: #{tpu_custom_call.1} parent=11 // pred_region
          _
        $region48: #{tpu_custom_call.1} parent=11 // pred_fallthru
          _
      $region12: #{tpu_custom_call.1} parent=5 // pred_fallthru
        _
      %p356 = scmp.lt.s32.totalorder %s21, 2
      // Predicated region
      $region49: #{tpu_custom_call.1} parent=5 // pred_check
        %p357 = pneg %p356
      $region50: #{tpu_custom_call.1} parent=5 // pred_check_branch
        %359 = sbr.rel (%p357) target = $region52
      $region51: #{tpu_custom_call.1} parent=5 // pred_region
        // Predicated region
        $region53: #{tpu_custom_call.1} parent=51 // pred_check
          %p360 = pneg %p41
        $region54: #{tpu_custom_call.1} parent=51 // pred_check_branch
          %362 = sbr.rel (%p360) target = $region56
        $region55: #{tpu_custom_call.1} parent=51 // pred_region
          %p363 = scmp.lt.s32.totalorder %s21, 1
          %s364 = scalar_select %p363, %s21, 1
          %s365 = smul.addr %s364, 8
          %s366 = scalar_lea.vmem %s0, %s365
        $region56: #{tpu_custom_call.1} parent=51 // pred_fallthru
          _
        // Predicated region
        $region57: #{tpu_custom_call.1} parent=51 // pred_check
          %p367 = pneg %p67
        $region58: #{tpu_custom_call.1} parent=51 // pred_check_branch
          %369 = sbr.rel (%p367) target = $region60
        $region59: #{tpu_custom_call.1} parent=51 // pred_region
          %p370 = scmp.lt.s32.totalorder %s21, 1
          %s371 = scalar_select %p370, %s21, 1
          %s372 = smul.addr %s371, 8
          %s373 = scalar_lea.vmem %s1, %s372
        $region60: #{tpu_custom_call.1} parent=51 // pred_fallthru
          _
        // Predicated region
        $region61: #{tpu_custom_call.1} parent=51 // pred_check
          %p374 = pneg %p93
        $region62: #{tpu_custom_call.1} parent=51 // pred_check_branch
          %376 = sbr.rel (%p374) target = $region64
        $region63: #{tpu_custom_call.1} parent=51 // pred_region
          %p377 = scmp.lt.s32.totalorder %s21, 1
          %s378 = scalar_select %p377, %s21, 1
          %s379 = smul.addr %s378, 8
          %s380 = scalar_lea.vmem %s2, %s379
        $region64: #{tpu_custom_call.1} parent=51 // pred_fallthru
          _
      $region52: #{tpu_custom_call.1} parent=5 // pred_fallthru
        _
      %p381 = scmp.le.s32.totalorder 1, %s21
      %p382 = scmp.lt.s32.totalorder %s21, 3
      %p383 = pnand %p381, %p382
      %p384 = pneg %p383
      // Predicated region
      $region65: #{tpu_custom_call.1} parent=5 // pred_check
        _
      $region66: #{tpu_custom_call.1} parent=5 // pred_check_branch
        %386 = sbr.rel (%p383) target = $region68
      $region67: #{tpu_custom_call.1} parent=5 // pred_region
        %s387 = ssub.s32 %s21, 1
        %p388 = scmp.lt.s32.totalorder %s26, 1
        %s389 = scalar_select %p388, %s26, 1
        %s390 = smul.addr %s389, 8
        %s391 = scalar_lea.vmem %s0, %s390
        %p392 = pneg %p47
        %p393 = pneg %p44
        %p394 = scmp.lt.s32.totalorder %s26, 1
        %s395 = scalar_select %p394, %s26, 1
        %s396 = smul.addr %s395, 8
        %s397 = scalar_lea.vmem %s1, %s396
        %p398 = pneg %p73
        %p399 = pneg %p70
        %p400 = scmp.lt.s32.totalorder %s26, 1
        %s401 = scalar_select %p400, %s26, 1
        %s402 = smul.addr %s401, 8
        %s403 = scalar_lea.vmem %s2, %s402
        %p404 = pneg %p99
        %p405 = pneg %p96
        %p406 = pneg %p120
        %p407 = pneg %p117
        %p408 = pneg %p141
        %p409 = pneg %p138
        %p410 = pneg %p162
        %p411 = pneg %p159
        %p412 = pneg %p183
        %p413 = pneg %p180
        %p414 = pneg %p204
        %p415 = pneg %p201
        %p416 = pneg %p225
        %p417 = pneg %p222
        %p418 = pneg %p246
        %p419 = pneg %p243
        %p420 = pneg %p267
        %p421 = pneg %p264
        %p422 = pneg %p288
        %p423 = pneg %p285
        %p424 = pneg %p314
        %p425 = pneg %p311
        %s426 = sand.u32 %s301, 1
        %s427 = scalar_lea.sflag [#allocation3], %s426
        %s428 = sand.u32 %s301, 1
        %s429 = smul.addr %s428, 8
        %s430 = scalar_lea.vmem [#allocation2], %s429
        %p431 = scmp.lt.s32.totalorder %s26, 1
        %s432 = scalar_select %p431, %s26, 1
        %s433 = smul.addr %s432, 8
        %s434 = scalar_lea.vmem %s0, %s433
        %p435 = scmp.lt.s32.totalorder %s26, 1
        %s436 = scalar_select %p435, %s26, 1
        %s437 = smul.addr %s436, 8
        %s438 = scalar_lea.vmem %s1, %s437
        %p439 = scmp.lt.s32.totalorder %s26, 1
        %s440 = scalar_select %p439, %s26, 1
        %s441 = smul.addr %s440, 8
        %s442 = scalar_lea.vmem %s2, %s441
        %v443 = vld [vmem:[%s434] sm:$0xff]
        %v444 = vld [vmem:[%s438] sm:$0xff]
        %v445 = vld [vmem:[%s442] sm:$0xff]
        %v446 = vld [vmem:[%s3] sm:$0xff]
        %v447 = vld [vmem:[%s3 + $0x8] sm:$0xff]
        %v448 = vld [vmem:[%s4] sm:$0x1]
        %v449 = vld [vmem:[%s5] sm:$0xff]
        %v450 = vld [vmem:[%s5 + $0x8] sm:$0xff]
        %v451 = vld [vmem:[%s5 + $0x10] sm:$0xff]
        %v452 = vld [vmem:[%s5 + $0x18] sm:$0xff]
        %v453 = vld [vmem:[%s6] sm:$0x1]
        %v454 = vld [vmem:[%s7] sm:$0xff]
        %v455 = vld [vmem:[%s7 + $0x8] sm:$0xff]
        %v456 = vld [vmem:[%s7 + $0x10] sm:$0xff]
        %v457 = vld [vmem:[%s7 + $0x18] sm:$0xff]
        %v458 = vlaneseq
        %v459 = vshrl.u32 %v458, 7
        %v460 = vadd.s32 %v459, 8
        %v461 = vadd.s32 %v459, 16
        %v462 = vadd.s32 %v459, 24
        %v463 = vadd.s32 %v459, 32
        %v464 = vadd.s32 %v459, 40
        %v465 = vadd.s32 %v459, 48
        %v466 = vadd.s32 %v459, 56
        %v467 = vadd.s32 %v459, 64
        %v468 = vadd.s32 %v459, 72
        %v469 = vadd.s32 %v459, 80
        %v470 = vadd.s32 %v459, 88
        %v471 = vadd.s32 %v459, 96
        %v472 = vadd.s32 %v459, 104
        %v473 = vadd.s32 %v459, 112
        %v474 = vadd.s32 %v459, 120
        %v475 = vlaneseq
        %v476 = vand.u32 %v475, 127
        %v477 = vmul.u32 %v476, 16
        %vm478 = vcmp.ge.s32.totalorder %v459, %v477
        %vm479 = vcmp.ge.s32.totalorder %v460, %v477
        %vm480 = vcmp.ge.s32.totalorder %v461, %v477
        %vm481 = vcmp.ge.s32.totalorder %v462, %v477
        %vm482 = vcmp.ge.s32.totalorder %v463, %v477
        %vm483 = vcmp.ge.s32.totalorder %v464, %v477
        %vm484 = vcmp.ge.s32.totalorder %v465, %v477
        %vm485 = vcmp.ge.s32.totalorder %v466, %v477
        %vm486 = vcmp.ge.s32.totalorder %v467, %v477
        %vm487 = vcmp.ge.s32.totalorder %v468, %v477
        %vm488 = vcmp.ge.s32.totalorder %v469, %v477
        %vm489 = vcmp.ge.s32.totalorder %v470, %v477
        %vm490 = vcmp.ge.s32.totalorder %v471, %v477
        %vm491 = vcmp.ge.s32.totalorder %v472, %v477
        %vm492 = vcmp.ge.s32.totalorder %v473, %v477
        %vm493 = vcmp.ge.s32.totalorder %v474, %v477
        %v494 = vadd.s32 %v476, 1
        %v495 = vmul.u32 %v494, 16
        %vm496 = vcmp.lt.s32.totalorder %v459, %v495
        %vm497 = vcmp.lt.s32.totalorder %v460, %v495
        %vm498 = vcmp.lt.s32.totalorder %v461, %v495
        %vm499 = vcmp.lt.s32.totalorder %v462, %v495
        %vm500 = vcmp.lt.s32.totalorder %v463, %v495
        %vm501 = vcmp.lt.s32.totalorder %v464, %v495
        %vm502 = vcmp.lt.s32.totalorder %v465, %v495
        %vm503 = vcmp.lt.s32.totalorder %v466, %v495
        %vm504 = vcmp.lt.s32.totalorder %v467, %v495
        %vm505 = vcmp.lt.s32.totalorder %v468, %v495
        %vm506 = vcmp.lt.s32.totalorder %v469, %v495
        %vm507 = vcmp.lt.s32.totalorder %v470, %v495
        %vm508 = vcmp.lt.s32.totalorder %v471, %v495
        %vm509 = vcmp.lt.s32.totalorder %v472, %v495
        %vm510 = vcmp.lt.s32.totalorder %v473, %v495
        %vm511 = vcmp.lt.s32.totalorder %v474, %v495
        %vm512 = vmand %vm478, %vm496
        %vm513 = vmand %vm479, %vm497
        %vm514 = vmand %vm480, %vm498
        %vm515 = vmand %vm481, %vm499
        %vm516 = vmand %vm482, %vm500
        %vm517 = vmand %vm483, %vm501
        %vm518 = vmand %vm484, %vm502
        %vm519 = vmand %vm485, %vm503
        %vm520 = vmand %vm486, %vm504
        %vm521 = vmand %vm487, %vm505
        %vm522 = vmand %vm488, %vm506
        %vm523 = vmand %vm489, %vm507
        %vm524 = vmand %vm490, %vm508
        %vm525 = vmand %vm491, %vm509
        %vm526 = vmand %vm492, %vm510
        %vm527 = vmand %vm493, %vm511
        %v528 = vsel %vm512, 1, 0
        %v529 = vsel %vm513, 1, 0
        %v530 = vsel %vm514, 1, 0
        %v531 = vsel %vm515, 1, 0
        %v532 = vsel %vm516, 1, 0
        %v533 = vsel %vm517, 1, 0
        %v534 = vsel %vm518, 1, 0
        %v535 = vsel %vm519, 1, 0
        %v536 = vsel %vm520, 1, 0
        %v537 = vsel %vm521, 1, 0
        %v538 = vsel %vm522, 1, 0
        %v539 = vsel %vm523, 1, 0
        %v540 = vsel %vm524, 1, 0
        %v541 = vsel %vm525, 1, 0
        %v542 = vsel %vm526, 1, 0
        %v543 = vsel %vm527, 1, 0
        %v544 = vcvt.s32.f32 %v528
        %v545 = vcvt.s32.f32 %v529
        %v546 = vcvt.s32.f32 %v530
        %v547 = vcvt.s32.f32 %v531
        %v548 = vcvt.s32.f32 %v532
        %v549 = vcvt.s32.f32 %v533
        %v550 = vcvt.s32.f32 %v534
        %v551 = vcvt.s32.f32 %v535
        %v552 = vcvt.s32.f32 %v536
        %v553 = vcvt.s32.f32 %v537
        %v554 = vcvt.s32.f32 %v538
        %v555 = vcvt.s32.f32 %v539
        %v556 = vcvt.s32.f32 %v540
        %v557 = vcvt.s32.f32 %v541
        %v558 = vcvt.s32.f32 %v542
        %v559 = vcvt.s32.f32 %v543
        %v560 = vmul.u32 %v459, 16
        %vm561 = vcmp.ge.s32.totalorder %v476, %v560
        %v562 = vadd.s32 %v459, 1
        %v563 = vmul.u32 %v562, 16
        %vm564 = vcmp.lt.s32.totalorder %v476, %v563
        %vm565 = vmand %vm561, %vm564
        %v566 = vsel %vm565, 1, 0
        %v567 = vcvt.s32.f32 %v566
        %v569 = vlaneseq
        %v570 = vshrl.u32 %v569, 7
        %v571 = vsub.s32 0, %v570
        %v572 = vrot.slane %v448, %v571
        %vm574 = vcmask 130048
        %v576 = vsel %vm574, %v443, 0
        %578 = vmatprep.subr.mxu0 0.0
        %579 = vmatpush1.msra.mxu0 %v446
        %580 = vmatprep.subr.mxu0 0.0
        %581 = vmatpush1.msra.mxu0 %v447
        %582 = vmatprep.subr.mxu0 0.0
        %583 = vmatpush1.msra.mxu0 0.0
        %584 = vmatprep.subr.mxu0 0.0
        %585 = vmatpush1.msra.mxu0 0.0
        %586 = vmatprep.subr.mxu0 0.0
        %587 = vmatpush1.msra.mxu0 0.0
        %588 = vmatprep.subr.mxu0 0.0
        %589 = vmatpush1.msra.mxu0 0.0
        %590 = vmatprep.subr.mxu0 0.0
        %591 = vmatpush1.msra.mxu0 0.0
        %592 = vmatprep.subr.mxu0 0.0
        %593 = vmatpush1.msra.mxu0 0.0
        %594 = vmatprep.subr.mxu0 0.0
        %595 = vmatpush1.msra.mxu0 0.0
        %596 = vmatprep.subr.mxu0 0.0
        %597 = vmatpush1.msra.mxu0 0.0
        %598 = vmatprep.subr.mxu0 0.0
        %599 = vmatpush1.msra.mxu0 0.0
        %600 = vmatprep.subr.mxu0 0.0
        %601 = vmatpush1.msra.mxu0 0.0
        %602 = vmatprep.subr.mxu0 0.0
        %603 = vmatpush1.msra.mxu0 0.0
        %604 = vmatprep.subr.mxu0 0.0
        %605 = vmatpush1.msra.mxu0 0.0
        %606 = vmatprep.subr.mxu0 0.0
        %607 = vmatpush1.msra.mxu0 0.0
        %608 = vmatprep.subr.mxu0 0.0
        %609 = vmatpush1.msra.mxu0 0.0
        %610 = vmatprep.subr.mxu0 0.0
        %611 = vmatpush1.msra.mxu0 0.0
        %612 = vmatprep.subr.mxu0 0.0
        %613 = vmatpush1.msra.mxu0 0.0
        %614 = vmatprep.subr.mxu0 0.0
        %615 = vmatpush1.msra.mxu0 0.0
        %616 = vmatprep.subr.mxu0 0.0
        %617 = vmatpush1.msra.mxu0 0.0
        %618 = vmatprep.subr.mxu0 0.0
        %619 = vmatpush1.msra.mxu0 0.0
        %620 = vmatprep.subr.mxu0 0.0
        %621 = vmatpush1.msra.mxu0 0.0
        %622 = vmatprep.subr.mxu0 0.0
        %623 = vmatpush1.msra.mxu0 0.0
        %624 = vmatprep.subr.mxu0 0.0
        %625 = vmatpush1.msra.mxu0 0.0
        %626 = vmatprep.subr.mxu0 0.0
        %627 = vmatpush1.msra.mxu0 0.0
        %628 = vmatprep.subr.mxu0 0.0
        %629 = vmatpush1.msra.mxu0 0.0
        %630 = vmatprep.subr.mxu0 0.0
        %631 = vmatpush1.msra.mxu0 0.0
        %632 = vmatprep.subr.mxu0 0.0
        %633 = vmatpush1.msra.mxu0 0.0
        %634 = vmatprep.subr.mxu0 0.0
        %635 = vmatpush1.msra.mxu0 0.0
        %636 = vmatprep.subr.mxu0 0.0
        %637 = vmatpush1.msra.mxu0 0.0
        %638 = vmatprep.subr.mxu0 0.0
        %639 = vmatpush1.msra.mxu0 0.0
        %640 = vmatprep.subr.mxu0 0.0
        %641 = vmatpush1.msra.mxu0 0.0
        %642 = vmatprep.mubr.f32.mxu0 0.0
        %643 = vmatmul.mubr.f32.gmra.mrb[0].mxu0 %v576
        %v644 = vpop.f32.mrb[0].mxu0
        %v645 = vadd.f32 %v572, %v644
        %v646 = vpop.f32.mrb[0].mxu0
        %647 = vdwg.mxu0
        %v648 = vtanh.pop %v645
        %v650 = vlaneseq
        %v651 = vshrl.u32 %v650, 7
        %v652 = vsub.s32 0, %v651
        %v653 = vrot.slane %v453, %v652
        %vm655 = vcmask 261120
        %v657 = vsel %vm655, %v648, 0
        %659 = vmatprep.subr.mxu0 0.0
        %660 = vmatpush1.msra.mxu0 %v449
        %661 = vmatprep.subr.mxu0 0.0
        %662 = vmatpush1.msra.mxu0 %v450
        %663 = vmatprep.subr.mxu0 0.0
        %664 = vmatpush1.msra.mxu0 %v451
        %665 = vmatprep.subr.mxu0 0.0
        %666 = vmatpush1.msra.mxu0 %v452
        %667 = vmatprep.subr.mxu0 0.0
        %668 = vmatpush1.msra.mxu0 0.0
        %669 = vmatprep.subr.mxu0 0.0
        %670 = vmatpush1.msra.mxu0 0.0
        %671 = vmatprep.subr.mxu0 0.0
        %672 = vmatpush1.msra.mxu0 0.0
        %673 = vmatprep.subr.mxu0 0.0
        %674 = vmatpush1.msra.mxu0 0.0
        %675 = vmatprep.subr.mxu0 0.0
        %676 = vmatpush1.msra.mxu0 0.0
        %677 = vmatprep.subr.mxu0 0.0
        %678 = vmatpush1.msra.mxu0 0.0
        %679 = vmatprep.subr.mxu0 0.0
        %680 = vmatpush1.msra.mxu0 0.0
        %681 = vmatprep.subr.mxu0 0.0
        %682 = vmatpush1.msra.mxu0 0.0
        %683 = vmatprep.subr.mxu0 0.0
        %684 = vmatpush1.msra.mxu0 0.0
        %685 = vmatprep.subr.mxu0 0.0
        %686 = vmatpush1.msra.mxu0 0.0
        %687 = vmatprep.subr.mxu0 0.0
        %688 = vmatpush1.msra.mxu0 0.0
        %689 = vmatprep.subr.mxu0 0.0
        %690 = vmatpush1.msra.mxu0 0.0
        %691 = vmatprep.subr.mxu0 0.0
        %692 = vmatpush1.msra.mxu0 0.0
        %693 = vmatprep.subr.mxu0 0.0
        %694 = vmatpush1.msra.mxu0 0.0
        %695 = vmatprep.subr.mxu0 0.0
        %696 = vmatpush1.msra.mxu0 0.0
        %697 = vmatprep.subr.mxu0 0.0
        %698 = vmatpush1.msra.mxu0 0.0
        %699 = vmatprep.subr.mxu0 0.0
        %700 = vmatpush1.msra.mxu0 0.0
        %701 = vmatprep.subr.mxu0 0.0
        %702 = vmatpush1.msra.mxu0 0.0
        %703 = vmatprep.subr.mxu0 0.0
        %704 = vmatpush1.msra.mxu0 0.0
        %705 = vmatprep.subr.mxu0 0.0
        %706 = vmatpush1.msra.mxu0 0.0
        %707 = vmatprep.subr.mxu0 0.0
        %708 = vmatpush1.msra.mxu0 0.0
        %709 = vmatprep.subr.mxu0 0.0
        %710 = vmatpush1.msra.mxu0 0.0
        %711 = vmatprep.subr.mxu0 0.0
        %712 = vmatpush1.msra.mxu0 0.0
        %713 = vmatprep.subr.mxu0 0.0
        %714 = vmatpush1.msra.mxu0 0.0
        %715 = vmatprep.subr.mxu0 0.0
        %716 = vmatpush1.msra.mxu0 0.0
        %717 = vmatprep.subr.mxu0 0.0
        %718 = vmatpush1.msra.mxu0 0.0
        %719 = vmatprep.subr.mxu0 0.0
        %720 = vmatpush1.msra.mxu0 0.0
        %721 = vmatprep.subr.mxu0 0.0
        %722 = vmatpush1.msra.mxu0 0.0
        %723 = vmatprep.mubr.f32.mxu0 0.0
        %724 = vmatmul.mubr.f32.gmra.mrb[0].mxu0 %v657
        %v725 = vpop.f32.mrb[0].mxu0
        %v726 = vadd.f32 %v653, %v725
        %v727 = vpop.f32.mrb[0].mxu0
        %728 = vdwg.mxu0
        %v729 = vmul.f32 %v648, %v648
        %v730 = vsub.f32 1.0, %v729
        %v732 = vsel %vm655, %v730, 0
        %734 = vmatprep.subr.mxu0 0.0
        %735 = vmatpush1.msra.mxu0 %v454
        %736 = vmatprep.subr.mxu0 0.0
        %737 = vmatpush1.msra.mxu0 %v455
        %738 = vmatprep.subr.mxu0 0.0
        %739 = vmatpush1.msra.mxu0 %v456
        %740 = vmatprep.subr.mxu0 0.0
        %741 = vmatpush1.msra.mxu0 %v457
        %742 = vmatprep.subr.mxu0 0.0
        %743 = vmatpush1.msra.mxu0 0.0
        %744 = vmatprep.subr.mxu0 0.0
        %745 = vmatpush1.msra.mxu0 0.0
        %746 = vmatprep.subr.mxu0 0.0
        %747 = vmatpush1.msra.mxu0 0.0
        %748 = vmatprep.subr.mxu0 0.0
        %749 = vmatpush1.msra.mxu0 0.0
        %750 = vmatprep.subr.mxu0 0.0
        %751 = vmatpush1.msra.mxu0 0.0
        %752 = vmatprep.subr.mxu0 0.0
        %753 = vmatpush1.msra.mxu0 0.0
        %754 = vmatprep.subr.mxu0 0.0
        %755 = vmatpush1.msra.mxu0 0.0
        %756 = vmatprep.subr.mxu0 0.0
        %757 = vmatpush1.msra.mxu0 0.0
        %758 = vmatprep.subr.mxu0 0.0
        %759 = vmatpush1.msra.mxu0 0.0
        %760 = vmatprep.subr.mxu0 0.0
        %761 = vmatpush1.msra.mxu0 0.0
        %762 = vmatprep.subr.mxu0 0.0
        %763 = vmatpush1.msra.mxu0 0.0
        %764 = vmatprep.subr.mxu0 0.0
        %765 = vmatpush1.msra.mxu0 0.0
        %766 = vmatprep.subr.mxu0 0.0
        %767 = vmatpush1.msra.mxu0 0.0
        %768 = vmatprep.subr.mxu0 0.0
        %769 = vmatpush1.msra.mxu0 0.0
        %770 = vmatprep.subr.mxu0 0.0
        %771 = vmatpush1.msra.mxu0 0.0
        %772 = vmatprep.subr.mxu0 0.0
        %773 = vmatpush1.msra.mxu0 0.0
        %774 = vmatprep.subr.mxu0 0.0
        %775 = vmatpush1.msra.mxu0 0.0
        %776 = vmatprep.subr.mxu0 0.0
        %777 = vmatpush1.msra.mxu0 0.0
        %778 = vmatprep.subr.mxu0 0.0
        %779 = vmatpush1.msra.mxu0 0.0
        %780 = vmatprep.subr.mxu0 0.0
        %781 = vmatpush1.msra.mxu0 0.0
        %782 = vmatprep.subr.mxu0 0.0
        %783 = vmatpush1.msra.mxu0 0.0
        %784 = vmatprep.subr.mxu0 0.0
        %785 = vmatpush1.msra.mxu0 0.0
        %786 = vmatprep.subr.mxu0 0.0
        %787 = vmatpush1.msra.mxu0 0.0
        %788 = vmatprep.subr.mxu0 0.0
        %789 = vmatpush1.msra.mxu0 0.0
        %790 = vmatprep.subr.mxu0 0.0
        %791 = vmatpush1.msra.mxu0 0.0
        %792 = vmatprep.subr.mxu0 0.0
        %793 = vmatpush1.msra.mxu0 0.0
        %794 = vmatprep.subr.mxu0 0.0
        %795 = vmatpush1.msra.mxu0 0.0
        %796 = vmatprep.subr.mxu0 0.0
        %797 = vmatpush1.msra.mxu0 0.0
        %798 = vmatprep.mubr.f32.mxu0 0.0
        %799 = vmatmul.mubr.f32.gmra.mrb[0].mxu0 %v732
        %v800 = vpop.f32.mrb[0].mxu0
        %v801 = vadd.f32 0.0, %v800
        %v802 = vpop.f32.mrb[0].mxu0
        %803 = vdwg.mxu0
        %v804 = vand.u32 2147483647, %v726
        %806 = vrot.lane.b32.xlu0 %v804, 126
        %v807 = vpop.permute.xlu0 %806
        %vm809 = vcmask 48128
        %v810 = vsel %vm809, %v807, 0.0
        %811 = vadd.xlane.f32.xlu0 %v810
        %v812 = vpop.xlane.xlu0 %811
        %v813 = vrot.slane %v812, 4
        %v814 = vadd.f32 %v812, %v813
        %v815 = vrot.slane %v814, 2
        %v816 = vadd.f32 %v814, %v815
        %v817 = vrot.slane %v816, 1
        %v818 = vadd.f32 %v816, %v817
        %s819 = vtos %v818
        %v820 = vld [vmem:[%s8] sm:$0x3]
        %v821 = vld [vmem:[%s9] sm:$0x1]
        %v823 = vlaneseq
        %v824 = vshrl.u32 %v823, 7
        %v825 = vsub.s32 0, %v824
        %v826 = vrot.slane %v821, %v825
        %vm828 = vcmask 15360
        %v830 = vsel %vm828, %v726, 0
        %vm832 = vcmask 1041408
        %v834 = vsel %vm832, %v820, 0
        %836 = vmatprep.subr.mxu0 0.0
        %837 = vmatpush1.msra.mxu0 %v834
        %838 = vmatprep.subr.mxu0 0.0
        %839 = vmatpush1.msra.mxu0 0.0
        %840 = vmatprep.subr.mxu0 0.0
        %841 = vmatpush1.msra.mxu0 0.0
        %842 = vmatprep.subr.mxu0 0.0
        %843 = vmatpush1.msra.mxu0 0.0
        %844 = vmatprep.subr.mxu0 0.0
        %845 = vmatpush1.msra.mxu0 0.0
        %846 = vmatprep.subr.mxu0 0.0
        %847 = vmatpush1.msra.mxu0 0.0
        %848 = vmatprep.subr.mxu0 0.0
        %849 = vmatpush1.msra.mxu0 0.0
        %850 = vmatprep.subr.mxu0 0.0
        %851 = vmatpush1.msra.mxu0 0.0
        %852 = vmatprep.subr.mxu0 0.0
        %853 = vmatpush1.msra.mxu0 0.0
        %854 = vmatprep.subr.mxu0 0.0
        %855 = vmatpush1.msra.mxu0 0.0
        %856 = vmatprep.subr.mxu0 0.0
        %857 = vmatpush1.msra.mxu0 0.0
        %858 = vmatprep.subr.mxu0 0.0
        %859 = vmatpush1.msra.mxu0 0.0
        %860 = vmatprep.subr.mxu0 0.0
        %861 = vmatpush1.msra.mxu0 0.0
        %862 = vmatprep.subr.mxu0 0.0
        %863 = vmatpush1.msra.mxu0 0.0
        %864 = vmatprep.subr.mxu0 0.0
        %865 = vmatpush1.msra.mxu0 0.0
        %866 = vmatprep.subr.mxu0 0.0
        %867 = vmatpush1.msra.mxu0 0.0
        %868 = vmatprep.subr.mxu0 0.0
        %869 = vmatpush1.msra.mxu0 0.0
        %870 = vmatprep.subr.mxu0 0.0
        %871 = vmatpush1.msra.mxu0 0.0
        %872 = vmatprep.subr.mxu0 0.0
        %873 = vmatpush1.msra.mxu0 0.0
        %874 = vmatprep.subr.mxu0 0.0
        %875 = vmatpush1.msra.mxu0 0.0
        %876 = vmatprep.subr.mxu0 0.0
        %877 = vmatpush1.msra.mxu0 0.0
        %878 = vmatprep.subr.mxu0 0.0
        %879 = vmatpush1.msra.mxu0 0.0
        %880 = vmatprep.subr.mxu0 0.0
        %881 = vmatpush1.msra.mxu0 0.0
        %882 = vmatprep.subr.mxu0 0.0
        %883 = vmatpush1.msra.mxu0 0.0
        %884 = vmatprep.subr.mxu0 0.0
        %885 = vmatpush1.msra.mxu0 0.0
        %886 = vmatprep.subr.mxu0 0.0
        %887 = vmatpush1.msra.mxu0 0.0
        %888 = vmatprep.subr.mxu0 0.0
        %889 = vmatpush1.msra.mxu0 0.0
        %890 = vmatprep.subr.mxu0 0.0
        %891 = vmatpush1.msra.mxu0 0.0
        %892 = vmatprep.subr.mxu0 0.0
        %893 = vmatpush1.msra.mxu0 0.0
        %894 = vmatprep.subr.mxu0 0.0
        %895 = vmatpush1.msra.mxu0 0.0
        %896 = vmatprep.subr.mxu0 0.0
        %897 = vmatpush1.msra.mxu0 0.0
        %898 = vmatprep.subr.mxu0 0.0
        %899 = vmatpush1.msra.mxu0 0.0
        %900 = vmatprep.mubr.f32.mxu0 0.0
        %901 = vmatmul.mubr.f32.gmra.mrb[0].mxu0 %v830
        %v902 = vpop.f32.mrb[0].mxu0
        %v903 = vadd.f32 %v826, %v902
        %v904 = vpop.f32.mrb[0].mxu0
        %905 = vdwg.mxu0
        %v906 = vtanh.pop %v903
        %v907 = vld [vmem:[%s10] sm:$0xff]
        %v908 = vld [vmem:[%s10 + $0x8] sm:$0xff]
        %v909 = vld [vmem:[%s10 + $0x10] sm:$0xff]
        %v910 = vld [vmem:[%s10 + $0x18] sm:$0xff]
        %v911 = vld [vmem:[%s11] sm:$0x1]
        %v913 = vlaneseq
        %v914 = vshrl.u32 %v913, 7
        %v915 = vsub.s32 0, %v914
        %v916 = vrot.slane %v911, %v915
        %v919 = vsel %vm655, %v906, 0
        %921 = vmatprep.subr.mxu0 0.0
        %922 = vmatpush1.msra.mxu0 %v907
        %923 = vmatprep.subr.mxu0 0.0
        %924 = vmatpush1.msra.mxu0 %v908
        %925 = vmatprep.subr.mxu0 0.0
        %926 = vmatpush1.msra.mxu0 %v909
        %927 = vmatprep.subr.mxu0 0.0
        %928 = vmatpush1.msra.mxu0 %v910
        %929 = vmatprep.subr.mxu0 0.0
        %930 = vmatpush1.msra.mxu0 0.0
        %931 = vmatprep.subr.mxu0 0.0
        %932 = vmatpush1.msra.mxu0 0.0
        %933 = vmatprep.subr.mxu0 0.0
        %934 = vmatpush1.msra.mxu0 0.0
        %935 = vmatprep.subr.mxu0 0.0
        %936 = vmatpush1.msra.mxu0 0.0
        %937 = vmatprep.subr.mxu0 0.0
        %938 = vmatpush1.msra.mxu0 0.0
        %939 = vmatprep.subr.mxu0 0.0
        %940 = vmatpush1.msra.mxu0 0.0
        %941 = vmatprep.subr.mxu0 0.0
        %942 = vmatpush1.msra.mxu0 0.0
        %943 = vmatprep.subr.mxu0 0.0
        %944 = vmatpush1.msra.mxu0 0.0
        %945 = vmatprep.subr.mxu0 0.0
        %946 = vmatpush1.msra.mxu0 0.0
        %947 = vmatprep.subr.mxu0 0.0
        %948 = vmatpush1.msra.mxu0 0.0
        %949 = vmatprep.subr.mxu0 0.0
        %950 = vmatpush1.msra.mxu0 0.0
        %951 = vmatprep.subr.mxu0 0.0
        %952 = vmatpush1.msra.mxu0 0.0
        %953 = vmatprep.subr.mxu0 0.0
        %954 = vmatpush1.msra.mxu0 0.0
        %955 = vmatprep.subr.mxu0 0.0
        %956 = vmatpush1.msra.mxu0 0.0
        %957 = vmatprep.subr.mxu0 0.0
        %958 = vmatpush1.msra.mxu0 0.0
        %959 = vmatprep.subr.mxu0 0.0
        %960 = vmatpush1.msra.mxu0 0.0
        %961 = vmatprep.subr.mxu0 0.0
        %962 = vmatpush1.msra.mxu0 0.0
        %963 = vmatprep.subr.mxu0 0.0
        %964 = vmatpush1.msra.mxu0 0.0
        %965 = vmatprep.subr.mxu0 0.0
        %966 = vmatpush1.msra.mxu0 0.0
        %967 = vmatprep.subr.mxu0 0.0
        %968 = vmatpush1.msra.mxu0 0.0
        %969 = vmatprep.subr.mxu0 0.0
        %970 = vmatpush1.msra.mxu0 0.0
        %971 = vmatprep.subr.mxu0 0.0
        %972 = vmatpush1.msra.mxu0 0.0
        %973 = vmatprep.subr.mxu0 0.0
        %974 = vmatpush1.msra.mxu0 0.0
        %975 = vmatprep.subr.mxu0 0.0
        %976 = vmatpush1.msra.mxu0 0.0
        %977 = vmatprep.subr.mxu0 0.0
        %978 = vmatpush1.msra.mxu0 0.0
        %979 = vmatprep.subr.mxu0 0.0
        %980 = vmatpush1.msra.mxu0 0.0
        %981 = vmatprep.subr.mxu0 0.0
        %982 = vmatpush1.msra.mxu0 0.0
        %983 = vmatprep.subr.mxu0 0.0
        %984 = vmatpush1.msra.mxu0 0.0
        %985 = vmatprep.mubr.f32.mxu0 0.0
        %986 = vmatmul.mubr.f32.gmra.mrb[0].mxu0 %v919
        %v987 = vpop.f32.mrb[0].mxu0
        %v988 = vadd.f32 %v916, %v987
        %v989 = vpop.f32.mrb[0].mxu0
        %990 = vdwg.mxu0
        %v991 = vsub.f32 %v988, %v443
        %v992 = vmul.f32 %v991, %v991
        %v993 = vsel %vm574, %v992, 0.0
        %994 = vadd.xlane.f32.xlu0 %v993
        %v995 = vpop.xlane.xlu0 %994
        %v996 = vrsqrt.pop %v995
        %v997 = vmul.f32 %v995, %v996
        %vm998 = vcmp.eq.f32.partialorder %v995, inf
        %v999 = vsel %vm998, %v995, %v997
        %vm1000 = vcmp.eq.f32.partialorder %v995, 0.0
        %v1001 = vand.u32 %v995, 2147483648
        %v1002 = vsel %vm1000, %v1001, %v999
        %vm1003 = vcmask 7168
        %v1004 = vsel %vm1003, %v1002, 0.0
        %1005 = vadd.xlane.f32.xlu0 %v1004
        %v1006 = vpop.xlane.xlu0 %1005
        %v1007 = vrot.slane %v1006, 4
        %v1008 = vadd.f32 %v1006, %v1007
        %v1009 = vrot.slane %v1008, 2
        %v1010 = vadd.f32 %v1008, %v1009
        %v1011 = vrot.slane %v1010, 1
        %v1012 = vadd.f32 %v1010, %v1011
        %s1013 = vtos %v1012
        %v1014 = vmul.f32 %v801, %v801
        %1015 = vmatprep.subr.mxu0 0.0
        %1016 = vmatpush1.msra.mxu0 %v544
        %1017 = vmatprep.subr.mxu0 0.0
        %1018 = vmatpush1.msra.mxu0 %v545
        %1019 = vmatprep.subr.mxu0 0.0
        %1020 = vmatpush1.msra.mxu0 %v546
        %1021 = vmatprep.subr.mxu0 0.0
        %1022 = vmatpush1.msra.mxu0 %v547
        %1023 = vmatprep.subr.mxu0 0.0
        %1024 = vmatpush1.msra.mxu0 %v548
        %1025 = vmatprep.subr.mxu0 0.0
        %1026 = vmatpush1.msra.mxu0 %v549
        %1027 = vmatprep.subr.mxu0 0.0
        %1028 = vmatpush1.msra.mxu0 %v550
        %1029 = vmatprep.subr.mxu0 0.0
        %1030 = vmatpush1.msra.mxu0 %v551
        %1031 = vmatprep.subr.mxu0 0.0
        %1032 = vmatpush1.msra.mxu0 %v552
        %1033 = vmatprep.subr.mxu0 0.0
        %1034 = vmatpush1.msra.mxu0 %v553
        %1035 = vmatprep.subr.mxu0 0.0
        %1036 = vmatpush1.msra.mxu0 %v554
        %1037 = vmatprep.subr.mxu0 0.0
        %1038 = vmatpush1.msra.mxu0 %v555
        %1039 = vmatprep.subr.mxu0 0.0
        %1040 = vmatpush1.msra.mxu0 %v556
        %1041 = vmatprep.subr.mxu0 0.0
        %1042 = vmatpush1.msra.mxu0 %v557
        %1043 = vmatprep.subr.mxu0 0.0
        %1044 = vmatpush1.msra.mxu0 %v558
        %1045 = vmatprep.subr.mxu0 0.0
        %1046 = vmatpush1.msra.mxu0 %v559
        %1047 = vmatprep.subr.mxu0 0.0
        %1048 = vmatpush1.msra.mxu0 0.0
        %1049 = vmatprep.subr.mxu0 0.0
        %1050 = vmatpush1.msra.mxu0 0.0
        %1051 = vmatprep.subr.mxu0 0.0
        %1052 = vmatpush1.msra.mxu0 0.0
        %1053 = vmatprep.subr.mxu0 0.0
        %1054 = vmatpush1.msra.mxu0 0.0
        %1055 = vmatprep.subr.mxu0 0.0
        %1056 = vmatpush1.msra.mxu0 0.0
        %1057 = vmatprep.subr.mxu0 0.0
        %1058 = vmatpush1.msra.mxu0 0.0
        %1059 = vmatprep.subr.mxu0 0.0
        %1060 = vmatpush1.msra.mxu0 0.0
        %1061 = vmatprep.subr.mxu0 0.0
        %1062 = vmatpush1.msra.mxu0 0.0
        %1063 = vmatprep.subr.mxu0 0.0
        %1064 = vmatpush1.msra.mxu0 0.0
        %1065 = vmatprep.subr.mxu0 0.0
        %1066 = vmatpush1.msra.mxu0 0.0
        %1067 = vmatprep.subr.mxu0 0.0
        %1068 = vmatpush1.msra.mxu0 0.0
        %1069 = vmatprep.subr.mxu0 0.0
        %1070 = vmatpush1.msra.mxu0 0.0
        %1071 = vmatprep.subr.mxu0 0.0
        %1072 = vmatpush1.msra.mxu0 0.0
        %1073 = vmatprep.subr.mxu0 0.0
        %1074 = vmatpush1.msra.mxu0 0.0
        %1075 = vmatprep.subr.mxu0 0.0
        %1076 = vmatpush1.msra.mxu0 0.0
        %1077 = vmatprep.subr.mxu0 0.0
        %1078 = vmatpush1.msra.mxu0 0.0
        %1079 = vmatprep.mubr.f32.mxu0 0.0
        %1080 = vmatmul.mubr.f32.gmra.mrb[0].mxu0 %v1014
        %v1081 = vpop.f32.mrb[0].mxu0
        %v1082 = vadd.f32 0.0, %v1081
        %v1083 = vpop.f32.mrb[0].mxu0
        %1084 = vdwg.mxu0
        %v1085 = vrsqrt.pop %v1082
        %v1086 = vmul.f32 %v1082, %v1085
        %vm1087 = vcmp.eq.f32.partialorder %v1082, inf
        %v1088 = vsel %vm1087, %v1082, %v1086
        %vm1089 = vcmp.eq.f32.partialorder %v1082, 0.0
        %v1090 = vand.u32 %v1082, 2147483648
        %v1091 = vsel %vm1089, %v1090, %v1088
        %1093 = vrot.lane.b32.xlu0 %v1014, 112
        %v1094 = vpop.permute.xlu0 %1093
        %v1096 = vadd.f32 %v1014, %v1094
        %1097 = vrot.lane.b32.xlu0 %v1014, 96
        %v1098 = vpop.permute.xlu0 %1097
        %v1100 = vadd.f32 %v1096, %v1098
        %1101 = vrot.lane.b32.xlu0 %v1014, 80
        %v1102 = vpop.permute.xlu0 %1101
        %v1104 = vadd.f32 %v1100, %v1102
        %1105 = vrot.lane.b32.xlu0 %v1014, 64
        %v1106 = vpop.permute.xlu0 %1105
        %v1108 = vadd.f32 %v1104, %v1106
        %1109 = vrot.lane.b32.xlu0 %v1014, 48
        %v1110 = vpop.permute.xlu0 %1109
        %v1112 = vadd.f32 %v1108, %v1110
        %1113 = vrot.lane.b32.xlu0 %v1014, 32
        %v1114 = vpop.permute.xlu0 %1113
        %v1116 = vadd.f32 %v1112, %v1114
        %1117 = vrot.lane.b32.xlu0 %v1014, 16
        %v1118 = vpop.permute.xlu0 %1117
        %v1120 = vadd.f32 %v1116, %v1118
        %v1121 = vrsqrt.pop %v1120
        %v1122 = vmul.f32 %v1120, %v1121
        %vm1123 = vcmp.eq.f32.partialorder %v1120, inf
        %v1124 = vsel %vm1123, %v1120, %v1122
        %vm1125 = vcmp.eq.f32.partialorder %v1120, 0.0
        %v1126 = vand.u32 %v1120, 2147483648
        %v1127 = vsel %vm1125, %v1126, %v1124
        %v1128 = vsub.f32 %v1127, 1.0
        %v1129 = vand.u32 2147483647, %v1128
        %v1130 = vsel %vm574, %v1129, 0.0
        %1131 = vadd.xlane.f32.xlu0 %v1130
        %v1132 = vpop.xlane.xlu0 %1131
        %v1133 = vrot.slane %v1132, 4
        %v1134 = vadd.f32 %v1132, %v1133
        %v1135 = vrot.slane %v1134, 2
        %v1136 = vadd.f32 %v1134, %v1135
        %v1137 = vrot.slane %v1136, 1
        %v1138 = vadd.f32 %v1136, %v1137
        %s1139 = vtos %v1138
        %v1140 = vrsqrt.pop %v1082
        %vm1141 = vcmask 64512
        %v1143 = vsel %vm1141, %v1140, 0
        %1145 = vmatprep.subr.mxu0 0.0
        %1146 = vmatpush1.msra.mxu0 %v567
        %1147 = vmatprep.subr.mxu0 0.0
        %1148 = vmatpush1.msra.mxu0 0.0
        %1149 = vmatprep.subr.mxu0 0.0
        %1150 = vmatpush1.msra.mxu0 0.0
        %1151 = vmatprep.subr.mxu0 0.0
        %1152 = vmatpush1.msra.mxu0 0.0
        %1153 = vmatprep.subr.mxu0 0.0
        %1154 = vmatpush1.msra.mxu0 0.0
        %1155 = vmatprep.subr.mxu0 0.0
        %1156 = vmatpush1.msra.mxu0 0.0
        %1157 = vmatprep.subr.mxu0 0.0
        %1158 = vmatpush1.msra.mxu0 0.0
        %1159 = vmatprep.subr.mxu0 0.0
        %1160 = vmatpush1.msra.mxu0 0.0
        %1161 = vmatprep.subr.mxu0 0.0
        %1162 = vmatpush1.msra.mxu0 0.0
        %1163 = vmatprep.subr.mxu0 0.0
        %1164 = vmatpush1.msra.mxu0 0.0
        %1165 = vmatprep.subr.mxu0 0.0
        %1166 = vmatpush1.msra.mxu0 0.0
        %1167 = vmatprep.subr.mxu0 0.0
        %1168 = vmatpush1.msra.mxu0 0.0
        %1169 = vmatprep.subr.mxu0 0.0
        %1170 = vmatpush1.msra.mxu0 0.0
        %1171 = vmatprep.subr.mxu0 0.0
        %1172 = vmatpush1.msra.mxu0 0.0
        %1173 = vmatprep.subr.mxu0 0.0
        %1174 = vmatpush1.msra.mxu0 0.0
        %1175 = vmatprep.subr.mxu0 0.0
        %1176 = vmatpush1.msra.mxu0 0.0
        %1177 = vmatprep.subr.mxu0 0.0
        %1178 = vmatpush1.msra.mxu0 0.0
        %1179 = vmatprep.subr.mxu0 0.0
        %1180 = vmatpush1.msra.mxu0 0.0
        %1181 = vmatprep.subr.mxu0 0.0
        %1182 = vmatpush1.msra.mxu0 0.0
        %1183 = vmatprep.subr.mxu0 0.0
        %1184 = vmatpush1.msra.mxu0 0.0
        %1185 = vmatprep.subr.mxu0 0.0
        %1186 = vmatpush1.msra.mxu0 0.0
        %1187 = vmatprep.subr.mxu0 0.0
        %1188 = vmatpush1.msra.mxu0 0.0
        %1189 = vmatprep.subr.mxu0 0.0
        %1190 = vmatpush1.msra.mxu0 0.0
        %1191 = vmatprep.subr.mxu0 0.0
        %1192 = vmatpush1.msra.mxu0 0.0
        %1193 = vmatprep.subr.mxu0 0.0
        %1194 = vmatpush1.msra.mxu0 0.0
        %1195 = vmatprep.subr.mxu0 0.0
        %1196 = vmatpush1.msra.mxu0 0.0
        %1197 = vmatprep.subr.mxu0 0.0
        %1198 = vmatpush1.msra.mxu0 0.0
        %1199 = vmatprep.subr.mxu0 0.0
        %1200 = vmatpush1.msra.mxu0 0.0
        %1201 = vmatprep.subr.mxu0 0.0
        %1202 = vmatpush1.msra.mxu0 0.0
        %1203 = vmatprep.subr.mxu0 0.0
        %1204 = vmatpush1.msra.mxu0 0.0
        %1205 = vmatprep.subr.mxu0 0.0
        %1206 = vmatpush1.msra.mxu0 0.0
        %1207 = vmatprep.subr.mxu0 0.0
        %1208 = vmatpush1.msra.mxu0 0.0
        %1209 = vmatprep.mubr.f32.mxu0 0.0
        %1210 = vmatmul.mubr.f32.gmra.mrb[0].mxu0 %v1143
        %v1211 = vpop.f32.mrb[0].mxu0
        %v1212 = vadd.f32 0.0, %v1211
        %v1213 = vpop.f32.mrb[0].mxu0
        %1214 = vdwg.mxu0
        %v1215 = vmul.f32 %v801, %v1212
        %1216 = vrot.lane.b32.xlu0 %v1215, 16
        %v1217 = vpop.permute.xlu0 %1216
        %v1218 = vmul.f32 %v1215, %v1217
        %1219 = vmatprep.subr.mxu0 0.0
        %1220 = vmatpush1.msra.mxu0 %v544
        %1221 = vmatprep.subr.mxu0 0.0
        %1222 = vmatpush1.msra.mxu0 %v545
        %1223 = vmatprep.subr.mxu0 0.0
        %1224 = vmatpush1.msra.mxu0 %v546
        %1225 = vmatprep.subr.mxu0 0.0
        %1226 = vmatpush1.msra.mxu0 %v547
        %1227 = vmatprep.subr.mxu0 0.0
        %1228 = vmatpush1.msra.mxu0 %v548
        %1229 = vmatprep.subr.mxu0 0.0
        %1230 = vmatpush1.msra.mxu0 %v549
        %1231 = vmatprep.subr.mxu0 0.0
        %1232 = vmatpush1.msra.mxu0 %v550
        %1233 = vmatprep.subr.mxu0 0.0
        %1234 = vmatpush1.msra.mxu0 %v551
        %1235 = vmatprep.subr.mxu0 0.0
        %1236 = vmatpush1.msra.mxu0 %v552
        %1237 = vmatprep.subr.mxu0 0.0
        %1238 = vmatpush1.msra.mxu0 %v553
        %1239 = vmatprep.subr.mxu0 0.0
        %1240 = vmatpush1.msra.mxu0 %v554
        %1241 = vmatprep.subr.mxu0 0.0
        %1242 = vmatpush1.msra.mxu0 %v555
        %1243 = vmatprep.subr.mxu0 0.0
        %1244 = vmatpush1.msra.mxu0 %v556
        %1245 = vmatprep.subr.mxu0 0.0
        %1246 = vmatpush1.msra.mxu0 %v557
        %1247 = vmatprep.subr.mxu0 0.0
        %1248 = vmatpush1.msra.mxu0 %v558
        %1249 = vmatprep.subr.mxu0 0.0
        %1250 = vmatpush1.msra.mxu0 %v559
        %1251 = vmatprep.subr.mxu0 0.0
        %1252 = vmatpush1.msra.mxu0 0.0
        %1253 = vmatprep.subr.mxu0 0.0
        %1254 = vmatpush1.msra.mxu0 0.0
        %1255 = vmatprep.subr.mxu0 0.0
        %1256 = vmatpush1.msra.mxu0 0.0
        %1257 = vmatprep.subr.mxu0 0.0
        %1258 = vmatpush1.msra.mxu0 0.0
        %1259 = vmatprep.subr.mxu0 0.0
        %1260 = vmatpush1.msra.mxu0 0.0
        %1261 = vmatprep.subr.mxu0 0.0
        %1262 = vmatpush1.msra.mxu0 0.0
        %1263 = vmatprep.subr.mxu0 0.0
        %1264 = vmatpush1.msra.mxu0 0.0
        %1265 = vmatprep.subr.mxu0 0.0
        %1266 = vmatpush1.msra.mxu0 0.0
        %1267 = vmatprep.subr.mxu0 0.0
        %1268 = vmatpush1.msra.mxu0 0.0
        %1269 = vmatprep.subr.mxu0 0.0
        %1270 = vmatpush1.msra.mxu0 0.0
        %1271 = vmatprep.subr.mxu0 0.0
        %1272 = vmatpush1.msra.mxu0 0.0
        %1273 = vmatprep.subr.mxu0 0.0
        %1274 = vmatpush1.msra.mxu0 0.0
        %1275 = vmatprep.subr.mxu0 0.0
        %1276 = vmatpush1.msra.mxu0 0.0
        %1277 = vmatprep.subr.mxu0 0.0
        %1278 = vmatpush1.msra.mxu0 0.0
        %1279 = vmatprep.subr.mxu0 0.0
        %1280 = vmatpush1.msra.mxu0 0.0
        %1281 = vmatprep.subr.mxu0 0.0
        %1282 = vmatpush1.msra.mxu0 0.0
        %1283 = vmatprep.mubr.f32.mxu0 0.0
        %1284 = vmatmul.mubr.f32.gmra.mrb[0].mxu0 %v1218
        %v1285 = vpop.f32.mrb[0].mxu0
        %v1286 = vadd.f32 0.0, %v1285
        %v1287 = vpop.f32.mrb[0].mxu0
        %1288 = vdwg.mxu0
        %v1289 = vand.u32 2147483647, %v1286
        %v1290 = vsel %vm1141, %v1289, 0.0
        %1291 = vadd.xlane.f32.xlu0 %v1290
        %v1292 = vpop.xlane.xlu0 %1291
        %v1293 = vrot.slane %v1292, 4
        %v1294 = vadd.f32 %v1292, %v1293
        %v1295 = vrot.slane %v1294, 2
        %v1296 = vadd.f32 %v1294, %v1295
        %v1297 = vrot.slane %v1296, 1
        %v1298 = vadd.f32 %v1296, %v1297
        %s1299 = vtos %v1298
        %s1300 = sadd.f32 %s1299, 0.0
        %1301 = vrot.lane.b32.xlu0 %v1215, 32
        %v1302 = vpop.permute.xlu0 %1301
        %v1303 = vmul.f32 %v1215, %v1302
        %1304 = vmatprep.subr.mxu0 0.0
        %1305 = vmatpush1.msra.mxu0 %v544
        %1306 = vmatprep.subr.mxu0 0.0
        %1307 = vmatpush1.msra.mxu0 %v545
        %1308 = vmatprep.subr.mxu0 0.0
        %1309 = vmatpush1.msra.mxu0 %v546
        %1310 = vmatprep.subr.mxu0 0.0
        %1311 = vmatpush1.msra.mxu0 %v547
        %1312 = vmatprep.subr.mxu0 0.0
        %1313 = vmatpush1.msra.mxu0 %v548
        %1314 = vmatprep.subr.mxu0 0.0
        %1315 = vmatpush1.msra.mxu0 %v549
        %1316 = vmatprep.subr.mxu0 0.0
        %1317 = vmatpush1.msra.mxu0 %v550
        %1318 = vmatprep.subr.mxu0 0.0
        %1319 = vmatpush1.msra.mxu0 %v551
        %1320 = vmatprep.subr.mxu0 0.0
        %1321 = vmatpush1.msra.mxu0 %v552
        %1322 = vmatprep.subr.mxu0 0.0
        %1323 = vmatpush1.msra.mxu0 %v553
        %1324 = vmatprep.subr.mxu0 0.0
        %1325 = vmatpush1.msra.mxu0 %v554
        %1326 = vmatprep.subr.mxu0 0.0
        %1327 = vmatpush1.msra.mxu0 %v555
        %1328 = vmatprep.subr.mxu0 0.0
        %1329 = vmatpush1.msra.mxu0 %v556
        %1330 = vmatprep.subr.mxu0 0.0
        %1331 = vmatpush1.msra.mxu0 %v557
        %1332 = vmatprep.subr.mxu0 0.0
        %1333 = vmatpush1.msra.mxu0 %v558
        %1334 = vmatprep.subr.mxu0 0.0
        %1335 = vmatpush1.msra.mxu0 %v559
        %1336 = vmatprep.subr.mxu0 0.0
        %1337 = vmatpush1.msra.mxu0 0.0
        %1338 = vmatprep.subr.mxu0 0.0
        %1339 = vmatpush1.msra.mxu0 0.0
        %1340 = vmatprep.subr.mxu0 0.0
        %1341 = vmatpush1.msra.mxu0 0.0
        %1342 = vmatprep.subr.mxu0 0.0
        %1343 = vmatpush1.msra.mxu0 0.0
        %1344 = vmatprep.subr.mxu0 0.0
        %1345 = vmatpush1.msra.mxu0 0.0
        %1346 = vmatprep.subr.mxu0 0.0
        %1347 = vmatpush1.msra.mxu0 0.0
        %1348 = vmatprep.subr.mxu0 0.0
        %1349 = vmatpush1.msra.mxu0 0.0
        %1350 = vmatprep.subr.mxu0 0.0
        %1351 = vmatpush1.msra.mxu0 0.0
        %1352 = vmatprep.subr.mxu0 0.0
        %1353 = vmatpush1.msra.mxu0 0.0
        %1354 = vmatprep.subr.mxu0 0.0
        %1355 = vmatpush1.msra.mxu0 0.0
        %1356 = vmatprep.subr.mxu0 0.0
        %1357 = vmatpush1.msra.mxu0 0.0
        %1358 = vmatprep.subr.mxu0 0.0
        %1359 = vmatpush1.msra.mxu0 0.0
        %1360 = vmatprep.subr.mxu0 0.0
        %1361 = vmatpush1.msra.mxu0 0.0
        %1362 = vmatprep.subr.mxu0 0.0
        %1363 = vmatpush1.msra.mxu0 0.0
        %1364 = vmatprep.subr.mxu0 0.0
        %1365 = vmatpush1.msra.mxu0 0.0
        %1366 = vmatprep.subr.mxu0 0.0
        %1367 = vmatpush1.msra.mxu0 0.0
        %1368 = vmatprep.mubr.f32.mxu0 0.0
        %1369 = vmatmul.mubr.f32.gmra.mrb[0].mxu0 %v1303
        %v1370 = vpop.f32.mrb[0].mxu0
        %v1371 = vadd.f32 0.0, %v1370
        %v1372 = vpop.f32.mrb[0].mxu0
        %1373 = vdwg.mxu0
        %v1374 = vand.u32 2147483647, %v1371
        %v1375 = vsel %vm1141, %v1374, 0.0
        %1376 = vadd.xlane.f32.xlu0 %v1375
        %v1377 = vpop.xlane.xlu0 %1376
        %v1378 = vrot.slane %v1377, 4
        %v1379 = vadd.f32 %v1377, %v1378
        %v1380 = vrot.slane %v1379, 2
        %v1381 = vadd.f32 %v1379, %v1380
        %v1382 = vrot.slane %v1381, 1
        %v1383 = vadd.f32 %v1381, %v1382
        %s1384 = vtos %v1383
        %s1385 = sadd.f32 %s1300, %s1384
        %1386 = vrot.lane.b32.xlu0 %v1215, 48
        %v1387 = vpop.permute.xlu0 %1386
        %v1388 = vmul.f32 %v1215, %v1387
        %1389 = vmatprep.subr.mxu0 0.0
        %1390 = vmatpush1.msra.mxu0 %v544
        %1391 = vmatprep.subr.mxu0 0.0
        %1392 = vmatpush1.msra.mxu0 %v545
        %1393 = vmatprep.subr.mxu0 0.0
        %1394 = vmatpush1.msra.mxu0 %v546
        %1395 = vmatprep.subr.mxu0 0.0
        %1396 = vmatpush1.msra.mxu0 %v547
        %1397 = vmatprep.subr.mxu0 0.0
        %1398 = vmatpush1.msra.mxu0 %v548
        %1399 = vmatprep.subr.mxu0 0.0
        %1400 = vmatpush1.msra.mxu0 %v549
        %1401 = vmatprep.subr.mxu0 0.0
        %1402 = vmatpush1.msra.mxu0 %v550
        %1403 = vmatprep.subr.mxu0 0.0
        %1404 = vmatpush1.msra.mxu0 %v551
        %1405 = vmatprep.subr.mxu0 0.0
        %1406 = vmatpush1.msra.mxu0 %v552
        %1407 = vmatprep.subr.mxu0 0.0
        %1408 = vmatpush1.msra.mxu0 %v553
        %1409 = vmatprep.subr.mxu0 0.0
        %1410 = vmatpush1.msra.mxu0 %v554
        %1411 = vmatprep.subr.mxu0 0.0
        %1412 = vmatpush1.msra.mxu0 %v555
        %1413 = vmatprep.subr.mxu0 0.0
        %1414 = vmatpush1.msra.mxu0 %v556
        %1415 = vmatprep.subr.mxu0 0.0
        %1416 = vmatpush1.msra.mxu0 %v557
        %1417 = vmatprep.subr.mxu0 0.0
        %1418 = vmatpush1.msra.mxu0 %v558
        %1419 = vmatprep.subr.mxu0 0.0
        %1420 = vmatpush1.msra.mxu0 %v559
        %1421 = vmatprep.subr.mxu0 0.0
        %1422 = vmatpush1.msra.mxu0 0.0
        %1423 = vmatprep.subr.mxu0 0.0
        %1424 = vmatpush1.msra.mxu0 0.0
        %1425 = vmatprep.subr.mxu0 0.0
        %1426 = vmatpush1.msra.mxu0 0.0
        %1427 = vmatprep.subr.mxu0 0.0
        %1428 = vmatpush1.msra.mxu0 0.0
        %1429 = vmatprep.subr.mxu0 0.0
        %1430 = vmatpush1.msra.mxu0 0.0
        %1431 = vmatprep.subr.mxu0 0.0
        %1432 = vmatpush1.msra.mxu0 0.0
        %1433 = vmatprep.subr.mxu0 0.0
        %1434 = vmatpush1.msra.mxu0 0.0
        %1435 = vmatprep.subr.mxu0 0.0
        %1436 = vmatpush1.msra.mxu0 0.0
        %1437 = vmatprep.subr.mxu0 0.0
        %1438 = vmatpush1.msra.mxu0 0.0
        %1439 = vmatprep.subr.mxu0 0.0
        %1440 = vmatpush1.msra.mxu0 0.0
        %1441 = vmatprep.subr.mxu0 0.0
        %1442 = vmatpush1.msra.mxu0 0.0
        %1443 = vmatprep.subr.mxu0 0.0
        %1444 = vmatpush1.msra.mxu0 0.0
        %1445 = vmatprep.subr.mxu0 0.0
        %1446 = vmatpush1.msra.mxu0 0.0
        %1447 = vmatprep.subr.mxu0 0.0
        %1448 = vmatpush1.msra.mxu0 0.0
        %1449 = vmatprep.subr.mxu0 0.0
        %1450 = vmatpush1.msra.mxu0 0.0
        %1451 = vmatprep.subr.mxu0 0.0
        %1452 = vmatpush1.msra.mxu0 0.0
        %1453 = vmatprep.mubr.f32.mxu0 0.0
        %1454 = vmatmul.mubr.f32.gmra.mrb[0].mxu0 %v1388
        %v1455 = vpop.f32.mrb[0].mxu0
        %v1456 = vadd.f32 0.0, %v1455
        %v1457 = vpop.f32.mrb[0].mxu0
        %1458 = vdwg.mxu0
        %v1459 = vand.u32 2147483647, %v1456
        %v1460 = vsel %vm1141, %v1459, 0.0
        %1461 = vadd.xlane.f32.xlu0 %v1460
        %v1462 = vpop.xlane.xlu0 %1461
        %v1463 = vrot.slane %v1462, 4
        %v1464 = vadd.f32 %v1462, %v1463
        %v1465 = vrot.slane %v1464, 2
        %v1466 = vadd.f32 %v1464, %v1465
        %v1467 = vrot.slane %v1466, 1
        %v1468 = vadd.f32 %v1466, %v1467
        %s1469 = vtos %v1468
        %s1470 = sadd.f32 %s1385, %s1469
        %1471 = vrot.lane.b32.xlu0 %v1215, 64
        %v1472 = vpop.permute.xlu0 %1471
        %v1473 = vmul.f32 %v1215, %v1472
        %1474 = vmatprep.subr.mxu0 0.0
        %1475 = vmatpush1.msra.mxu0 %v544
        %1476 = vmatprep.subr.mxu0 0.0
        %1477 = vmatpush1.msra.mxu0 %v545
        %1478 = vmatprep.subr.mxu0 0.0
        %1479 = vmatpush1.msra.mxu0 %v546
        %1480 = vmatprep.subr.mxu0 0.0
        %1481 = vmatpush1.msra.mxu0 %v547
        %1482 = vmatprep.subr.mxu0 0.0
        %1483 = vmatpush1.msra.mxu0 %v548
        %1484 = vmatprep.subr.mxu0 0.0
        %1485 = vmatpush1.msra.mxu0 %v549
        %1486 = vmatprep.subr.mxu0 0.0
        %1487 = vmatpush1.msra.mxu0 %v550
        %1488 = vmatprep.subr.mxu0 0.0
        %1489 = vmatpush1.msra.mxu0 %v551
        %1490 = vmatprep.subr.mxu0 0.0
        %1491 = vmatpush1.msra.mxu0 %v552
        %1492 = vmatprep.subr.mxu0 0.0
        %1493 = vmatpush1.msra.mxu0 %v553
        %1494 = vmatprep.subr.mxu0 0.0
        %1495 = vmatpush1.msra.mxu0 %v554
        %1496 = vmatprep.subr.mxu0 0.0
        %1497 = vmatpush1.msra.mxu0 %v555
        %1498 = vmatprep.subr.mxu0 0.0
        %1499 = vmatpush1.msra.mxu0 %v556
        %1500 = vmatprep.subr.mxu0 0.0
        %1501 = vmatpush1.msra.mxu0 %v557
        %1502 = vmatprep.subr.mxu0 0.0
        %1503 = vmatpush1.msra.mxu0 %v558
        %1504 = vmatprep.subr.mxu0 0.0
        %1505 = vmatpush1.msra.mxu0 %v559
        %1506 = vmatprep.subr.mxu0 0.0
        %1507 = vmatpush1.msra.mxu0 0.0
        %1508 = vmatprep.subr.mxu0 0.0
        %1509 = vmatpush1.msra.mxu0 0.0
        %1510 = vmatprep.subr.mxu0 0.0
        %1511 = vmatpush1.msra.mxu0 0.0
        %1512 = vmatprep.subr.mxu0 0.0
        %1513 = vmatpush1.msra.mxu0 0.0
        %1514 = vmatprep.subr.mxu0 0.0
        %1515 = vmatpush1.msra.mxu0 0.0
        %1516 = vmatprep.subr.mxu0 0.0
        %1517 = vmatpush1.msra.mxu0 0.0
        %1518 = vmatprep.subr.mxu0 0.0
        %1519 = vmatpush1.msra.mxu0 0.0
        %1520 = vmatprep.subr.mxu0 0.0
        %1521 = vmatpush1.msra.mxu0 0.0
        %1522 = vmatprep.subr.mxu0 0.0
        %1523 = vmatpush1.msra.mxu0 0.0
        %1524 = vmatprep.subr.mxu0 0.0
        %1525 = vmatpush1.msra.mxu0 0.0
        %1526 = vmatprep.subr.mxu0 0.0
        %1527 = vmatpush1.msra.mxu0 0.0
        %1528 = vmatprep.subr.mxu0 0.0
        %1529 = vmatpush1.msra.mxu0 0.0
        %1530 = vmatprep.subr.mxu0 0.0
        %1531 = vmatpush1.msra.mxu0 0.0
        %1532 = vmatprep.subr.mxu0 0.0
        %1533 = vmatpush1.msra.mxu0 0.0
        %1534 = vmatprep.subr.mxu0 0.0
        %1535 = vmatpush1.msra.mxu0 0.0
        %1536 = vmatprep.subr.mxu0 0.0
        %1537 = vmatpush1.msra.mxu0 0.0
        %1538 = vmatprep.mubr.f32.mxu0 0.0
        %1539 = vmatmul.mubr.f32.gmra.mrb[0].mxu0 %v1473
        %v1540 = vpop.f32.mrb[0].mxu0
        %v1541 = vadd.f32 0.0, %v1540
        %v1542 = vpop.f32.mrb[0].mxu0
        %1543 = vdwg.mxu0
        %v1544 = vand.u32 2147483647, %v1541
        %v1545 = vsel %vm1141, %v1544, 0.0
        %1546 = vadd.xlane.f32.xlu0 %v1545
        %v1547 = vpop.xlane.xlu0 %1546
        %v1548 = vrot.slane %v1547, 4
        %v1549 = vadd.f32 %v1547, %v1548
        %v1550 = vrot.slane %v1549, 2
        %v1551 = vadd.f32 %v1549, %v1550
        %v1552 = vrot.slane %v1551, 1
        %v1553 = vadd.f32 %v1551, %v1552
        %s1554 = vtos %v1553
        %s1555 = sadd.f32 %s1470, %s1554
        %1556 = vrot.lane.b32.xlu0 %v1215, 80
        %v1557 = vpop.permute.xlu0 %1556
        %v1558 = vmul.f32 %v1215, %v1557
        %1559 = vmatprep.subr.mxu0 0.0
        %1560 = vmatpush1.msra.mxu0 %v544
        %1561 = vmatprep.subr.mxu0 0.0
        %1562 = vmatpush1.msra.mxu0 %v545
        %1563 = vmatprep.subr.mxu0 0.0
        %1564 = vmatpush1.msra.mxu0 %v546
        %1565 = vmatprep.subr.mxu0 0.0
        %1566 = vmatpush1.msra.mxu0 %v547
        %1567 = vmatprep.subr.mxu0 0.0
        %1568 = vmatpush1.msra.mxu0 %v548
        %1569 = vmatprep.subr.mxu0 0.0
        %1570 = vmatpush1.msra.mxu0 %v549
        %1571 = vmatprep.subr.mxu0 0.0
        %1572 = vmatpush1.msra.mxu0 %v550
        %1573 = vmatprep.subr.mxu0 0.0
        %1574 = vmatpush1.msra.mxu0 %v551
        %1575 = vmatprep.subr.mxu0 0.0
        %1576 = vmatpush1.msra.mxu0 %v552
        %1577 = vmatprep.subr.mxu0 0.0
        %1578 = vmatpush1.msra.mxu0 %v553
        %1579 = vmatprep.subr.mxu0 0.0
        %1580 = vmatpush1.msra.mxu0 %v554
        %1581 = vmatprep.subr.mxu0 0.0
        %1582 = vmatpush1.msra.mxu0 %v555
        %1583 = vmatprep.subr.mxu0 0.0
        %1584 = vmatpush1.msra.mxu0 %v556
        %1585 = vmatprep.subr.mxu0 0.0
        %1586 = vmatpush1.msra.mxu0 %v557
        %1587 = vmatprep.subr.mxu0 0.0
        %1588 = vmatpush1.msra.mxu0 %v558
        %1589 = vmatprep.subr.mxu0 0.0
        %1590 = vmatpush1.msra.mxu0 %v559
        %1591 = vmatprep.subr.mxu0 0.0
        %1592 = vmatpush1.msra.mxu0 0.0
        %1593 = vmatprep.subr.mxu0 0.0
        %1594 = vmatpush1.msra.mxu0 0.0
        %1595 = vmatprep.subr.mxu0 0.0
        %1596 = vmatpush1.msra.mxu0 0.0
        %1597 = vmatprep.subr.mxu0 0.0
        %1598 = vmatpush1.msra.mxu0 0.0
        %1599 = vmatprep.subr.mxu0 0.0
        %1600 = vmatpush1.msra.mxu0 0.0
        %1601 = vmatprep.subr.mxu0 0.0
        %1602 = vmatpush1.msra.mxu0 0.0
        %1603 = vmatprep.subr.mxu0 0.0
        %1604 = vmatpush1.msra.mxu0 0.0
        %1605 = vmatprep.subr.mxu0 0.0
        %1606 = vmatpush1.msra.mxu0 0.0
        %1607 = vmatprep.subr.mxu0 0.0
        %1608 = vmatpush1.msra.mxu0 0.0
        %1609 = vmatprep.subr.mxu0 0.0
        %1610 = vmatpush1.msra.mxu0 0.0
        %1611 = vmatprep.subr.mxu0 0.0
        %1612 = vmatpush1.msra.mxu0 0.0
        %1613 = vmatprep.subr.mxu0 0.0
        %1614 = vmatpush1.msra.mxu0 0.0
        %1615 = vmatprep.subr.mxu0 0.0
        %1616 = vmatpush1.msra.mxu0 0.0
        %1617 = vmatprep.subr.mxu0 0.0
        %1618 = vmatpush1.msra.mxu0 0.0
        %1619 = vmatprep.subr.mxu0 0.0
        %1620 = vmatpush1.msra.mxu0 0.0
        %1621 = vmatprep.subr.mxu0 0.0
        %1622 = vmatpush1.msra.mxu0 0.0
        %1623 = vmatprep.mubr.f32.mxu0 0.0
        %1624 = vmatmul.mubr.f32.gmra.mrb[0].mxu0 %v1558
        %v1625 = vpop.f32.mrb[0].mxu0
        %v1626 = vadd.f32 0.0, %v1625
        %v1627 = vpop.f32.mrb[0].mxu0
        %1628 = vdwg.mxu0
        %v1629 = vand.u32 2147483647, %v1626
        %v1630 = vsel %vm1141, %v1629, 0.0
        %1631 = vadd.xlane.f32.xlu0 %v1630
        %v1632 = vpop.xlane.xlu0 %1631
        %v1633 = vrot.slane %v1632, 4
        %v1634 = vadd.f32 %v1632, %v1633
        %v1635 = vrot.slane %v1634, 2
        %v1636 = vadd.f32 %v1634, %v1635
        %v1637 = vrot.slane %v1636, 1
        %v1638 = vadd.f32 %v1636, %v1637
        %s1639 = vtos %v1638
        %s1640 = sadd.f32 %s1555, %s1639
        %1641 = vrot.lane.b32.xlu0 %v1215, 96
        %v1642 = vpop.permute.xlu0 %1641
        %v1643 = vmul.f32 %v1215, %v1642
        %1644 = vmatprep.subr.mxu0 0.0
        %1645 = vmatpush1.msra.mxu0 %v544
        %1646 = vmatprep.subr.mxu0 0.0
        %1647 = vmatpush1.msra.mxu0 %v545
        %1648 = vmatprep.subr.mxu0 0.0
        %1649 = vmatpush1.msra.mxu0 %v546
        %1650 = vmatprep.subr.mxu0 0.0
        %1651 = vmatpush1.msra.mxu0 %v547
        %1652 = vmatprep.subr.mxu0 0.0
        %1653 = vmatpush1.msra.mxu0 %v548
        %1654 = vmatprep.subr.mxu0 0.0
        %1655 = vmatpush1.msra.mxu0 %v549
        %1656 = vmatprep.subr.mxu0 0.0
        %1657 = vmatpush1.msra.mxu0 %v550
        %1658 = vmatprep.subr.mxu0 0.0
        %1659 = vmatpush1.msra.mxu0 %v551
        %1660 = vmatprep.subr.mxu0 0.0
        %1661 = vmatpush1.msra.mxu0 %v552
        %1662 = vmatprep.subr.mxu0 0.0
        %1663 = vmatpush1.msra.mxu0 %v553
        %1664 = vmatprep.subr.mxu0 0.0
        %1665 = vmatpush1.msra.mxu0 %v554
        %1666 = vmatprep.subr.mxu0 0.0
        %1667 = vmatpush1.msra.mxu0 %v555
        %1668 = vmatprep.subr.mxu0 0.0
        %1669 = vmatpush1.msra.mxu0 %v556
        %1670 = vmatprep.subr.mxu0 0.0
        %1671 = vmatpush1.msra.mxu0 %v557
        %1672 = vmatprep.subr.mxu0 0.0
        %1673 = vmatpush1.msra.mxu0 %v558
        %1674 = vmatprep.subr.mxu0 0.0
        %1675 = vmatpush1.msra.mxu0 %v559
        %1676 = vmatprep.subr.mxu0 0.0
        %1677 = vmatpush1.msra.mxu0 0.0
        %1678 = vmatprep.subr.mxu0 0.0
        %1679 = vmatpush1.msra.mxu0 0.0
        %1680 = vmatprep.subr.mxu0 0.0
        %1681 = vmatpush1.msra.mxu0 0.0
        %1682 = vmatprep.subr.mxu0 0.0
        %1683 = vmatpush1.msra.mxu0 0.0
        %1684 = vmatprep.subr.mxu0 0.0
        %1685 = vmatpush1.msra.mxu0 0.0
        %1686 = vmatprep.subr.mxu0 0.0
        %1687 = vmatpush1.msra.mxu0 0.0
        %1688 = vmatprep.subr.mxu0 0.0
        %1689 = vmatpush1.msra.mxu0 0.0
        %1690 = vmatprep.subr.mxu0 0.0
        %1691 = vmatpush1.msra.mxu0 0.0
        %1692 = vmatprep.subr.mxu0 0.0
        %1693 = vmatpush1.msra.mxu0 0.0
        %1694 = vmatprep.subr.mxu0 0.0
        %1695 = vmatpush1.msra.mxu0 0.0
        %1696 = vmatprep.subr.mxu0 0.0
        %1697 = vmatpush1.msra.mxu0 0.0
        %1698 = vmatprep.subr.mxu0 0.0
        %1699 = vmatpush1.msra.mxu0 0.0
        %1700 = vmatprep.subr.mxu0 0.0
        %1701 = vmatpush1.msra.mxu0 0.0
        %1702 = vmatprep.subr.mxu0 0.0
        %1703 = vmatpush1.msra.mxu0 0.0
        %1704 = vmatprep.subr.mxu0 0.0
        %1705 = vmatpush1.msra.mxu0 0.0
        %1706 = vmatprep.subr.mxu0 0.0
        %1707 = vmatpush1.msra.mxu0 0.0
        %1708 = vmatprep.mubr.f32.mxu0 0.0
        %1709 = vmatmul.mubr.f32.gmra.mrb[0].mxu0 %v1643
        %v1710 = vpop.f32.mrb[0].mxu0
        %v1711 = vadd.f32 0.0, %v1710
        %v1712 = vpop.f32.mrb[0].mxu0
        %1713 = vdwg.mxu0
        %v1714 = vand.u32 2147483647, %v1711
        %v1715 = vsel %vm1141, %v1714, 0.0
        %1716 = vadd.xlane.f32.xlu0 %v1715
        %v1717 = vpop.xlane.xlu0 %1716
        %v1718 = vrot.slane %v1717, 4
        %v1719 = vadd.f32 %v1717, %v1718
        %v1720 = vrot.slane %v1719, 2
        %v1721 = vadd.f32 %v1719, %v1720
        %v1722 = vrot.slane %v1721, 1
        %v1723 = vadd.f32 %v1721, %v1722
        %s1724 = vtos %v1723
        %s1725 = sadd.f32 %s1640, %s1724
        %1726 = vrot.lane.b32.xlu0 %v1215, 112
        %v1727 = vpop.permute.xlu0 %1726
        %v1728 = vmul.f32 %v1215, %v1727
        %1729 = vmatprep.subr.mxu0 0.0
        %1730 = vmatpush1.msra.mxu0 %v544
        %1731 = vmatprep.subr.mxu0 0.0
        %1732 = vmatpush1.msra.mxu0 %v545
        %1733 = vmatprep.subr.mxu0 0.0
        %1734 = vmatpush1.msra.mxu0 %v546
        %1735 = vmatprep.subr.mxu0 0.0
        %1736 = vmatpush1.msra.mxu0 %v547
        %1737 = vmatprep.subr.mxu0 0.0
        %1738 = vmatpush1.msra.mxu0 %v548
        %1739 = vmatprep.subr.mxu0 0.0
        %1740 = vmatpush1.msra.mxu0 %v549
        %1741 = vmatprep.subr.mxu0 0.0
        %1742 = vmatpush1.msra.mxu0 %v550
        %1743 = vmatprep.subr.mxu0 0.0
        %1744 = vmatpush1.msra.mxu0 %v551
        %1745 = vmatprep.subr.mxu0 0.0
        %1746 = vmatpush1.msra.mxu0 %v552
        %1747 = vmatprep.subr.mxu0 0.0
        %1748 = vmatpush1.msra.mxu0 %v553
        %1749 = vmatprep.subr.mxu0 0.0
        %1750 = vmatpush1.msra.mxu0 %v554
        %1751 = vmatprep.subr.mxu0 0.0
        %1752 = vmatpush1.msra.mxu0 %v555
        %1753 = vmatprep.subr.mxu0 0.0
        %1754 = vmatpush1.msra.mxu0 %v556
        %1755 = vmatprep.subr.mxu0 0.0
        %1756 = vmatpush1.msra.mxu0 %v557
        %1757 = vmatprep.subr.mxu0 0.0
        %1758 = vmatpush1.msra.mxu0 %v558
        %1759 = vmatprep.subr.mxu0 0.0
        %1760 = vmatpush1.msra.mxu0 %v559
        %1761 = vmatprep.subr.mxu0 0.0
        %1762 = vmatpush1.msra.mxu0 0.0
        %1763 = vmatprep.subr.mxu0 0.0
        %1764 = vmatpush1.msra.mxu0 0.0
        %1765 = vmatprep.subr.mxu0 0.0
        %1766 = vmatpush1.msra.mxu0 0.0
        %1767 = vmatprep.subr.mxu0 0.0
        %1768 = vmatpush1.msra.mxu0 0.0
        %1769 = vmatprep.subr.mxu0 0.0
        %1770 = vmatpush1.msra.mxu0 0.0
        %1771 = vmatprep.subr.mxu0 0.0
        %1772 = vmatpush1.msra.mxu0 0.0
        %1773 = vmatprep.subr.mxu0 0.0
        %1774 = vmatpush1.msra.mxu0 0.0
        %1775 = vmatprep.subr.mxu0 0.0
        %1776 = vmatpush1.msra.mxu0 0.0
        %1777 = vmatprep.subr.mxu0 0.0
        %1778 = vmatpush1.msra.mxu0 0.0
        %1779 = vmatprep.subr.mxu0 0.0
        %1780 = vmatpush1.msra.mxu0 0.0
        %1781 = vmatprep.subr.mxu0 0.0
        %1782 = vmatpush1.msra.mxu0 0.0
        %1783 = vmatprep.subr.mxu0 0.0
        %1784 = vmatpush1.msra.mxu0 0.0
        %1785 = vmatprep.subr.mxu0 0.0
        %1786 = vmatpush1.msra.mxu0 0.0
        %1787 = vmatprep.subr.mxu0 0.0
        %1788 = vmatpush1.msra.mxu0 0.0
        %1789 = vmatprep.subr.mxu0 0.0
        %1790 = vmatpush1.msra.mxu0 0.0
        %1791 = vmatprep.subr.mxu0 0.0
        %1792 = vmatpush1.msra.mxu0 0.0
        %1793 = vmatprep.mubr.f32.mxu0 0.0
        %1794 = vmatmul.mubr.f32.gmra.mrb[0].mxu0 %v1728
        %v1795 = vpop.f32.mrb[0].mxu0
        %v1796 = vadd.f32 0.0, %v1795
        %v1797 = vpop.f32.mrb[0].mxu0
        %1798 = vdwg.mxu0
        %v1799 = vand.u32 2147483647, %v1796
        %v1800 = vsel %vm1141, %v1799, 0.0
        %1801 = vadd.xlane.f32.xlu0 %v1800
        %v1802 = vpop.xlane.xlu0 %1801
        %v1803 = vrot.slane %v1802, 4
        %v1804 = vadd.f32 %v1802, %v1803
        %v1805 = vrot.slane %v1804, 2
        %v1806 = vadd.f32 %v1804, %v1805
        %v1807 = vrot.slane %v1806, 1
        %v1808 = vadd.f32 %v1806, %v1807
        %s1809 = vtos %v1808
        %s1810 = sadd.f32 %s1725, %s1809
        %v1811 = vmul.f32 %v443, 1.1
        %v1812 = vmul.f32 %v444, 0.1
        %v1813 = vsub.f32 %v1811, %v1812
        %v1814 = vmul.f32 %v444, 1.1
        %v1815 = vmul.f32 %v443, 0.1
        %v1816 = vsub.f32 %v1814, %v1815
        %v1817 = vmul.f32 %v801, 0.1
        %v1818 = vadd.f32 %v443, %v1817
        %v1819 = vsub.f32 %v443, %v1817
        %1821 = vrot.lane.b32.xlu0 %v1817, 112
        %v1822 = vpop.permute.xlu0 %1821
        %v1824 = vadd.f32 %v443, %v1822
        %v1825 = vsub.f32 %v443, %v1822
        %1826 = vrot.lane.b32.xlu0 %v1817, 96
        %v1827 = vpop.permute.xlu0 %1826
        %v1829 = vadd.f32 %v443, %v1827
        %v1830 = vsub.f32 %v443, %v1827
        %1831 = vrot.lane.b32.xlu0 %v1817, 80
        %v1832 = vpop.permute.xlu0 %1831
        %v1834 = vadd.f32 %v443, %v1832
        %v1835 = vsub.f32 %v443, %v1832
        %1836 = vrot.lane.b32.xlu0 %v1817, 64
        %v1837 = vpop.permute.xlu0 %1836
        %v1839 = vadd.f32 %v443, %v1837
        %v1840 = vsub.f32 %v443, %v1837
        %1841 = vrot.lane.b32.xlu0 %v1817, 48
        %v1842 = vpop.permute.xlu0 %1841
        %v1844 = vadd.f32 %v443, %v1842
        %v1845 = vsub.f32 %v443, %v1842
        %1846 = vrot.lane.b32.xlu0 %v1817, 32
        %v1847 = vpop.permute.xlu0 %1846
        %v1849 = vadd.f32 %v443, %v1847
        %v1850 = vsub.f32 %v443, %v1847
        %1851 = vrot.lane.b32.xlu0 %v1817, 16
        %v1852 = vpop.permute.xlu0 %1851
        %v1854 = vadd.f32 %v443, %v1852
        %v1855 = vsub.f32 %v443, %v1852
        %v1857 = vsel %vm574, %v444, 0
        %v1860 = vsel %vm574, %v1813, 0
        %v1863 = vsel %vm574, %v1816, 0
        %v1866 = vsel %vm574, %v1818, 0
        %v1869 = vsel %vm574, %v1819, 0
        %v1872 = vsel %vm574, %v1824, 0
        %v1875 = vsel %vm574, %v1825, 0
        %v1878 = vsel %vm574, %v1829, 0
        %v1881 = vsel %vm574, %v1830, 0
        %v1884 = vsel %vm574, %v1834, 0
        %v1887 = vsel %vm574, %v1835, 0
        %v1890 = vsel %vm574, %v1839, 0
        %v1893 = vsel %vm574, %v1840, 0
        %v1896 = vsel %vm574, %v1844, 0
        %v1899 = vsel %vm574, %v1845, 0
        %v1902 = vsel %vm574, %v1849, 0
        %v1905 = vsel %vm574, %v1850, 0
        %v1908 = vsel %vm574, %v1854, 0
        %v1911 = vsel %vm574, %v1855, 0
        %1913 = vmatprep.subr.mxu0 0.0
        %1914 = vmatpush1.msra.mxu0 %v446
        %1915 = vmatprep.subr.mxu0 0.0
        %1916 = vmatpush1.msra.mxu0 %v447
        %1917 = vmatprep.subr.mxu0 0.0
        %1918 = vmatpush1.msra.mxu0 0.0
        %1919 = vmatprep.subr.mxu0 0.0
        %1920 = vmatpush1.msra.mxu0 0.0
        %1921 = vmatprep.subr.mxu0 0.0
        %1922 = vmatpush1.msra.mxu0 0.0
        %1923 = vmatprep.subr.mxu0 0.0
        %1924 = vmatpush1.msra.mxu0 0.0
        %1925 = vmatprep.subr.mxu0 0.0
        %1926 = vmatpush1.msra.mxu0 0.0
        %1927 = vmatprep.subr.mxu0 0.0
        %1928 = vmatpush1.msra.mxu0 0.0
        %1929 = vmatprep.subr.mxu0 0.0
        %1930 = vmatpush1.msra.mxu0 0.0
        %1931 = vmatprep.subr.mxu0 0.0
        %1932 = vmatpush1.msra.mxu0 0.0
        %1933 = vmatprep.subr.mxu0 0.0
        %1934 = vmatpush1.msra.mxu0 0.0
        %1935 = vmatprep.subr.mxu0 0.0
        %1936 = vmatpush1.msra.mxu0 0.0
        %1937 = vmatprep.subr.mxu0 0.0
        %1938 = vmatpush1.msra.mxu0 0.0
        %1939 = vmatprep.subr.mxu0 0.0
        %1940 = vmatpush1.msra.mxu0 0.0
        %1941 = vmatprep.subr.mxu0 0.0
        %1942 = vmatpush1.msra.mxu0 0.0
        %1943 = vmatprep.subr.mxu0 0.0
        %1944 = vmatpush1.msra.mxu0 0.0
        %1945 = vmatprep.subr.mxu0 0.0
        %1946 = vmatpush1.msra.mxu0 0.0
        %1947 = vmatprep.subr.mxu0 0.0
        %1948 = vmatpush1.msra.mxu0 0.0
        %1949 = vmatprep.subr.mxu0 0.0
        %1950 = vmatpush1.msra.mxu0 0.0
        %1951 = vmatprep.subr.mxu0 0.0
        %1952 = vmatpush1.msra.mxu0 0.0
        %1953 = vmatprep.subr.mxu0 0.0
        %1954 = vmatpush1.msra.mxu0 0.0
        %1955 = vmatprep.subr.mxu0 0.0
        %1956 = vmatpush1.msra.mxu0 0.0
        %1957 = vmatprep.subr.mxu0 0.0
        %1958 = vmatpush1.msra.mxu0 0.0
        %1959 = vmatprep.subr.mxu0 0.0
        %1960 = vmatpush1.msra.mxu0 0.0
        %1961 = vmatprep.subr.mxu0 0.0
        %1962 = vmatpush1.msra.mxu0 0.0
        %1963 = vmatprep.subr.mxu0 0.0
        %1964 = vmatpush1.msra.mxu0 0.0
        %1965 = vmatprep.subr.mxu0 0.0
        %1966 = vmatpush1.msra.mxu0 0.0
        %1967 = vmatprep.subr.mxu0 0.0
        %1968 = vmatpush1.msra.mxu0 0.0
        %1969 = vmatprep.subr.mxu0 0.0
        %1970 = vmatpush1.msra.mxu0 0.0
        %1971 = vmatprep.subr.mxu0 0.0
        %1972 = vmatpush1.msra.mxu0 0.0
        %1973 = vmatprep.subr.mxu0 0.0
        %1974 = vmatpush1.msra.mxu0 0.0
        %1975 = vmatprep.subr.mxu0 0.0
        %1976 = vmatpush1.msra.mxu0 0.0
        %1977 = vmatprep.mubr.f32.mxu0 0.0
        %1978 = vmatmul.mubr.f32.gmra.mrb[0].mxu0 %v1857
        %v1979 = vpop.f32.mrb[0].mxu0
        %v1980 = vadd.f32 %v572, %v1979
        %v1981 = vpop.f32.mrb[0].mxu0
        %1982 = vmatprep.mubr.f32.mxu0 0.0
        %1983 = vmatmul.mubr.f32.gmra.mrb[0].mxu0 %v1860
        %v1984 = vpop.f32.mrb[0].mxu0
        %v1985 = vadd.f32 %v572, %v1984
        %v1986 = vpop.f32.mrb[0].mxu0
        %1987 = vmatprep.mubr.f32.mxu0 0.0
        %1988 = vmatmul.mubr.f32.gmra.mrb[0].mxu0 %v1863
        %v1989 = vpop.f32.mrb[0].mxu0
        %v1990 = vadd.f32 %v572, %v1989
        %v1991 = vpop.f32.mrb[0].mxu0
        %1992 = vmatprep.mubr.f32.mxu0 0.0
        %1993 = vmatmul.mubr.f32.gmra.mrb[0].mxu0 %v1866
        %v1994 = vpop.f32.mrb[0].mxu0
        %v1995 = vadd.f32 %v572, %v1994
        %v1996 = vpop.f32.mrb[0].mxu0
        %1997 = vmatprep.mubr.f32.mxu0 0.0
        %1998 = vmatmul.mubr.f32.gmra.mrb[0].mxu0 %v1869
        %v1999 = vpop.f32.mrb[0].mxu0
        %v2000 = vadd.f32 %v572, %v1999
        %v2001 = vpop.f32.mrb[0].mxu0
        %2002 = vmatprep.mubr.f32.mxu0 0.0
        %2003 = vmatmul.mubr.f32.gmra.mrb[0].mxu0 %v1872
        %v2004 = vpop.f32.mrb[0].mxu0
        %v2005 = vadd.f32 %v572, %v2004
        %v2006 = vpop.f32.mrb[0].mxu0
        %2007 = vmatprep.mubr.f32.mxu0 0.0
        %2008 = vmatmul.mubr.f32.gmra.mrb[0].mxu0 %v1875
        %v2009 = vpop.f32.mrb[0].mxu0
        %v2010 = vadd.f32 %v572, %v2009
        %v2011 = vpop.f32.mrb[0].mxu0
        %2012 = vmatprep.mubr.f32.mxu0 0.0
        %2013 = vmatmul.mubr.f32.gmra.mrb[0].mxu0 %v1878
        %v2014 = vpop.f32.mrb[0].mxu0
        %v2015 = vadd.f32 %v572, %v2014
        %v2016 = vpop.f32.mrb[0].mxu0
        %2017 = vmatprep.mubr.f32.mxu0 0.0
        %2018 = vmatmul.mubr.f32.gmra.mrb[0].mxu0 %v1881
        %v2019 = vpop.f32.mrb[0].mxu0
        %v2020 = vadd.f32 %v572, %v2019
        %v2021 = vpop.f32.mrb[0].mxu0
        %2022 = vmatprep.mubr.f32.mxu0 0.0
        %2023 = vmatmul.mubr.f32.gmra.mrb[0].mxu0 %v1884
        %v2024 = vpop.f32.mrb[0].mxu0
        %v2025 = vadd.f32 %v572, %v2024
        %v2026 = vpop.f32.mrb[0].mxu0
        %2027 = vmatprep.mubr.f32.mxu0 0.0
        %2028 = vmatmul.mubr.f32.gmra.mrb[0].mxu0 %v1887
        %v2029 = vpop.f32.mrb[0].mxu0
        %v2030 = vadd.f32 %v572, %v2029
        %v2031 = vpop.f32.mrb[0].mxu0
        %2032 = vmatprep.mubr.f32.mxu0 0.0
        %2033 = vmatmul.mubr.f32.gmra.mrb[0].mxu0 %v1890
        %v2034 = vpop.f32.mrb[0].mxu0
        %v2035 = vadd.f32 %v572, %v2034
        %v2036 = vpop.f32.mrb[0].mxu0
        %2037 = vmatprep.mubr.f32.mxu0 0.0
        %2038 = vmatmul.mubr.f32.gmra.mrb[0].mxu0 %v1893
        %v2039 = vpop.f32.mrb[0].mxu0
        %v2040 = vadd.f32 %v572, %v2039
        %v2041 = vpop.f32.mrb[0].mxu0
        %2042 = vmatprep.mubr.f32.mxu0 0.0
        %2043 = vmatmul.mubr.f32.gmra.mrb[0].mxu0 %v1896
        %v2044 = vpop.f32.mrb[0].mxu0
        %v2045 = vadd.f32 %v572, %v2044
        %v2046 = vpop.f32.mrb[0].mxu0
        %2047 = vmatprep.mubr.f32.mxu0 0.0
        %2048 = vmatmul.mubr.f32.gmra.mrb[0].mxu0 %v1899
        %v2049 = vpop.f32.mrb[0].mxu0
        %v2050 = vadd.f32 %v572, %v2049
        %v2051 = vpop.f32.mrb[0].mxu0
        %2052 = vmatprep.mubr.f32.mxu0 0.0
        %2053 = vmatmul.mubr.f32.gmra.mrb[0].mxu0 %v1902
        %v2054 = vpop.f32.mrb[0].mxu0
        %v2055 = vadd.f32 %v572, %v2054
        %v2056 = vpop.f32.mrb[0].mxu0
        %2057 = vmatprep.mubr.f32.mxu0 0.0
        %2058 = vmatmul.mubr.f32.gmra.mrb[0].mxu0 %v1905
        %v2059 = vpop.f32.mrb[0].mxu0
        %v2060 = vadd.f32 %v572, %v2059
        %v2061 = vpop.f32.mrb[0].mxu0
        %2062 = vmatprep.mubr.f32.mxu0 0.0
        %2063 = vmatmul.mubr.f32.gmra.mrb[0].mxu0 %v1908
        %v2064 = vpop.f32.mrb[0].mxu0
        %v2065 = vadd.f32 %v572, %v2064
        %v2066 = vpop.f32.mrb[0].mxu0
        %2067 = vmatprep.mubr.f32.mxu0 0.0
        %2068 = vmatmul.mubr.f32.gmra.mrb[0].mxu0 %v1911
        %v2069 = vpop.f32.mrb[0].mxu0
        %v2070 = vadd.f32 %v572, %v2069
        %v2071 = vpop.f32.mrb[0].mxu0
        %2072 = vdwg.mxu0
        %v2073 = vtanh.pop %v1980
        %v2074 = vtanh.pop %v1985
        %v2075 = vtanh.pop %v1990
        %v2076 = vtanh.pop %v1995
        %v2077 = vtanh.pop %v2000
        %v2078 = vtanh.pop %v2005
        %v2079 = vtanh.pop %v2010
        %v2080 = vtanh.pop %v2015
        %v2081 = vtanh.pop %v2020
        %v2082 = vtanh.pop %v2025
        %v2083 = vtanh.pop %v2030
        %v2084 = vtanh.pop %v2035
        %v2085 = vtanh.pop %v2040
        %v2086 = vtanh.pop %v2045
        %v2087 = vtanh.pop %v2050
        %v2088 = vtanh.pop %v2055
        %v2089 = vtanh.pop %v2060
        %v2090 = vtanh.pop %v2065
        %v2091 = vtanh.pop %v2070
        %v2093 = vsel %vm655, %v2073, 0
        %v2096 = vsel %vm655, %v2074, 0
        %v2099 = vsel %vm655, %v2075, 0
        %v2102 = vsel %vm655, %v2076, 0
        %v2105 = vsel %vm655, %v2077, 0
        %v2108 = vsel %vm655, %v2078, 0
        %v2111 = vsel %vm655, %v2079, 0
        %v2114 = vsel %vm655, %v2080, 0
        %v2117 = vsel %vm655, %v2081, 0
        %v2120 = vsel %vm655, %v2082, 0
        %v2123 = vsel %vm655, %v2083, 0
        %v2126 = vsel %vm655, %v2084, 0
        %v2129 = vsel %vm655, %v2085, 0
        %v2132 = vsel %vm655, %v2086, 0
        %v2135 = vsel %vm655, %v2087, 0
        %v2138 = vsel %vm655, %v2088, 0
        %v2141 = vsel %vm655, %v2089, 0
        %v2144 = vsel %vm655, %v2090, 0
        %v2147 = vsel %vm655, %v2091, 0
        %2149 = vmatprep.subr.mxu0 0.0
        %2150 = vmatpush1.msra.mxu0 %v449
        %2151 = vmatprep.subr.mxu0 0.0
        %2152 = vmatpush1.msra.mxu0 %v450
        %2153 = vmatprep.subr.mxu0 0.0
        %2154 = vmatpush1.msra.mxu0 %v451
        %2155 = vmatprep.subr.mxu0 0.0
        %2156 = vmatpush1.msra.mxu0 %v452
        %2157 = vmatprep.subr.mxu0 0.0
        %2158 = vmatpush1.msra.mxu0 0.0
        %2159 = vmatprep.subr.mxu0 0.0
        %2160 = vmatpush1.msra.mxu0 0.0
        %2161 = vmatprep.subr.mxu0 0.0
        %2162 = vmatpush1.msra.mxu0 0.0
        %2163 = vmatprep.subr.mxu0 0.0
        %2164 = vmatpush1.msra.mxu0 0.0
        %2165 = vmatprep.subr.mxu0 0.0
        %2166 = vmatpush1.msra.mxu0 0.0
        %2167 = vmatprep.subr.mxu0 0.0
        %2168 = vmatpush1.msra.mxu0 0.0
        %2169 = vmatprep.subr.mxu0 0.0
        %2170 = vmatpush1.msra.mxu0 0.0
        %2171 = vmatprep.subr.mxu0 0.0
        %2172 = vmatpush1.msra.mxu0 0.0
        %2173 = vmatprep.subr.mxu0 0.0
        %2174 = vmatpush1.msra.mxu0 0.0
        %2175 = vmatprep.subr.mxu0 0.0
        %2176 = vmatpush1.msra.mxu0 0.0
        %2177 = vmatprep.subr.mxu0 0.0
        %2178 = vmatpush1.msra.mxu0 0.0
        %2179 = vmatprep.subr.mxu0 0.0
        %2180 = vmatpush1.msra.mxu0 0.0
        %2181 = vmatprep.subr.mxu0 0.0
        %2182 = vmatpush1.msra.mxu0 0.0
        %2183 = vmatprep.subr.mxu0 0.0
        %2184 = vmatpush1.msra.mxu0 0.0
        %2185 = vmatprep.subr.mxu0 0.0
        %2186 = vmatpush1.msra.mxu0 0.0
        %2187 = vmatprep.subr.mxu0 0.0
        %2188 = vmatpush1.msra.mxu0 0.0
        %2189 = vmatprep.subr.mxu0 0.0
        %2190 = vmatpush1.msra.mxu0 0.0
        %2191 = vmatprep.subr.mxu0 0.0
        %2192 = vmatpush1.msra.mxu0 0.0
        %2193 = vmatprep.subr.mxu0 0.0
        %2194 = vmatpush1.msra.mxu0 0.0
        %2195 = vmatprep.subr.mxu0 0.0
        %2196 = vmatpush1.msra.mxu0 0.0
        %2197 = vmatprep.subr.mxu0 0.0
        %2198 = vmatpush1.msra.mxu0 0.0
        %2199 = vmatprep.subr.mxu0 0.0
        %2200 = vmatpush1.msra.mxu0 0.0
        %2201 = vmatprep.subr.mxu0 0.0
        %2202 = vmatpush1.msra.mxu0 0.0
        %2203 = vmatprep.subr.mxu0 0.0
        %2204 = vmatpush1.msra.mxu0 0.0
        %2205 = vmatprep.subr.mxu0 0.0
        %2206 = vmatpush1.msra.mxu0 0.0
        %2207 = vmatprep.subr.mxu0 0.0
        %2208 = vmatpush1.msra.mxu0 0.0
        %2209 = vmatprep.subr.mxu0 0.0
        %2210 = vmatpush1.msra.mxu0 0.0
        %2211 = vmatprep.subr.mxu0 0.0
        %2212 = vmatpush1.msra.mxu0 0.0
        %2213 = vmatprep.mubr.f32.mxu0 0.0
        %2214 = vmatmul.mubr.f32.gmra.mrb[0].mxu0 %v2093
        %v2215 = vpop.f32.mrb[0].mxu0
        %v2216 = vpop.f32.mrb[0].mxu0
        %2217 = vmatprep.mubr.f32.mxu0 0.0
        %2218 = vmatmul.mubr.f32.gmra.mrb[0].mxu0 %v2096
        %v2219 = vpop.f32.mrb[0].mxu0
        %v2220 = vadd.f32 %v653, %v2219
        %v2221 = vpop.f32.mrb[0].mxu0
        %2222 = vmatprep.mubr.f32.mxu0 0.0
        %2223 = vmatmul.mubr.f32.gmra.mrb[0].mxu0 %v2099
        %v2224 = vpop.f32.mrb[0].mxu0
        %v2225 = vadd.f32 %v653, %v2224
        %v2226 = vpop.f32.mrb[0].mxu0
        %2227 = vmatprep.mubr.f32.mxu0 0.0
        %2228 = vmatmul.mubr.f32.gmra.mrb[0].mxu0 %v2102
        %v2229 = vpop.f32.mrb[0].mxu0
        %v2230 = vadd.f32 %v653, %v2229
        %v2231 = vpop.f32.mrb[0].mxu0
        %2232 = vmatprep.mubr.f32.mxu0 0.0
        %2233 = vmatmul.mubr.f32.gmra.mrb[0].mxu0 %v2105
        %v2234 = vpop.f32.mrb[0].mxu0
        %v2235 = vadd.f32 %v653, %v2234
        %v2236 = vpop.f32.mrb[0].mxu0
        %2237 = vmatprep.mubr.f32.mxu0 0.0
        %2238 = vmatmul.mubr.f32.gmra.mrb[0].mxu0 %v2108
        %v2239 = vpop.f32.mrb[0].mxu0
        %v2240 = vadd.f32 %v653, %v2239
        %v2241 = vpop.f32.mrb[0].mxu0
        %2242 = vmatprep.mubr.f32.mxu0 0.0
        %2243 = vmatmul.mubr.f32.gmra.mrb[0].mxu0 %v2111
        %v2244 = vpop.f32.mrb[0].mxu0
        %v2245 = vadd.f32 %v653, %v2244
        %v2246 = vpop.f32.mrb[0].mxu0
        %2247 = vmatprep.mubr.f32.mxu0 0.0
        %2248 = vmatmul.mubr.f32.gmra.mrb[0].mxu0 %v2114
        %v2249 = vpop.f32.mrb[0].mxu0
        %v2250 = vadd.f32 %v653, %v2249
        %v2251 = vpop.f32.mrb[0].mxu0
        %2252 = vmatprep.mubr.f32.mxu0 0.0
        %2253 = vmatmul.mubr.f32.gmra.mrb[0].mxu0 %v2117
        %v2254 = vpop.f32.mrb[0].mxu0
        %v2255 = vadd.f32 %v653, %v2254
        %v2256 = vpop.f32.mrb[0].mxu0
        %2257 = vmatprep.mubr.f32.mxu0 0.0
        %2258 = vmatmul.mubr.f32.gmra.mrb[0].mxu0 %v2120
        %v2259 = vpop.f32.mrb[0].mxu0
        %v2260 = vadd.f32 %v653, %v2259
        %v2261 = vpop.f32.mrb[0].mxu0
        %2262 = vmatprep.mubr.f32.mxu0 0.0
        %2263 = vmatmul.mubr.f32.gmra.mrb[0].mxu0 %v2123
        %v2264 = vpop.f32.mrb[0].mxu0
        %v2265 = vadd.f32 %v653, %v2264
        %v2266 = vpop.f32.mrb[0].mxu0
        %2267 = vmatprep.mubr.f32.mxu0 0.0
        %2268 = vmatmul.mubr.f32.gmra.mrb[0].mxu0 %v2126
        %v2269 = vpop.f32.mrb[0].mxu0
        %v2270 = vadd.f32 %v653, %v2269
        %v2271 = vpop.f32.mrb[0].mxu0
        %2272 = vmatprep.mubr.f32.mxu0 0.0
        %2273 = vmatmul.mubr.f32.gmra.mrb[0].mxu0 %v2129
        %v2274 = vpop.f32.mrb[0].mxu0
        %v2275 = vadd.f32 %v653, %v2274
        %v2276 = vpop.f32.mrb[0].mxu0
        %2277 = vmatprep.mubr.f32.mxu0 0.0
        %2278 = vmatmul.mubr.f32.gmra.mrb[0].mxu0 %v2132
        %v2279 = vpop.f32.mrb[0].mxu0
        %v2280 = vadd.f32 %v653, %v2279
        %v2281 = vpop.f32.mrb[0].mxu0
        %2282 = vmatprep.mubr.f32.mxu0 0.0
        %2283 = vmatmul.mubr.f32.gmra.mrb[0].mxu0 %v2135
        %v2284 = vpop.f32.mrb[0].mxu0
        %v2285 = vadd.f32 %v653, %v2284
        %v2286 = vpop.f32.mrb[0].mxu0
        %2287 = vmatprep.mubr.f32.mxu0 0.0
        %2288 = vmatmul.mubr.f32.gmra.mrb[0].mxu0 %v2138
        %v2289 = vpop.f32.mrb[0].mxu0
        %v2290 = vadd.f32 %v653, %v2289
        %v2291 = vpop.f32.mrb[0].mxu0
        %2292 = vmatprep.mubr.f32.mxu0 0.0
        %2293 = vmatmul.mubr.f32.gmra.mrb[0].mxu0 %v2141
        %v2294 = vpop.f32.mrb[0].mxu0
        %v2295 = vadd.f32 %v653, %v2294
        %v2296 = vpop.f32.mrb[0].mxu0
        %2297 = vmatprep.mubr.f32.mxu0 0.0
        %2298 = vmatmul.mubr.f32.gmra.mrb[0].mxu0 %v2144
        %v2299 = vpop.f32.mrb[0].mxu0
        %v2300 = vadd.f32 %v653, %v2299
        %v2301 = vpop.f32.mrb[0].mxu0
        %2302 = vmatprep.mubr.f32.mxu0 0.0
        %2303 = vmatmul.mubr.f32.gmra.mrb[0].mxu0 %v2147
        %v2304 = vpop.f32.mrb[0].mxu0
        %v2305 = vadd.f32 %v653, %v2304
        %v2306 = vpop.f32.mrb[0].mxu0
        %2307 = vdwg.mxu0
        %v2308 = vmul.f32 %v2073, %v2073
        %v2309 = vmul.f32 %v2074, %v2074
        %v2310 = vmul.f32 %v2075, %v2075
        %v2311 = vmul.f32 %v2076, %v2076
        %v2312 = vmul.f32 %v2077, %v2077
        %v2313 = vmul.f32 %v2078, %v2078
        %v2314 = vmul.f32 %v2079, %v2079
        %v2315 = vmul.f32 %v2080, %v2080
        %v2316 = vmul.f32 %v2081, %v2081
        %v2317 = vmul.f32 %v2082, %v2082
        %v2318 = vmul.f32 %v2083, %v2083
        %v2319 = vmul.f32 %v2084, %v2084
        %v2320 = vmul.f32 %v2085, %v2085
        %v2321 = vmul.f32 %v2086, %v2086
        %v2322 = vmul.f32 %v2087, %v2087
        %v2323 = vmul.f32 %v2088, %v2088
        %v2324 = vmul.f32 %v2089, %v2089
        %v2325 = vmul.f32 %v2090, %v2090
        %v2326 = vmul.f32 %v2091, %v2091
        %v2327 = vsub.f32 1.0, %v2308
        %v2328 = vsub.f32 1.0, %v2309
        %v2329 = vsub.f32 1.0, %v2310
        %v2330 = vsub.f32 1.0, %v2311
        %v2331 = vsub.f32 1.0, %v2312
        %v2332 = vsub.f32 1.0, %v2313
        %v2333 = vsub.f32 1.0, %v2314
        %v2334 = vsub.f32 1.0, %v2315
        %v2335 = vsub.f32 1.0, %v2316
        %v2336 = vsub.f32 1.0, %v2317
        %v2337 = vsub.f32 1.0, %v2318
        %v2338 = vsub.f32 1.0, %v2319
        %v2339 = vsub.f32 1.0, %v2320
        %v2340 = vsub.f32 1.0, %v2321
        %v2341 = vsub.f32 1.0, %v2322
        %v2342 = vsub.f32 1.0, %v2323
        %v2343 = vsub.f32 1.0, %v2324
        %v2344 = vsub.f32 1.0, %v2325
        %v2345 = vsub.f32 1.0, %v2326
        %v2347 = vsel %vm655, %v2327, 0
        %v2350 = vsel %vm655, %v2328, 0
        %v2353 = vsel %vm655, %v2329, 0
        %v2356 = vsel %vm655, %v2330, 0
        %v2359 = vsel %vm655, %v2331, 0
        %v2362 = vsel %vm655, %v2332, 0
        %v2365 = vsel %vm655, %v2333, 0
        %v2368 = vsel %vm655, %v2334, 0
        %v2371 = vsel %vm655, %v2335, 0
        %v2374 = vsel %vm655, %v2336, 0
        %v2377 = vsel %vm655, %v2337, 0
        %v2380 = vsel %vm655, %v2338, 0
        %v2383 = vsel %vm655, %v2339, 0
        %v2386 = vsel %vm655, %v2340, 0
        %v2389 = vsel %vm655, %v2341, 0
        %v2392 = vsel %vm655, %v2342, 0
        %v2395 = vsel %vm655, %v2343, 0
        %v2398 = vsel %vm655, %v2344, 0
        %v2401 = vsel %vm655, %v2345, 0
        %2403 = vmatprep.subr.mxu0 0.0
        %2404 = vmatpush1.msra.mxu0 %v454
        %2405 = vmatprep.subr.mxu0 0.0
        %2406 = vmatpush1.msra.mxu0 %v455
        %2407 = vmatprep.subr.mxu0 0.0
        %2408 = vmatpush1.msra.mxu0 %v456
        %2409 = vmatprep.subr.mxu0 0.0
        %2410 = vmatpush1.msra.mxu0 %v457
        %2411 = vmatprep.subr.mxu0 0.0
        %2412 = vmatpush1.msra.mxu0 0.0
        %2413 = vmatprep.subr.mxu0 0.0
        %2414 = vmatpush1.msra.mxu0 0.0
        %2415 = vmatprep.subr.mxu0 0.0
        %2416 = vmatpush1.msra.mxu0 0.0
        %2417 = vmatprep.subr.mxu0 0.0
        %2418 = vmatpush1.msra.mxu0 0.0
        %2419 = vmatprep.subr.mxu0 0.0
        %2420 = vmatpush1.msra.mxu0 0.0
        %2421 = vmatprep.subr.mxu0 0.0
        %2422 = vmatpush1.msra.mxu0 0.0
        %2423 = vmatprep.subr.mxu0 0.0
        %2424 = vmatpush1.msra.mxu0 0.0
        %2425 = vmatprep.subr.mxu0 0.0
        %2426 = vmatpush1.msra.mxu0 0.0
        %2427 = vmatprep.subr.mxu0 0.0
        %2428 = vmatpush1.msra.mxu0 0.0
        %2429 = vmatprep.subr.mxu0 0.0
        %2430 = vmatpush1.msra.mxu0 0.0
        %2431 = vmatprep.subr.mxu0 0.0
        %2432 = vmatpush1.msra.mxu0 0.0
        %2433 = vmatprep.subr.mxu0 0.0
        %2434 = vmatpush1.msra.mxu0 0.0
        %2435 = vmatprep.subr.mxu0 0.0
        %2436 = vmatpush1.msra.mxu0 0.0
        %2437 = vmatprep.subr.mxu0 0.0
        %2438 = vmatpush1.msra.mxu0 0.0
        %2439 = vmatprep.subr.mxu0 0.0
        %2440 = vmatpush1.msra.mxu0 0.0
        %2441 = vmatprep.subr.mxu0 0.0
        %2442 = vmatpush1.msra.mxu0 0.0
        %2443 = vmatprep.subr.mxu0 0.0
        %2444 = vmatpush1.msra.mxu0 0.0
        %2445 = vmatprep.subr.mxu0 0.0
        %2446 = vmatpush1.msra.mxu0 0.0
        %2447 = vmatprep.subr.mxu0 0.0
        %2448 = vmatpush1.msra.mxu0 0.0
        %2449 = vmatprep.subr.mxu0 0.0
        %2450 = vmatpush1.msra.mxu0 0.0
        %2451 = vmatprep.subr.mxu0 0.0
        %2452 = vmatpush1.msra.mxu0 0.0
        %2453 = vmatprep.subr.mxu0 0.0
        %2454 = vmatpush1.msra.mxu0 0.0
        %2455 = vmatprep.subr.mxu0 0.0
        %2456 = vmatpush1.msra.mxu0 0.0
        %2457 = vmatprep.subr.mxu0 0.0
        %2458 = vmatpush1.msra.mxu0 0.0
        %2459 = vmatprep.subr.mxu0 0.0
        %2460 = vmatpush1.msra.mxu0 0.0
        %2461 = vmatprep.subr.mxu0 0.0
        %2462 = vmatpush1.msra.mxu0 0.0
        %2463 = vmatprep.subr.mxu0 0.0
        %2464 = vmatpush1.msra.mxu0 0.0
        %2465 = vmatprep.subr.mxu0 0.0
        %2466 = vmatpush1.msra.mxu0 0.0
        %2467 = vmatprep.mubr.f32.mxu0 0.0
        %2468 = vmatmul.mubr.f32.gmra.mrb[0].mxu0 %v2347
        %v2469 = vpop.f32.mrb[0].mxu0
        %v2470 = vadd.f32 0.0, %v2469
        %v2471 = vpop.f32.mrb[0].mxu0
        %2472 = vmatprep.mubr.f32.mxu0 0.0
        %2473 = vmatmul.mubr.f32.gmra.mrb[0].mxu0 %v2350
        %v2474 = vpop.f32.mrb[0].mxu0
        %v2475 = vadd.f32 0.0, %v2474
        %v2476 = vpop.f32.mrb[0].mxu0
        %2477 = vmatprep.mubr.f32.mxu0 0.0
        %2478 = vmatmul.mubr.f32.gmra.mrb[0].mxu0 %v2353
        %v2479 = vpop.f32.mrb[0].mxu0
        %v2480 = vadd.f32 0.0, %v2479
        %v2481 = vpop.f32.mrb[0].mxu0
        %2482 = vmatprep.mubr.f32.mxu0 0.0
        %2483 = vmatmul.mubr.f32.gmra.mrb[0].mxu0 %v2356
        %v2484 = vpop.f32.mrb[0].mxu0
        %v2485 = vadd.f32 0.0, %v2484
        %v2486 = vpop.f32.mrb[0].mxu0
        %2487 = vmatprep.mubr.f32.mxu0 0.0
        %2488 = vmatmul.mubr.f32.gmra.mrb[0].mxu0 %v2359
        %v2489 = vpop.f32.mrb[0].mxu0
        %v2490 = vadd.f32 0.0, %v2489
        %v2491 = vpop.f32.mrb[0].mxu0
        %2492 = vmatprep.mubr.f32.mxu0 0.0
        %2493 = vmatmul.mubr.f32.gmra.mrb[0].mxu0 %v2362
        %v2494 = vpop.f32.mrb[0].mxu0
        %v2495 = vadd.f32 0.0, %v2494
        %v2496 = vpop.f32.mrb[0].mxu0
        %2497 = vmatprep.mubr.f32.mxu0 0.0
        %2498 = vmatmul.mubr.f32.gmra.mrb[0].mxu0 %v2365
        %v2499 = vpop.f32.mrb[0].mxu0
        %v2500 = vadd.f32 0.0, %v2499
        %v2501 = vpop.f32.mrb[0].mxu0
        %2502 = vmatprep.mubr.f32.mxu0 0.0
        %2503 = vmatmul.mubr.f32.gmra.mrb[0].mxu0 %v2368
        %v2504 = vpop.f32.mrb[0].mxu0
        %v2505 = vadd.f32 0.0, %v2504
        %v2506 = vpop.f32.mrb[0].mxu0
        %2507 = vmatprep.mubr.f32.mxu0 0.0
        %2508 = vmatmul.mubr.f32.gmra.mrb[0].mxu0 %v2371
        %v2509 = vpop.f32.mrb[0].mxu0
        %v2510 = vadd.f32 0.0, %v2509
        %v2511 = vpop.f32.mrb[0].mxu0
        %2512 = vmatprep.mubr.f32.mxu0 0.0
        %2513 = vmatmul.mubr.f32.gmra.mrb[0].mxu0 %v2374
        %v2514 = vpop.f32.mrb[0].mxu0
        %v2515 = vadd.f32 0.0, %v2514
        %v2516 = vpop.f32.mrb[0].mxu0
        %2517 = vmatprep.mubr.f32.mxu0 0.0
        %2518 = vmatmul.mubr.f32.gmra.mrb[0].mxu0 %v2377
        %v2519 = vpop.f32.mrb[0].mxu0
        %v2520 = vadd.f32 0.0, %v2519
        %v2521 = vpop.f32.mrb[0].mxu0
        %2522 = vmatprep.mubr.f32.mxu0 0.0
        %2523 = vmatmul.mubr.f32.gmra.mrb[0].mxu0 %v2380
        %v2524 = vpop.f32.mrb[0].mxu0
        %v2525 = vadd.f32 0.0, %v2524
        %v2526 = vpop.f32.mrb[0].mxu0
        %2527 = vmatprep.mubr.f32.mxu0 0.0
        %2528 = vmatmul.mubr.f32.gmra.mrb[0].mxu0 %v2383
        %v2529 = vpop.f32.mrb[0].mxu0
        %v2530 = vadd.f32 0.0, %v2529
        %v2531 = vpop.f32.mrb[0].mxu0
        %2532 = vmatprep.mubr.f32.mxu0 0.0
        %2533 = vmatmul.mubr.f32.gmra.mrb[0].mxu0 %v2386
        %v2534 = vpop.f32.mrb[0].mxu0
        %v2535 = vadd.f32 0.0, %v2534
        %v2536 = vpop.f32.mrb[0].mxu0
        %2537 = vmatprep.mubr.f32.mxu0 0.0
        %2538 = vmatmul.mubr.f32.gmra.mrb[0].mxu0 %v2389
        %v2539 = vpop.f32.mrb[0].mxu0
        %v2540 = vadd.f32 0.0, %v2539
        %v2541 = vpop.f32.mrb[0].mxu0
        %2542 = vmatprep.mubr.f32.mxu0 0.0
        %2543 = vmatmul.mubr.f32.gmra.mrb[0].mxu0 %v2392
        %v2544 = vpop.f32.mrb[0].mxu0
        %v2545 = vadd.f32 0.0, %v2544
        %v2546 = vpop.f32.mrb[0].mxu0
        %2547 = vmatprep.mubr.f32.mxu0 0.0
        %2548 = vmatmul.mubr.f32.gmra.mrb[0].mxu0 %v2395
        %v2549 = vpop.f32.mrb[0].mxu0
        %v2550 = vadd.f32 0.0, %v2549
        %v2551 = vpop.f32.mrb[0].mxu0
        %2552 = vmatprep.mubr.f32.mxu0 0.0
        %2553 = vmatmul.mubr.f32.gmra.mrb[0].mxu0 %v2398
        %v2554 = vpop.f32.mrb[0].mxu0
        %v2555 = vadd.f32 0.0, %v2554
        %v2556 = vpop.f32.mrb[0].mxu0
        %2557 = vmatprep.mubr.f32.mxu0 0.0
        %2558 = vmatmul.mubr.f32.gmra.mrb[0].mxu0 %v2401
        %v2559 = vpop.f32.mrb[0].mxu0
        %v2560 = vadd.f32 0.0, %v2559
        %v2561 = vpop.f32.mrb[0].mxu0
        %2562 = vdwg.mxu0
        %v2563 = vmul.f32 %v2470, %v2470
        %2564 = vmatprep.subr.mxu0 0.0
        %2565 = vmatpush1.msra.mxu0 %v544
        %2566 = vmatprep.subr.mxu0 0.0
        %2567 = vmatpush1.msra.mxu0 %v545
        %2568 = vmatprep.subr.mxu0 0.0
        %2569 = vmatpush1.msra.mxu0 %v546
        %2570 = vmatprep.subr.mxu0 0.0
        %2571 = vmatpush1.msra.mxu0 %v547
        %2572 = vmatprep.subr.mxu0 0.0
        %2573 = vmatpush1.msra.mxu0 %v548
        %2574 = vmatprep.subr.mxu0 0.0
        %2575 = vmatpush1.msra.mxu0 %v549
        %2576 = vmatprep.subr.mxu0 0.0
        %2577 = vmatpush1.msra.mxu0 %v550
        %2578 = vmatprep.subr.mxu0 0.0
        %2579 = vmatpush1.msra.mxu0 %v551
        %2580 = vmatprep.subr.mxu0 0.0
        %2581 = vmatpush1.msra.mxu0 %v552
        %2582 = vmatprep.subr.mxu0 0.0
        %2583 = vmatpush1.msra.mxu0 %v553
        %2584 = vmatprep.subr.mxu0 0.0
        %2585 = vmatpush1.msra.mxu0 %v554
        %2586 = vmatprep.subr.mxu0 0.0
        %2587 = vmatpush1.msra.mxu0 %v555
        %2588 = vmatprep.subr.mxu0 0.0
        %2589 = vmatpush1.msra.mxu0 %v556
        %2590 = vmatprep.subr.mxu0 0.0
        %2591 = vmatpush1.msra.mxu0 %v557
        %2592 = vmatprep.subr.mxu0 0.0
        %2593 = vmatpush1.msra.mxu0 %v558
        %2594 = vmatprep.subr.mxu0 0.0
        %2595 = vmatpush1.msra.mxu0 %v559
        %2596 = vmatprep.subr.mxu0 0.0
        %2597 = vmatpush1.msra.mxu0 0.0
        %2598 = vmatprep.subr.mxu0 0.0
        %2599 = vmatpush1.msra.mxu0 0.0
        %2600 = vmatprep.subr.mxu0 0.0
        %2601 = vmatpush1.msra.mxu0 0.0
        %2602 = vmatprep.subr.mxu0 0.0
        %2603 = vmatpush1.msra.mxu0 0.0
        %2604 = vmatprep.subr.mxu0 0.0
        %2605 = vmatpush1.msra.mxu0 0.0
        %2606 = vmatprep.subr.mxu0 0.0
        %2607 = vmatpush1.msra.mxu0 0.0
        %2608 = vmatprep.subr.mxu0 0.0
        %2609 = vmatpush1.msra.mxu0 0.0
        %2610 = vmatprep.subr.mxu0 0.0
        %2611 = vmatpush1.msra.mxu0 0.0
        %2612 = vmatprep.subr.mxu0 0.0
        %2613 = vmatpush1.msra.mxu0 0.0
        %2614 = vmatprep.subr.mxu0 0.0
        %2615 = vmatpush1.msra.mxu0 0.0
        %2616 = vmatprep.subr.mxu0 0.0
        %2617 = vmatpush1.msra.mxu0 0.0
        %2618 = vmatprep.subr.mxu0 0.0
        %2619 = vmatpush1.msra.mxu0 0.0
        %2620 = vmatprep.subr.mxu0 0.0
        %2621 = vmatpush1.msra.mxu0 0.0
        %2622 = vmatprep.subr.mxu0 0.0
        %2623 = vmatpush1.msra.mxu0 0.0
        %2624 = vmatprep.subr.mxu0 0.0
        %2625 = vmatpush1.msra.mxu0 0.0
        %2626 = vmatprep.subr.mxu0 0.0
        %2627 = vmatpush1.msra.mxu0 0.0
        %2628 = vmatprep.mubr.f32.mxu0 0.0
        %2629 = vmatmul.mubr.f32.gmra.mrb[0].mxu0 %v2563
        %v2630 = vpop.f32.mrb[0].mxu0
        %v2631 = vadd.f32 0.0, %v2630
        %v2632 = vpop.f32.mrb[0].mxu0
        %2633 = vdwg.mxu0
        %v2634 = vrsqrt.pop %v2631
        %v2635 = vmul.f32 %v2631, %v2634
        %vm2636 = vcmp.eq.f32.partialorder %v2631, inf
        %v2637 = vsel %vm2636, %v2631, %v2635
        %vm2638 = vcmp.eq.f32.partialorder %v2631, 0.0
        %v2639 = vand.u32 %v2631, 2147483648
        %v2640 = vsel %vm2638, %v2639, %v2637
        %v2641 = vmul.f32 %v801, %v2470
        %2642 = vmatprep.subr.mxu0 0.0
        %2643 = vmatpush1.msra.mxu0 %v544
        %2644 = vmatprep.subr.mxu0 0.0
        %2645 = vmatpush1.msra.mxu0 %v545
        %2646 = vmatprep.subr.mxu0 0.0
        %2647 = vmatpush1.msra.mxu0 %v546
        %2648 = vmatprep.subr.mxu0 0.0
        %2649 = vmatpush1.msra.mxu0 %v547
        %2650 = vmatprep.subr.mxu0 0.0
        %2651 = vmatpush1.msra.mxu0 %v548
        %2652 = vmatprep.subr.mxu0 0.0
        %2653 = vmatpush1.msra.mxu0 %v549
        %2654 = vmatprep.subr.mxu0 0.0
        %2655 = vmatpush1.msra.mxu0 %v550
        %2656 = vmatprep.subr.mxu0 0.0
        %2657 = vmatpush1.msra.mxu0 %v551
        %2658 = vmatprep.subr.mxu0 0.0
        %2659 = vmatpush1.msra.mxu0 %v552
        %2660 = vmatprep.subr.mxu0 0.0
        %2661 = vmatpush1.msra.mxu0 %v553
        %2662 = vmatprep.subr.mxu0 0.0
        %2663 = vmatpush1.msra.mxu0 %v554
        %2664 = vmatprep.subr.mxu0 0.0
        %2665 = vmatpush1.msra.mxu0 %v555
        %2666 = vmatprep.subr.mxu0 0.0
        %2667 = vmatpush1.msra.mxu0 %v556
        %2668 = vmatprep.subr.mxu0 0.0
        %2669 = vmatpush1.msra.mxu0 %v557
        %2670 = vmatprep.subr.mxu0 0.0
        %2671 = vmatpush1.msra.mxu0 %v558
        %2672 = vmatprep.subr.mxu0 0.0
        %2673 = vmatpush1.msra.mxu0 %v559
        %2674 = vmatprep.subr.mxu0 0.0
        %2675 = vmatpush1.msra.mxu0 0.0
        %2676 = vmatprep.subr.mxu0 0.0
        %2677 = vmatpush1.msra.mxu0 0.0
        %2678 = vmatprep.subr.mxu0 0.0
        %2679 = vmatpush1.msra.mxu0 0.0
        %2680 = vmatprep.subr.mxu0 0.0
        %2681 = vmatpush1.msra.mxu0 0.0
        %2682 = vmatprep.subr.mxu0 0.0
        %2683 = vmatpush1.msra.mxu0 0.0
        %2684 = vmatprep.subr.mxu0 0.0
        %2685 = vmatpush1.msra.mxu0 0.0
        %2686 = vmatprep.subr.mxu0 0.0
        %2687 = vmatpush1.msra.mxu0 0.0
        %2688 = vmatprep.subr.mxu0 0.0
        %2689 = vmatpush1.msra.mxu0 0.0
        %2690 = vmatprep.subr.mxu0 0.0
        %2691 = vmatpush1.msra.mxu0 0.0
        %2692 = vmatprep.subr.mxu0 0.0
        %2693 = vmatpush1.msra.mxu0 0.0
        %2694 = vmatprep.subr.mxu0 0.0
        %2695 = vmatpush1.msra.mxu0 0.0
        %2696 = vmatprep.subr.mxu0 0.0
        %2697 = vmatpush1.msra.mxu0 0.0
        %2698 = vmatprep.subr.mxu0 0.0
        %2699 = vmatpush1.msra.mxu0 0.0
        %2700 = vmatprep.subr.mxu0 0.0
        %2701 = vmatpush1.msra.mxu0 0.0
        %2702 = vmatprep.subr.mxu0 0.0
        %2703 = vmatpush1.msra.mxu0 0.0
        %2704 = vmatprep.subr.mxu0 0.0
        %2705 = vmatpush1.msra.mxu0 0.0
        %2706 = vmatprep.mubr.f32.mxu0 0.0
        %2707 = vmatmul.mubr.f32.gmra.mrb[0].mxu0 %v2641
        %v2708 = vpop.f32.mrb[0].mxu0
        %v2709 = vadd.f32 0.0, %v2708
        %v2710 = vpop.f32.mrb[0].mxu0
        %2711 = vdwg.mxu0
        %v2712 = vmul.f32 %v1091, %v2640
        %v2713 = vsub.f32 1.0, %v445
        %2715 = vset.pattern.permute.xlu0 0
        %2716 = vperm.xlu0 %2715, %v2713
        %v2717 = vpop.permute.xlu0 %2716
        %v2719 = vadd.f32 %v2712, %v2717
        %v2720 = vrcp.pop %v2719
        %v2721 = vmul.f32 %v2709, %v2720
        %vm2722 = vcmp.gt.f32.partialorder %v445, 0.5
        %vm2723 = vcmp.lt.f32.partialorder %v2721, 0.0
        %v2724 = vsel %vm2722, 1, 0
        %2725 = vset.pattern.permute.xlu0 0
        %2726 = vperm.xlu0 %2725, %v2724
        %v2727 = vpop.permute.xlu0 %2726
        %vm2728 = vcmp.eq.s32.totalorder %v2727, 1
        %vm2729 = vmand %vm2728, %vm2723
        %v2730 = vsel %vm2729, 1.0, 0.0
        %v2731 = vsel %vm1141, %v2730, 0.0
        %2732 = vadd.xlane.f32.xlu0 %v2731
        %v2733 = vpop.xlane.xlu0 %2732
        %v2734 = vrot.slane %v2733, 4
        %v2735 = vadd.f32 %v2733, %v2734
        %v2736 = vrot.slane %v2735, 2
        %v2737 = vadd.f32 %v2735, %v2736
        %v2738 = vrot.slane %v2737, 1
        %v2739 = vadd.f32 %v2737, %v2738
        %s2740 = vtos %v2739
        %v2741 = vmul.f32 %v2721, -0.5
        %v2742 = vmul.f32 %v2741, 1.442695
        %v2743 = vpow.pop %v2742
        %v2744 = vsub.f32 1.0, %v2721
        %v2745 = vmul.f32 %v2743, %v2744
        %v2746 = vand.u32 2147483647, %v2745
        %v2747 = vsel %vm2728, %v2746, 0.0
        %v2748 = vsel %vm1141, %v2747, 0.0
        %2749 = vadd.xlane.f32.xlu0 %v2748
        %v2750 = vpop.xlane.xlu0 %2749
        %v2751 = vrot.slane %v2750, 4
        %v2752 = vadd.f32 %v2750, %v2751
        %v2753 = vrot.slane %v2752, 2
        %v2754 = vadd.f32 %v2752, %v2753
        %v2755 = vrot.slane %v2754, 1
        %v2756 = vadd.f32 %v2754, %v2755
        %s2757 = vtos %v2756
        %v2758 = vand.u32 2147483647, %v2220
        %v2759 = vand.u32 2147483647, %v2225
        %v2760 = vand.u32 2147483647, %v2230
        %v2761 = vand.u32 2147483647, %v2235
        %v2762 = vand.u32 2147483647, %v2240
        %v2763 = vand.u32 2147483647, %v2245
        %v2764 = vand.u32 2147483647, %v2250
        %v2765 = vand.u32 2147483647, %v2255
        %v2766 = vand.u32 2147483647, %v2260
        %v2767 = vand.u32 2147483647, %v2265
        %v2768 = vand.u32 2147483647, %v2270
        %v2769 = vand.u32 2147483647, %v2275
        %v2770 = vand.u32 2147483647, %v2280
        %v2771 = vand.u32 2147483647, %v2285
        %v2772 = vand.u32 2147483647, %v2290
        %v2773 = vand.u32 2147483647, %v2295
        %v2774 = vand.u32 2147483647, %v2300
        %v2775 = vand.u32 2147483647, %v2305
        %2794 = vrot.lane.b32.xlu0 %v2758, 126
        %v2795 = vpop.permute.xlu0 %2794
        %2796 = vrot.lane.b32.xlu0 %v2759, 126
        %v2797 = vpop.permute.xlu0 %2796
        %2798 = vrot.lane.b32.xlu0 %v2760, 126
        %v2799 = vpop.permute.xlu0 %2798
        %2800 = vrot.lane.b32.xlu0 %v2761, 126
        %v2801 = vpop.permute.xlu0 %2800
        %2802 = vrot.lane.b32.xlu0 %v2762, 126
        %v2803 = vpop.permute.xlu0 %2802
        %2804 = vrot.lane.b32.xlu0 %v2763, 126
        %v2805 = vpop.permute.xlu0 %2804
        %2806 = vrot.lane.b32.xlu0 %v2764, 126
        %v2807 = vpop.permute.xlu0 %2806
        %2808 = vrot.lane.b32.xlu0 %v2765, 126
        %v2809 = vpop.permute.xlu0 %2808
        %2810 = vrot.lane.b32.xlu0 %v2766, 126
        %v2811 = vpop.permute.xlu0 %2810
        %2812 = vrot.lane.b32.xlu0 %v2767, 126
        %v2813 = vpop.permute.xlu0 %2812
        %2814 = vrot.lane.b32.xlu0 %v2768, 126
        %v2815 = vpop.permute.xlu0 %2814
        %2816 = vrot.lane.b32.xlu0 %v2769, 126
        %v2817 = vpop.permute.xlu0 %2816
        %2818 = vrot.lane.b32.xlu0 %v2770, 126
        %v2819 = vpop.permute.xlu0 %2818
        %2820 = vrot.lane.b32.xlu0 %v2771, 126
        %v2821 = vpop.permute.xlu0 %2820
        %2822 = vrot.lane.b32.xlu0 %v2772, 126
        %v2823 = vpop.permute.xlu0 %2822
        %2824 = vrot.lane.b32.xlu0 %v2773, 126
        %v2825 = vpop.permute.xlu0 %2824
        %2826 = vrot.lane.b32.xlu0 %v2774, 126
        %v2827 = vpop.permute.xlu0 %2826
        %2828 = vrot.lane.b32.xlu0 %v2775, 126
        %v2829 = vpop.permute.xlu0 %2828
        %v2848 = vsel %vm809, %v2795, 0.0
        %2849 = vadd.xlane.f32.xlu0 %v2848
        %v2850 = vpop.xlane.xlu0 %2849
        %v2851 = vsel %vm809, %v2797, 0.0
        %2852 = vadd.xlane.f32.xlu0 %v2851
        %v2853 = vpop.xlane.xlu0 %2852
        %v2854 = vsel %vm809, %v2799, 0.0
        %2855 = vadd.xlane.f32.xlu0 %v2854
        %v2856 = vpop.xlane.xlu0 %2855
        %v2857 = vsel %vm809, %v2801, 0.0
        %2858 = vadd.xlane.f32.xlu0 %v2857
        %v2859 = vpop.xlane.xlu0 %2858
        %v2860 = vsel %vm809, %v2803, 0.0
        %2861 = vadd.xlane.f32.xlu0 %v2860
        %v2862 = vpop.xlane.xlu0 %2861
        %v2863 = vsel %vm809, %v2805, 0.0
        %2864 = vadd.xlane.f32.xlu0 %v2863
        %v2865 = vpop.xlane.xlu0 %2864
        %v2866 = vsel %vm809, %v2807, 0.0
        %2867 = vadd.xlane.f32.xlu0 %v2866
        %v2868 = vpop.xlane.xlu0 %2867
        %v2869 = vsel %vm809, %v2809, 0.0
        %2870 = vadd.xlane.f32.xlu0 %v2869
        %v2871 = vpop.xlane.xlu0 %2870
        %v2872 = vsel %vm809, %v2811, 0.0
        %2873 = vadd.xlane.f32.xlu0 %v2872
        %v2874 = vpop.xlane.xlu0 %2873
        %v2875 = vsel %vm809, %v2813, 0.0
        %2876 = vadd.xlane.f32.xlu0 %v2875
        %v2877 = vpop.xlane.xlu0 %2876
        %v2878 = vsel %vm809, %v2815, 0.0
        %2879 = vadd.xlane.f32.xlu0 %v2878
        %v2880 = vpop.xlane.xlu0 %2879
        %v2881 = vsel %vm809, %v2817, 0.0
        %2882 = vadd.xlane.f32.xlu0 %v2881
        %v2883 = vpop.xlane.xlu0 %2882
        %v2884 = vsel %vm809, %v2819, 0.0
        %2885 = vadd.xlane.f32.xlu0 %v2884
        %v2886 = vpop.xlane.xlu0 %2885
        %v2887 = vsel %vm809, %v2821, 0.0
        %2888 = vadd.xlane.f32.xlu0 %v2887
        %v2889 = vpop.xlane.xlu0 %2888
        %v2890 = vsel %vm809, %v2823, 0.0
        %2891 = vadd.xlane.f32.xlu0 %v2890
        %v2892 = vpop.xlane.xlu0 %2891
        %v2893 = vsel %vm809, %v2825, 0.0
        %2894 = vadd.xlane.f32.xlu0 %v2893
        %v2895 = vpop.xlane.xlu0 %2894
        %v2896 = vsel %vm809, %v2827, 0.0
        %2897 = vadd.xlane.f32.xlu0 %v2896
        %v2898 = vpop.xlane.xlu0 %2897
        %v2899 = vsel %vm809, %v2829, 0.0
        %2900 = vadd.xlane.f32.xlu0 %v2899
        %v2901 = vpop.xlane.xlu0 %2900
        %v2902 = vmul.f32 %v2850, -1.0
        %v2903 = vmul.f32 %v2853, -1.0
        %v2904 = vmul.f32 %v2856, -1.0
        %v2905 = vmul.f32 %v2859, -1.0
        %v2906 = vmul.f32 %v2862, -1.0
        %v2907 = vmul.f32 %v2865, -1.0
        %v2908 = vmul.f32 %v2868, -1.0
        %v2909 = vmul.f32 %v2871, -1.0
        %v2910 = vmul.f32 %v2874, -1.0
        %v2911 = vmul.f32 %v2877, -1.0
        %v2912 = vmul.f32 %v2880, -1.0
        %v2913 = vmul.f32 %v2883, -1.0
        %v2914 = vmul.f32 %v2886, -1.0
        %v2915 = vmul.f32 %v2889, -1.0
        %v2916 = vmul.f32 %v2892, -1.0
        %v2917 = vmul.f32 %v2895, -1.0
        %v2918 = vmul.f32 %v2898, -1.0
        %v2919 = vmul.f32 %v2901, -1.0
        %v2920 = vmul.f32 %v2902, 1.442695
        %v2921 = vpow.pop %v2920
        %v2922 = vmul.f32 %v2903, 1.442695
        %v2923 = vpow.pop %v2922
        %v2924 = vmul.f32 %v2904, 1.442695
        %v2925 = vpow.pop %v2924
        %v2926 = vmul.f32 %v2905, 1.442695
        %v2927 = vpow.pop %v2926
        %v2928 = vmul.f32 %v2906, 1.442695
        %v2929 = vpow.pop %v2928
        %v2930 = vmul.f32 %v2907, 1.442695
        %v2931 = vpow.pop %v2930
        %v2932 = vmul.f32 %v2908, 1.442695
        %v2933 = vpow.pop %v2932
        %v2934 = vmul.f32 %v2909, 1.442695
        %v2935 = vpow.pop %v2934
        %v2936 = vmul.f32 %v2910, 1.442695
        %v2937 = vpow.pop %v2936
        %v2938 = vmul.f32 %v2911, 1.442695
        %v2939 = vpow.pop %v2938
        %v2940 = vmul.f32 %v2912, 1.442695
        %v2941 = vpow.pop %v2940
        %v2942 = vmul.f32 %v2913, 1.442695
        %v2943 = vpow.pop %v2942
        %v2944 = vmul.f32 %v2914, 1.442695
        %v2945 = vpow.pop %v2944
        %v2946 = vmul.f32 %v2915, 1.442695
        %v2947 = vpow.pop %v2946
        %v2948 = vmul.f32 %v2916, 1.442695
        %v2949 = vpow.pop %v2948
        %v2950 = vmul.f32 %v2917, 1.442695
        %v2951 = vpow.pop %v2950
        %v2952 = vmul.f32 %v2918, 1.442695
        %v2953 = vpow.pop %v2952
        %v2954 = vmul.f32 %v2919, 1.442695
        %v2955 = vpow.pop %v2954
        %v2956 = vmul.f32 %v2475, %v2475
        %v2957 = vmul.f32 %v2480, %v2480
        %v2958 = vmul.f32 %v2485, %v2485
        %v2959 = vmul.f32 %v2490, %v2490
        %v2960 = vmul.f32 %v2495, %v2495
        %v2961 = vmul.f32 %v2500, %v2500
        %v2962 = vmul.f32 %v2505, %v2505
        %v2963 = vmul.f32 %v2510, %v2510
        %v2964 = vmul.f32 %v2515, %v2515
        %v2965 = vmul.f32 %v2520, %v2520
        %v2966 = vmul.f32 %v2525, %v2525
        %v2967 = vmul.f32 %v2530, %v2530
        %v2968 = vmul.f32 %v2535, %v2535
        %v2969 = vmul.f32 %v2540, %v2540
        %v2970 = vmul.f32 %v2545, %v2545
        %v2971 = vmul.f32 %v2550, %v2550
        %v2972 = vmul.f32 %v2555, %v2555
        %v2973 = vmul.f32 %v2560, %v2560
        %2992 = vrot.lane.b32.xlu0 %v2956, 112
        %v2993 = vpop.permute.xlu0 %2992
        %2994 = vrot.lane.b32.xlu0 %v2957, 112
        %v2995 = vpop.permute.xlu0 %2994
        %2996 = vrot.lane.b32.xlu0 %v2958, 112
        %v2997 = vpop.permute.xlu0 %2996
        %2998 = vrot.lane.b32.xlu0 %v2959, 112
        %v2999 = vpop.permute.xlu0 %2998
        %3000 = vrot.lane.b32.xlu0 %v2960, 112
        %v3001 = vpop.permute.xlu0 %3000
        %3002 = vrot.lane.b32.xlu0 %v2961, 112
        %v3003 = vpop.permute.xlu0 %3002
        %3004 = vrot.lane.b32.xlu0 %v2962, 112
        %v3005 = vpop.permute.xlu0 %3004
        %3006 = vrot.lane.b32.xlu0 %v2963, 112
        %v3007 = vpop.permute.xlu0 %3006
        %3008 = vrot.lane.b32.xlu0 %v2964, 112
        %v3009 = vpop.permute.xlu0 %3008
        %3010 = vrot.lane.b32.xlu0 %v2965, 112
        %v3011 = vpop.permute.xlu0 %3010
        %3012 = vrot.lane.b32.xlu0 %v2966, 112
        %v3013 = vpop.permute.xlu0 %3012
        %3014 = vrot.lane.b32.xlu0 %v2967, 112
        %v3015 = vpop.permute.xlu0 %3014
        %3016 = vrot.lane.b32.xlu0 %v2968, 112
        %v3017 = vpop.permute.xlu0 %3016
        %3018 = vrot.lane.b32.xlu0 %v2969, 112
        %v3019 = vpop.permute.xlu0 %3018
        %3020 = vrot.lane.b32.xlu0 %v2970, 112
        %v3021 = vpop.permute.xlu0 %3020
        %3022 = vrot.lane.b32.xlu0 %v2971, 112
        %v3023 = vpop.permute.xlu0 %3022
        %3024 = vrot.lane.b32.xlu0 %v2972, 112
        %v3025 = vpop.permute.xlu0 %3024
        %3026 = vrot.lane.b32.xlu0 %v2973, 112
        %v3027 = vpop.permute.xlu0 %3026
        %v3046 = vadd.f32 %v2956, %v2993
        %v3047 = vadd.f32 %v2957, %v2995
        %v3048 = vadd.f32 %v2958, %v2997
        %v3049 = vadd.f32 %v2959, %v2999
        %v3050 = vadd.f32 %v2960, %v3001
        %v3051 = vadd.f32 %v2961, %v3003
        %v3052 = vadd.f32 %v2962, %v3005
        %v3053 = vadd.f32 %v2963, %v3007
        %v3054 = vadd.f32 %v2964, %v3009
        %v3055 = vadd.f32 %v2965, %v3011
        %v3056 = vadd.f32 %v2966, %v3013
        %v3057 = vadd.f32 %v2967, %v3015
        %v3058 = vadd.f32 %v2968, %v3017
        %v3059 = vadd.f32 %v2969, %v3019
        %v3060 = vadd.f32 %v2970, %v3021
        %v3061 = vadd.f32 %v2971, %v3023
        %v3062 = vadd.f32 %v2972, %v3025
        %v3063 = vadd.f32 %v2973, %v3027
        %3064 = vrot.lane.b32.xlu0 %v2956, 96
        %v3065 = vpop.permute.xlu0 %3064
        %3066 = vrot.lane.b32.xlu0 %v2957, 96
        %v3067 = vpop.permute.xlu0 %3066
        %3068 = vrot.lane.b32.xlu0 %v2958, 96
        %v3069 = vpop.permute.xlu0 %3068
        %3070 = vrot.lane.b32.xlu0 %v2959, 96
        %v3071 = vpop.permute.xlu0 %3070
        %3072 = vrot.lane.b32.xlu0 %v2960, 96
        %v3073 = vpop.permute.xlu0 %3072
        %3074 = vrot.lane.b32.xlu0 %v2961, 96
        %v3075 = vpop.permute.xlu0 %3074
        %3076 = vrot.lane.b32.xlu0 %v2962, 96
        %v3077 = vpop.permute.xlu0 %3076
        %3078 = vrot.lane.b32.xlu0 %v2963, 96
        %v3079 = vpop.permute.xlu0 %3078
        %3080 = vrot.lane.b32.xlu0 %v2964, 96
        %v3081 = vpop.permute.xlu0 %3080
        %3082 = vrot.lane.b32.xlu0 %v2965, 96
        %v3083 = vpop.permute.xlu0 %3082
        %3084 = vrot.lane.b32.xlu0 %v2966, 96
        %v3085 = vpop.permute.xlu0 %3084
        %3086 = vrot.lane.b32.xlu0 %v2967, 96
        %v3087 = vpop.permute.xlu0 %3086
        %3088 = vrot.lane.b32.xlu0 %v2968, 96
        %v3089 = vpop.permute.xlu0 %3088
        %3090 = vrot.lane.b32.xlu0 %v2969, 96
        %v3091 = vpop.permute.xlu0 %3090
        %3092 = vrot.lane.b32.xlu0 %v2970, 96
        %v3093 = vpop.permute.xlu0 %3092
        %3094 = vrot.lane.b32.xlu0 %v2971, 96
        %v3095 = vpop.permute.xlu0 %3094
        %3096 = vrot.lane.b32.xlu0 %v2972, 96
        %v3097 = vpop.permute.xlu0 %3096
        %3098 = vrot.lane.b32.xlu0 %v2973, 96
        %v3099 = vpop.permute.xlu0 %3098
        %v3118 = vadd.f32 %v3046, %v3065
        %v3119 = vadd.f32 %v3047, %v3067
        %v3120 = vadd.f32 %v3048, %v3069
        %v3121 = vadd.f32 %v3049, %v3071
        %v3122 = vadd.f32 %v3050, %v3073
        %v3123 = vadd.f32 %v3051, %v3075
        %v3124 = vadd.f32 %v3052, %v3077
        %v3125 = vadd.f32 %v3053, %v3079
        %v3126 = vadd.f32 %v3054, %v3081
        %v3127 = vadd.f32 %v3055, %v3083
        %v3128 = vadd.f32 %v3056, %v3085
        %v3129 = vadd.f32 %v3057, %v3087
        %v3130 = vadd.f32 %v3058, %v3089
        %v3131 = vadd.f32 %v3059, %v3091
        %v3132 = vadd.f32 %v3060, %v3093
        %v3133 = vadd.f32 %v3061, %v3095
        %v3134 = vadd.f32 %v3062, %v3097
        %v3135 = vadd.f32 %v3063, %v3099
        %3136 = vrot.lane.b32.xlu0 %v2956, 80
        %v3137 = vpop.permute.xlu0 %3136
        %3138 = vrot.lane.b32.xlu0 %v2957, 80
        %v3139 = vpop.permute.xlu0 %3138
        %3140 = vrot.lane.b32.xlu0 %v2958, 80
        %v3141 = vpop.permute.xlu0 %3140
        %3142 = vrot.lane.b32.xlu0 %v2959, 80
        %v3143 = vpop.permute.xlu0 %3142
        %3144 = vrot.lane.b32.xlu0 %v2960, 80
        %v3145 = vpop.permute.xlu0 %3144
        %3146 = vrot.lane.b32.xlu0 %v2961, 80
        %v3147 = vpop.permute.xlu0 %3146
        %3148 = vrot.lane.b32.xlu0 %v2962, 80
        %v3149 = vpop.permute.xlu0 %3148
        %3150 = vrot.lane.b32.xlu0 %v2963, 80
        %v3151 = vpop.permute.xlu0 %3150
        %3152 = vrot.lane.b32.xlu0 %v2964, 80
        %v3153 = vpop.permute.xlu0 %3152
        %3154 = vrot.lane.b32.xlu0 %v2965, 80
        %v3155 = vpop.permute.xlu0 %3154
        %3156 = vrot.lane.b32.xlu0 %v2966, 80
        %v3157 = vpop.permute.xlu0 %3156
        %3158 = vrot.lane.b32.xlu0 %v2967, 80
        %v3159 = vpop.permute.xlu0 %3158
        %3160 = vrot.lane.b32.xlu0 %v2968, 80
        %v3161 = vpop.permute.xlu0 %3160
        %3162 = vrot.lane.b32.xlu0 %v2969, 80
        %v3163 = vpop.permute.xlu0 %3162
        %3164 = vrot.lane.b32.xlu0 %v2970, 80
        %v3165 = vpop.permute.xlu0 %3164
        %3166 = vrot.lane.b32.xlu0 %v2971, 80
        %v3167 = vpop.permute.xlu0 %3166
        %3168 = vrot.lane.b32.xlu0 %v2972, 80
        %v3169 = vpop.permute.xlu0 %3168
        %3170 = vrot.lane.b32.xlu0 %v2973, 80
        %v3171 = vpop.permute.xlu0 %3170
        %v3190 = vadd.f32 %v3118, %v3137
        %v3191 = vadd.f32 %v3119, %v3139
        %v3192 = vadd.f32 %v3120, %v3141
        %v3193 = vadd.f32 %v3121, %v3143
        %v3194 = vadd.f32 %v3122, %v3145
        %v3195 = vadd.f32 %v3123, %v3147
        %v3196 = vadd.f32 %v3124, %v3149
        %v3197 = vadd.f32 %v3125, %v3151
        %v3198 = vadd.f32 %v3126, %v3153
        %v3199 = vadd.f32 %v3127, %v3155
        %v3200 = vadd.f32 %v3128, %v3157
        %v3201 = vadd.f32 %v3129, %v3159
        %v3202 = vadd.f32 %v3130, %v3161
        %v3203 = vadd.f32 %v3131, %v3163
        %v3204 = vadd.f32 %v3132, %v3165
        %v3205 = vadd.f32 %v3133, %v3167
        %v3206 = vadd.f32 %v3134, %v3169
        %v3207 = vadd.f32 %v3135, %v3171
        %3208 = vrot.lane.b32.xlu0 %v2956, 64
        %v3209 = vpop.permute.xlu0 %3208
        %3210 = vrot.lane.b32.xlu0 %v2957, 64
        %v3211 = vpop.permute.xlu0 %3210
        %3212 = vrot.lane.b32.xlu0 %v2958, 64
        %v3213 = vpop.permute.xlu0 %3212
        %3214 = vrot.lane.b32.xlu0 %v2959, 64
        %v3215 = vpop.permute.xlu0 %3214
        %3216 = vrot.lane.b32.xlu0 %v2960, 64
        %v3217 = vpop.permute.xlu0 %3216
        %3218 = vrot.lane.b32.xlu0 %v2961, 64
        %v3219 = vpop.permute.xlu0 %3218
        %3220 = vrot.lane.b32.xlu0 %v2962, 64
        %v3221 = vpop.permute.xlu0 %3220
        %3222 = vrot.lane.b32.xlu0 %v2963, 64
        %v3223 = vpop.permute.xlu0 %3222
        %3224 = vrot.lane.b32.xlu0 %v2964, 64
        %v3225 = vpop.permute.xlu0 %3224
        %3226 = vrot.lane.b32.xlu0 %v2965, 64
        %v3227 = vpop.permute.xlu0 %3226
        %3228 = vrot.lane.b32.xlu0 %v2966, 64
        %v3229 = vpop.permute.xlu0 %3228
        %3230 = vrot.lane.b32.xlu0 %v2967, 64
        %v3231 = vpop.permute.xlu0 %3230
        %3232 = vrot.lane.b32.xlu0 %v2968, 64
        %v3233 = vpop.permute.xlu0 %3232
        %3234 = vrot.lane.b32.xlu0 %v2969, 64
        %v3235 = vpop.permute.xlu0 %3234
        %3236 = vrot.lane.b32.xlu0 %v2970, 64
        %v3237 = vpop.permute.xlu0 %3236
        %3238 = vrot.lane.b32.xlu0 %v2971, 64
        %v3239 = vpop.permute.xlu0 %3238
        %3240 = vrot.lane.b32.xlu0 %v2972, 64
        %v3241 = vpop.permute.xlu0 %3240
        %3242 = vrot.lane.b32.xlu0 %v2973, 64
        %v3243 = vpop.permute.xlu0 %3242
        %v3262 = vadd.f32 %v3190, %v3209
        %v3263 = vadd.f32 %v3191, %v3211
        %v3264 = vadd.f32 %v3192, %v3213
        %v3265 = vadd.f32 %v3193, %v3215
        %v3266 = vadd.f32 %v3194, %v3217
        %v3267 = vadd.f32 %v3195, %v3219
        %v3268 = vadd.f32 %v3196, %v3221
        %v3269 = vadd.f32 %v3197, %v3223
        %v3270 = vadd.f32 %v3198, %v3225
        %v3271 = vadd.f32 %v3199, %v3227
        %v3272 = vadd.f32 %v3200, %v3229
        %v3273 = vadd.f32 %v3201, %v3231
        %v3274 = vadd.f32 %v3202, %v3233
        %v3275 = vadd.f32 %v3203, %v3235
        %v3276 = vadd.f32 %v3204, %v3237
        %v3277 = vadd.f32 %v3205, %v3239
        %v3278 = vadd.f32 %v3206, %v3241
        %v3279 = vadd.f32 %v3207, %v3243
        %3280 = vrot.lane.b32.xlu0 %v2956, 48
        %v3281 = vpop.permute.xlu0 %3280
        %3282 = vrot.lane.b32.xlu0 %v2957, 48
        %v3283 = vpop.permute.xlu0 %3282
        %3284 = vrot.lane.b32.xlu0 %v2958, 48
        %v3285 = vpop.permute.xlu0 %3284
        %3286 = vrot.lane.b32.xlu0 %v2959, 48
        %v3287 = vpop.permute.xlu0 %3286
        %3288 = vrot.lane.b32.xlu0 %v2960, 48
        %v3289 = vpop.permute.xlu0 %3288
        %3290 = vrot.lane.b32.xlu0 %v2961, 48
        %v3291 = vpop.permute.xlu0 %3290
        %3292 = vrot.lane.b32.xlu0 %v2962, 48
        %v3293 = vpop.permute.xlu0 %3292
        %3294 = vrot.lane.b32.xlu0 %v2963, 48
        %v3295 = vpop.permute.xlu0 %3294
        %3296 = vrot.lane.b32.xlu0 %v2964, 48
        %v3297 = vpop.permute.xlu0 %3296
        %3298 = vrot.lane.b32.xlu0 %v2965, 48
        %v3299 = vpop.permute.xlu0 %3298
        %3300 = vrot.lane.b32.xlu0 %v2966, 48
        %v3301 = vpop.permute.xlu0 %3300
        %3302 = vrot.lane.b32.xlu0 %v2967, 48
        %v3303 = vpop.permute.xlu0 %3302
        %3304 = vrot.lane.b32.xlu0 %v2968, 48
        %v3305 = vpop.permute.xlu0 %3304
        %3306 = vrot.lane.b32.xlu0 %v2969, 48
        %v3307 = vpop.permute.xlu0 %3306
        %3308 = vrot.lane.b32.xlu0 %v2970, 48
        %v3309 = vpop.permute.xlu0 %3308
        %3310 = vrot.lane.b32.xlu0 %v2971, 48
        %v3311 = vpop.permute.xlu0 %3310
        %3312 = vrot.lane.b32.xlu0 %v2972, 48
        %v3313 = vpop.permute.xlu0 %3312
        %3314 = vrot.lane.b32.xlu0 %v2973, 48
        %v3315 = vpop.permute.xlu0 %3314
        %v3334 = vadd.f32 %v3262, %v3281
        %v3335 = vadd.f32 %v3263, %v3283
        %v3336 = vadd.f32 %v3264, %v3285
        %v3337 = vadd.f32 %v3265, %v3287
        %v3338 = vadd.f32 %v3266, %v3289
        %v3339 = vadd.f32 %v3267, %v3291
        %v3340 = vadd.f32 %v3268, %v3293
        %v3341 = vadd.f32 %v3269, %v3295
        %v3342 = vadd.f32 %v3270, %v3297
        %v3343 = vadd.f32 %v3271, %v3299
        %v3344 = vadd.f32 %v3272, %v3301
        %v3345 = vadd.f32 %v3273, %v3303
        %v3346 = vadd.f32 %v3274, %v3305
        %v3347 = vadd.f32 %v3275, %v3307
        %v3348 = vadd.f32 %v3276, %v3309
        %v3349 = vadd.f32 %v3277, %v3311
        %v3350 = vadd.f32 %v3278, %v3313
        %v3351 = vadd.f32 %v3279, %v3315
        %3352 = vrot.lane.b32.xlu0 %v2956, 32
        %v3353 = vpop.permute.xlu0 %3352
        %3354 = vrot.lane.b32.xlu0 %v2957, 32
        %v3355 = vpop.permute.xlu0 %3354
        %3356 = vrot.lane.b32.xlu0 %v2958, 32
        %v3357 = vpop.permute.xlu0 %3356
        %3358 = vrot.lane.b32.xlu0 %v2959, 32
        %v3359 = vpop.permute.xlu0 %3358
        %3360 = vrot.lane.b32.xlu0 %v2960, 32
        %v3361 = vpop.permute.xlu0 %3360
        %3362 = vrot.lane.b32.xlu0 %v2961, 32
        %v3363 = vpop.permute.xlu0 %3362
        %3364 = vrot.lane.b32.xlu0 %v2962, 32
        %v3365 = vpop.permute.xlu0 %3364
        %3366 = vrot.lane.b32.xlu0 %v2963, 32
        %v3367 = vpop.permute.xlu0 %3366
        %3368 = vrot.lane.b32.xlu0 %v2964, 32
        %v3369 = vpop.permute.xlu0 %3368
        %3370 = vrot.lane.b32.xlu0 %v2965, 32
        %v3371 = vpop.permute.xlu0 %3370
        %3372 = vrot.lane.b32.xlu0 %v2966, 32
        %v3373 = vpop.permute.xlu0 %3372
        %3374 = vrot.lane.b32.xlu0 %v2967, 32
        %v3375 = vpop.permute.xlu0 %3374
        %3376 = vrot.lane.b32.xlu0 %v2968, 32
        %v3377 = vpop.permute.xlu0 %3376
        %3378 = vrot.lane.b32.xlu0 %v2969, 32
        %v3379 = vpop.permute.xlu0 %3378
        %3380 = vrot.lane.b32.xlu0 %v2970, 32
        %v3381 = vpop.permute.xlu0 %3380
        %3382 = vrot.lane.b32.xlu0 %v2971, 32
        %v3383 = vpop.permute.xlu0 %3382
        %3384 = vrot.lane.b32.xlu0 %v2972, 32
        %v3385 = vpop.permute.xlu0 %3384
        %3386 = vrot.lane.b32.xlu0 %v2973, 32
        %v3387 = vpop.permute.xlu0 %3386
        %v3406 = vadd.f32 %v3334, %v3353
        %v3407 = vadd.f32 %v3335, %v3355
        %v3408 = vadd.f32 %v3336, %v3357
        %v3409 = vadd.f32 %v3337, %v3359
        %v3410 = vadd.f32 %v3338, %v3361
        %v3411 = vadd.f32 %v3339, %v3363
        %v3412 = vadd.f32 %v3340, %v3365
        %v3413 = vadd.f32 %v3341, %v3367
        %v3414 = vadd.f32 %v3342, %v3369
        %v3415 = vadd.f32 %v3343, %v3371
        %v3416 = vadd.f32 %v3344, %v3373
        %v3417 = vadd.f32 %v3345, %v3375
        %v3418 = vadd.f32 %v3346, %v3377
        %v3419 = vadd.f32 %v3347, %v3379
        %v3420 = vadd.f32 %v3348, %v3381
        %v3421 = vadd.f32 %v3349, %v3383
        %v3422 = vadd.f32 %v3350, %v3385
        %v3423 = vadd.f32 %v3351, %v3387
        %3424 = vrot.lane.b32.xlu0 %v2956, 16
        %v3425 = vpop.permute.xlu0 %3424
        %3426 = vrot.lane.b32.xlu0 %v2957, 16
        %v3427 = vpop.permute.xlu0 %3426
        %3428 = vrot.lane.b32.xlu0 %v2958, 16
        %v3429 = vpop.permute.xlu0 %3428
        %3430 = vrot.lane.b32.xlu0 %v2959, 16
        %v3431 = vpop.permute.xlu0 %3430
        %3432 = vrot.lane.b32.xlu0 %v2960, 16
        %v3433 = vpop.permute.xlu0 %3432
        %3434 = vrot.lane.b32.xlu0 %v2961, 16
        %v3435 = vpop.permute.xlu0 %3434
        %3436 = vrot.lane.b32.xlu0 %v2962, 16
        %v3437 = vpop.permute.xlu0 %3436
        %3438 = vrot.lane.b32.xlu0 %v2963, 16
        %v3439 = vpop.permute.xlu0 %3438
        %3440 = vrot.lane.b32.xlu0 %v2964, 16
        %v3441 = vpop.permute.xlu0 %3440
        %3442 = vrot.lane.b32.xlu0 %v2965, 16
        %v3443 = vpop.permute.xlu0 %3442
        %3444 = vrot.lane.b32.xlu0 %v2966, 16
        %v3445 = vpop.permute.xlu0 %3444
        %3446 = vrot.lane.b32.xlu0 %v2967, 16
        %v3447 = vpop.permute.xlu0 %3446
        %3448 = vrot.lane.b32.xlu0 %v2968, 16
        %v3449 = vpop.permute.xlu0 %3448
        %3450 = vrot.lane.b32.xlu0 %v2969, 16
        %v3451 = vpop.permute.xlu0 %3450
        %3452 = vrot.lane.b32.xlu0 %v2970, 16
        %v3453 = vpop.permute.xlu0 %3452
        %3454 = vrot.lane.b32.xlu0 %v2971, 16
        %v3455 = vpop.permute.xlu0 %3454
        %3456 = vrot.lane.b32.xlu0 %v2972, 16
        %v3457 = vpop.permute.xlu0 %3456
        %3458 = vrot.lane.b32.xlu0 %v2973, 16
        %v3459 = vpop.permute.xlu0 %3458
        %v3478 = vadd.f32 %v3406, %v3425
        %v3479 = vadd.f32 %v3407, %v3427
        %v3480 = vadd.f32 %v3408, %v3429
        %v3481 = vadd.f32 %v3409, %v3431
        %v3482 = vadd.f32 %v3410, %v3433
        %v3483 = vadd.f32 %v3411, %v3435
        %v3484 = vadd.f32 %v3412, %v3437
        %v3485 = vadd.f32 %v3413, %v3439
        %v3486 = vadd.f32 %v3414, %v3441
        %v3487 = vadd.f32 %v3415, %v3443
        %v3488 = vadd.f32 %v3416, %v3445
        %v3489 = vadd.f32 %v3417, %v3447
        %v3490 = vadd.f32 %v3418, %v3449
        %v3491 = vadd.f32 %v3419, %v3451
        %v3492 = vadd.f32 %v3420, %v3453
        %v3493 = vadd.f32 %v3421, %v3455
        %v3494 = vadd.f32 %v3422, %v3457
        %v3495 = vadd.f32 %v3423, %v3459
        %v3496 = vrsqrt.pop %v3478
        %v3497 = vmul.f32 %v3478, %v3496
        %vm3498 = vcmp.eq.f32.partialorder %v3478, inf
        %v3499 = vsel %vm3498, %v3478, %v3497
        %vm3500 = vcmp.eq.f32.partialorder %v3478, 0.0
        %v3501 = vand.u32 %v3478, 2147483648
        %v3502 = vsel %vm3500, %v3501, %v3499
        %v3503 = vrsqrt.pop %v3479
        %v3504 = vmul.f32 %v3479, %v3503
        %vm3505 = vcmp.eq.f32.partialorder %v3479, inf
        %v3506 = vsel %vm3505, %v3479, %v3504
        %vm3507 = vcmp.eq.f32.partialorder %v3479, 0.0
        %v3508 = vand.u32 %v3479, 2147483648
        %v3509 = vsel %vm3507, %v3508, %v3506
        %v3510 = vrsqrt.pop %v3480
        %v3511 = vmul.f32 %v3480, %v3510
        %vm3512 = vcmp.eq.f32.partialorder %v3480, inf
        %v3513 = vsel %vm3512, %v3480, %v3511
        %vm3514 = vcmp.eq.f32.partialorder %v3480, 0.0
        %v3515 = vand.u32 %v3480, 2147483648
        %v3516 = vsel %vm3514, %v3515, %v3513
        %v3517 = vrsqrt.pop %v3481
        %v3518 = vmul.f32 %v3481, %v3517
        %vm3519 = vcmp.eq.f32.partialorder %v3481, inf
        %v3520 = vsel %vm3519, %v3481, %v3518
        %vm3521 = vcmp.eq.f32.partialorder %v3481, 0.0
        %v3522 = vand.u32 %v3481, 2147483648
        %v3523 = vsel %vm3521, %v3522, %v3520
        %v3524 = vrsqrt.pop %v3482
        %v3525 = vmul.f32 %v3482, %v3524
        %vm3526 = vcmp.eq.f32.partialorder %v3482, inf
        %v3527 = vsel %vm3526, %v3482, %v3525
        %vm3528 = vcmp.eq.f32.partialorder %v3482, 0.0
        %v3529 = vand.u32 %v3482, 2147483648
        %v3530 = vsel %vm3528, %v3529, %v3527
        %v3531 = vrsqrt.pop %v3483
        %v3532 = vmul.f32 %v3483, %v3531
        %vm3533 = vcmp.eq.f32.partialorder %v3483, inf
        %v3534 = vsel %vm3533, %v3483, %v3532
        %vm3535 = vcmp.eq.f32.partialorder %v3483, 0.0
        %v3536 = vand.u32 %v3483, 2147483648
        %v3537 = vsel %vm3535, %v3536, %v3534
        %v3538 = vrsqrt.pop %v3484
        %v3539 = vmul.f32 %v3484, %v3538
        %vm3540 = vcmp.eq.f32.partialorder %v3484, inf
        %v3541 = vsel %vm3540, %v3484, %v3539
        %vm3542 = vcmp.eq.f32.partialorder %v3484, 0.0
        %v3543 = vand.u32 %v3484, 2147483648
        %v3544 = vsel %vm3542, %v3543, %v3541
        %v3545 = vrsqrt.pop %v3485
        %v3546 = vmul.f32 %v3485, %v3545
        %vm3547 = vcmp.eq.f32.partialorder %v3485, inf
        %v3548 = vsel %vm3547, %v3485, %v3546
        %vm3549 = vcmp.eq.f32.partialorder %v3485, 0.0
        %v3550 = vand.u32 %v3485, 2147483648
        %v3551 = vsel %vm3549, %v3550, %v3548
        %v3552 = vrsqrt.pop %v3486
        %v3553 = vmul.f32 %v3486, %v3552
        %vm3554 = vcmp.eq.f32.partialorder %v3486, inf
        %v3555 = vsel %vm3554, %v3486, %v3553
        %vm3556 = vcmp.eq.f32.partialorder %v3486, 0.0
        %v3557 = vand.u32 %v3486, 2147483648
        %v3558 = vsel %vm3556, %v3557, %v3555
        %v3559 = vrsqrt.pop %v3487
        %v3560 = vmul.f32 %v3487, %v3559
        %vm3561 = vcmp.eq.f32.partialorder %v3487, inf
        %v3562 = vsel %vm3561, %v3487, %v3560
        %vm3563 = vcmp.eq.f32.partialorder %v3487, 0.0
        %v3564 = vand.u32 %v3487, 2147483648
        %v3565 = vsel %vm3563, %v3564, %v3562
        %v3566 = vrsqrt.pop %v3488
        %v3567 = vmul.f32 %v3488, %v3566
        %vm3568 = vcmp.eq.f32.partialorder %v3488, inf
        %v3569 = vsel %vm3568, %v3488, %v3567
        %vm3570 = vcmp.eq.f32.partialorder %v3488, 0.0
        %v3571 = vand.u32 %v3488, 2147483648
        %v3572 = vsel %vm3570, %v3571, %v3569
        %v3573 = vrsqrt.pop %v3489
        %v3574 = vmul.f32 %v3489, %v3573
        %vm3575 = vcmp.eq.f32.partialorder %v3489, inf
        %v3576 = vsel %vm3575, %v3489, %v3574
        %vm3577 = vcmp.eq.f32.partialorder %v3489, 0.0
        %v3578 = vand.u32 %v3489, 2147483648
        %v3579 = vsel %vm3577, %v3578, %v3576
        %v3580 = vrsqrt.pop %v3490
        %v3581 = vmul.f32 %v3490, %v3580
        %vm3582 = vcmp.eq.f32.partialorder %v3490, inf
        %v3583 = vsel %vm3582, %v3490, %v3581
        %vm3584 = vcmp.eq.f32.partialorder %v3490, 0.0
        %v3585 = vand.u32 %v3490, 2147483648
        %v3586 = vsel %vm3584, %v3585, %v3583
        %v3587 = vrsqrt.pop %v3491
        %v3588 = vmul.f32 %v3491, %v3587
        %vm3589 = vcmp.eq.f32.partialorder %v3491, inf
        %v3590 = vsel %vm3589, %v3491, %v3588
        %vm3591 = vcmp.eq.f32.partialorder %v3491, 0.0
        %v3592 = vand.u32 %v3491, 2147483648
        %v3593 = vsel %vm3591, %v3592, %v3590
        %v3594 = vrsqrt.pop %v3492
        %v3595 = vmul.f32 %v3492, %v3594
        %vm3596 = vcmp.eq.f32.partialorder %v3492, inf
        %v3597 = vsel %vm3596, %v3492, %v3595
        %vm3598 = vcmp.eq.f32.partialorder %v3492, 0.0
        %v3599 = vand.u32 %v3492, 2147483648
        %v3600 = vsel %vm3598, %v3599, %v3597
        %v3601 = vrsqrt.pop %v3493
        %v3602 = vmul.f32 %v3493, %v3601
        %vm3603 = vcmp.eq.f32.partialorder %v3493, inf
        %v3604 = vsel %vm3603, %v3493, %v3602
        %vm3605 = vcmp.eq.f32.partialorder %v3493, 0.0
        %v3606 = vand.u32 %v3493, 2147483648
        %v3607 = vsel %vm3605, %v3606, %v3604
        %v3608 = vrsqrt.pop %v3494
        %v3609 = vmul.f32 %v3494, %v3608
        %vm3610 = vcmp.eq.f32.partialorder %v3494, inf
        %v3611 = vsel %vm3610, %v3494, %v3609
        %vm3612 = vcmp.eq.f32.partialorder %v3494, 0.0
        %v3613 = vand.u32 %v3494, 2147483648
        %v3614 = vsel %vm3612, %v3613, %v3611
        %v3615 = vrsqrt.pop %v3495
        %v3616 = vmul.f32 %v3495, %v3615
        %vm3617 = vcmp.eq.f32.partialorder %v3495, inf
        %v3618 = vsel %vm3617, %v3495, %v3616
        %vm3619 = vcmp.eq.f32.partialorder %v3495, 0.0
        %v3620 = vand.u32 %v3495, 2147483648
        %v3621 = vsel %vm3619, %v3620, %v3618
        %v3622 = vsub.f32 %v3502, 1.0
        %v3623 = vsub.f32 %v3509, 1.0
        %v3624 = vsub.f32 %v3516, 1.0
        %v3625 = vsub.f32 %v3523, 1.0
        %v3626 = vsub.f32 %v3530, 1.0
        %v3627 = vsub.f32 %v3537, 1.0
        %v3628 = vsub.f32 %v3544, 1.0
        %v3629 = vsub.f32 %v3551, 1.0
        %v3630 = vsub.f32 %v3558, 1.0
        %v3631 = vsub.f32 %v3565, 1.0
        %v3632 = vsub.f32 %v3572, 1.0
        %v3633 = vsub.f32 %v3579, 1.0
        %v3634 = vsub.f32 %v3586, 1.0
        %v3635 = vsub.f32 %v3593, 1.0
        %v3636 = vsub.f32 %v3600, 1.0
        %v3637 = vsub.f32 %v3607, 1.0
        %v3638 = vsub.f32 %v3614, 1.0
        %v3639 = vsub.f32 %v3621, 1.0
        %v3640 = vand.u32 2147483647, %v3622
        %v3641 = vand.u32 2147483647, %v3623
        %v3642 = vand.u32 2147483647, %v3624
        %v3643 = vand.u32 2147483647, %v3625
        %v3644 = vand.u32 2147483647, %v3626
        %v3645 = vand.u32 2147483647, %v3627
        %v3646 = vand.u32 2147483647, %v3628
        %v3647 = vand.u32 2147483647, %v3629
        %v3648 = vand.u32 2147483647, %v3630
        %v3649 = vand.u32 2147483647, %v3631
        %v3650 = vand.u32 2147483647, %v3632
        %v3651 = vand.u32 2147483647, %v3633
        %v3652 = vand.u32 2147483647, %v3634
        %v3653 = vand.u32 2147483647, %v3635
        %v3654 = vand.u32 2147483647, %v3636
        %v3655 = vand.u32 2147483647, %v3637
        %v3656 = vand.u32 2147483647, %v3638
        %v3657 = vand.u32 2147483647, %v3639
        %v3658 = vsel %vm574, %v3640, 0.0
        %3659 = vadd.xlane.f32.xlu0 %v3658
        %v3660 = vpop.xlane.xlu0 %3659
        %v3661 = vsel %vm574, %v3641, 0.0
        %3662 = vadd.xlane.f32.xlu0 %v3661
        %v3663 = vpop.xlane.xlu0 %3662
        %v3664 = vsel %vm574, %v3642, 0.0
        %3665 = vadd.xlane.f32.xlu0 %v3664
        %v3666 = vpop.xlane.xlu0 %3665
        %v3667 = vsel %vm574, %v3643, 0.0
        %3668 = vadd.xlane.f32.xlu0 %v3667
        %v3669 = vpop.xlane.xlu0 %3668
        %v3670 = vsel %vm574, %v3644, 0.0
        %3671 = vadd.xlane.f32.xlu0 %v3670
        %v3672 = vpop.xlane.xlu0 %3671
        %v3673 = vsel %vm574, %v3645, 0.0
        %3674 = vadd.xlane.f32.xlu0 %v3673
        %v3675 = vpop.xlane.xlu0 %3674
        %v3676 = vsel %vm574, %v3646, 0.0
        %3677 = vadd.xlane.f32.xlu0 %v3676
        %v3678 = vpop.xlane.xlu0 %3677
        %v3679 = vsel %vm574, %v3647, 0.0
        %3680 = vadd.xlane.f32.xlu0 %v3679
        %v3681 = vpop.xlane.xlu0 %3680
        %v3682 = vsel %vm574, %v3648, 0.0
        %3683 = vadd.xlane.f32.xlu0 %v3682
        %v3684 = vpop.xlane.xlu0 %3683
        %v3685 = vsel %vm574, %v3649, 0.0
        %3686 = vadd.xlane.f32.xlu0 %v3685
        %v3687 = vpop.xlane.xlu0 %3686
        %v3688 = vsel %vm574, %v3650, 0.0
        %3689 = vadd.xlane.f32.xlu0 %v3688
        %v3690 = vpop.xlane.xlu0 %3689
        %v3691 = vsel %vm574, %v3651, 0.0
        %3692 = vadd.xlane.f32.xlu0 %v3691
        %v3693 = vpop.xlane.xlu0 %3692
        %v3694 = vsel %vm574, %v3652, 0.0
        %3695 = vadd.xlane.f32.xlu0 %v3694
        %v3696 = vpop.xlane.xlu0 %3695
        %v3697 = vsel %vm574, %v3653, 0.0
        %3698 = vadd.xlane.f32.xlu0 %v3697
        %v3699 = vpop.xlane.xlu0 %3698
        %v3700 = vsel %vm574, %v3654, 0.0
        %3701 = vadd.xlane.f32.xlu0 %v3700
        %v3702 = vpop.xlane.xlu0 %3701
        %v3703 = vsel %vm574, %v3655, 0.0
        %3704 = vadd.xlane.f32.xlu0 %v3703
        %v3705 = vpop.xlane.xlu0 %3704
        %v3706 = vsel %vm574, %v3656, 0.0
        %3707 = vadd.xlane.f32.xlu0 %v3706
        %v3708 = vpop.xlane.xlu0 %3707
        %v3709 = vsel %vm574, %v3657, 0.0
        %3710 = vadd.xlane.f32.xlu0 %v3709
        %v3711 = vpop.xlane.xlu0 %3710
        %v3712 = vsel %vm1003, %v2925, 0.0
        %v3713 = vsel %vm1003, %v2927, 0.0
        %v3714 = vadd.f32 %v3712, %v3713
        %v3715 = vsel %vm1003, %v2929, 0.0
        %v3716 = vadd.f32 %v3714, %v3715
        %v3717 = vsel %vm1003, %v2931, 0.0
        %v3718 = vadd.f32 %v3716, %v3717
        %v3719 = vsel %vm1003, %v2933, 0.0
        %v3720 = vadd.f32 %v3718, %v3719
        %v3721 = vsel %vm1003, %v2935, 0.0
        %v3722 = vadd.f32 %v3720, %v3721
        %v3723 = vsel %vm1003, %v2937, 0.0
        %v3724 = vadd.f32 %v3722, %v3723
        %v3725 = vsel %vm1003, %v2939, 0.0
        %v3726 = vadd.f32 %v3724, %v3725
        %v3727 = vsel %vm1003, %v2941, 0.0
        %v3728 = vadd.f32 %v3726, %v3727
        %v3729 = vsel %vm1003, %v2943, 0.0
        %v3730 = vadd.f32 %v3728, %v3729
        %v3731 = vsel %vm1003, %v2945, 0.0
        %v3732 = vadd.f32 %v3730, %v3731
        %v3733 = vsel %vm1003, %v2947, 0.0
        %v3734 = vadd.f32 %v3732, %v3733
        %v3735 = vsel %vm1003, %v2949, 0.0
        %v3736 = vadd.f32 %v3734, %v3735
        %v3737 = vsel %vm1003, %v2951, 0.0
        %v3738 = vadd.f32 %v3736, %v3737
        %v3739 = vsel %vm1003, %v2953, 0.0
        %v3740 = vadd.f32 %v3738, %v3739
        %v3741 = vsel %vm1003, %v2955, 0.0
        %v3742 = vadd.f32 %v3740, %v3741
        %3743 = vadd.xlane.f32.xlu0 %v3742
        %v3744 = vpop.xlane.xlu0 %3743
        %v3745 = vrot.slane %v3744, 4
        %v3746 = vadd.f32 %v3744, %v3745
        %v3747 = vrot.slane %v3746, 2
        %v3748 = vadd.f32 %v3746, %v3747
        %v3749 = vrot.slane %v3748, 1
        %v3750 = vadd.f32 %v3748, %v3749
        %s3751 = vtos %v3750
        %v3752 = vmul.f32 %v445, %v2921
        %3754 = vrot.lane.b32.xlu0 %v3752, 127
        %v3755 = vpop.permute.xlu0 %3754
        %v3757 = vsel %vm1003, %v3755, 0.0
        %3758 = vadd.xlane.f32.xlu0 %v3757
        %v3759 = vpop.xlane.xlu0 %3758
        %v3760 = vrot.slane %v3759, 4
        %v3761 = vadd.f32 %v3759, %v3760
        %v3762 = vrot.slane %v3761, 2
        %v3763 = vadd.f32 %v3761, %v3762
        %v3764 = vrot.slane %v3763, 1
        %v3765 = vadd.f32 %v3763, %v3764
        %s3766 = vtos %v3765
        %s3767 = sadd.f32 %s3751, %s3766
        %v3768 = vmul.f32 %v445, %v2923
        %3770 = vrot.lane.b32.xlu0 %v3768, 126
        %v3771 = vpop.permute.xlu0 %3770
        %v3773 = vsel %vm1003, %v3771, 0.0
        %3774 = vadd.xlane.f32.xlu0 %v3773
        %v3775 = vpop.xlane.xlu0 %3774
        %v3776 = vrot.slane %v3775, 4
        %v3777 = vadd.f32 %v3775, %v3776
        %v3778 = vrot.slane %v3777, 2
        %v3779 = vadd.f32 %v3777, %v3778
        %v3780 = vrot.slane %v3779, 1
        %v3781 = vadd.f32 %v3779, %v3780
        %s3782 = vtos %v3781
        %s3783 = sadd.f32 %s3767, %s3782
        %v3784 = vsel %vm1003, %v3666, 0.0
        %v3785 = vsel %vm1003, %v3669, 0.0
        %v3786 = vadd.f32 %v3784, %v3785
        %v3787 = vsel %vm1003, %v3672, 0.0
        %v3788 = vadd.f32 %v3786, %v3787
        %v3789 = vsel %vm1003, %v3675, 0.0
        %v3790 = vadd.f32 %v3788, %v3789
        %v3791 = vsel %vm1003, %v3678, 0.0
        %v3792 = vadd.f32 %v3790, %v3791
        %v3793 = vsel %vm1003, %v3681, 0.0
        %v3794 = vadd.f32 %v3792, %v3793
        %v3795 = vsel %vm1003, %v3684, 0.0
        %v3796 = vadd.f32 %v3794, %v3795
        %v3797 = vsel %vm1003, %v3687, 0.0
        %v3798 = vadd.f32 %v3796, %v3797
        %v3799 = vsel %vm1003, %v3690, 0.0
        %v3800 = vadd.f32 %v3798, %v3799
        %v3801 = vsel %vm1003, %v3693, 0.0
        %v3802 = vadd.f32 %v3800, %v3801
        %v3803 = vsel %vm1003, %v3696, 0.0
        %v3804 = vadd.f32 %v3802, %v3803
        %v3805 = vsel %vm1003, %v3699, 0.0
        %v3806 = vadd.f32 %v3804, %v3805
        %v3807 = vsel %vm1003, %v3702, 0.0
        %v3808 = vadd.f32 %v3806, %v3807
        %v3809 = vsel %vm1003, %v3705, 0.0
        %v3810 = vadd.f32 %v3808, %v3809
        %v3811 = vsel %vm1003, %v3708, 0.0
        %v3812 = vadd.f32 %v3810, %v3811
        %v3813 = vsel %vm1003, %v3711, 0.0
        %v3814 = vadd.f32 %v3812, %v3813
        %3815 = vadd.xlane.f32.xlu0 %v3814
        %v3816 = vpop.xlane.xlu0 %3815
        %v3817 = vrot.slane %v3816, 4
        %v3818 = vadd.f32 %v3816, %v3817
        %v3819 = vrot.slane %v3818, 2
        %v3820 = vadd.f32 %v3818, %v3819
        %v3821 = vrot.slane %v3820, 1
        %v3822 = vadd.f32 %v3820, %v3821
        %s3823 = vtos %v3822
        %v3824 = vmul.f32 %v445, %v3660
        %3826 = vrot.lane.b32.xlu0 %v3824, 127
        %v3827 = vpop.permute.xlu0 %3826
        %v3829 = vsel %vm1003, %v3827, 0.0
        %3830 = vadd.xlane.f32.xlu0 %v3829
        %v3831 = vpop.xlane.xlu0 %3830
        %v3832 = vrot.slane %v3831, 4
        %v3833 = vadd.f32 %v3831, %v3832
        %v3834 = vrot.slane %v3833, 2
        %v3835 = vadd.f32 %v3833, %v3834
        %v3836 = vrot.slane %v3835, 1
        %v3837 = vadd.f32 %v3835, %v3836
        %s3838 = vtos %v3837
        %s3839 = sadd.f32 %s3823, %s3838
        %v3840 = vmul.f32 %v445, %v3663
        %3842 = vrot.lane.b32.xlu0 %v3840, 126
        %v3843 = vpop.permute.xlu0 %3842
        %v3845 = vsel %vm1003, %v3843, 0.0
        %3846 = vadd.xlane.f32.xlu0 %v3845
        %v3847 = vpop.xlane.xlu0 %3846
        %v3848 = vrot.slane %v3847, 4
        %v3849 = vadd.f32 %v3847, %v3848
        %v3850 = vrot.slane %v3849, 2
        %v3851 = vadd.f32 %v3849, %v3850
        %v3852 = vrot.slane %v3851, 1
        %v3853 = vadd.f32 %v3851, %v3852
        %s3854 = vtos %v3853
        %s3855 = sadd.f32 %s3839, %s3854
        %v3856 = vrcp.pop 16.0
        %s3857 = vtos %v3856
        %s3858 = smul.f32 %s819, %s3857
        %v3859 = vrcp.pop 16.0
        %s3860 = vtos %v3859
        %s3861 = smul.f32 %s1013, %s3860
        %v3862 = vrcp.pop 256.0
        %s3863 = vtos %v3862
        %s3864 = smul.f32 %s1139, %s3863
        %v3865 = vrcp.pop 1024.0
        %s3866 = vtos %v3865
        %s3867 = smul.f32 %s1810, %s3866
        %v3868 = vrcp.pop 112.0
        %s3869 = vtos %v3868
        %s3870 = smul.f32 %s2757, %s3869
        %v3871 = vrcp.pop 260.0
        %s3872 = vtos %v3871
        %s3873 = smul.f32 %s3783, %s3872
        %v3874 = vrcp.pop 4160.0
        %s3875 = vtos %v3874
        %s3876 = smul.f32 %s3855, %s3875
        %vm3877 = vcmp.eq.s32.totalorder %v459, 0
        %vm3878 = vcmp.eq.s32.totalorder %v476, 0
        %vm3879 = vmand %vm3877, %vm3878
        %v3880 = vstv %s3858
        %v3881 = vsel %vm3879, %v3880, 0.0
        %v3882 = vadd.f32 %v3881, 0.0
        %vm3883 = vcmp.eq.s32.totalorder %v476, 1
        %vm3884 = vmand %vm3877, %vm3883
        %v3885 = vstv %s3861
        %v3886 = vsel %vm3884, %v3885, 0.0
        %v3887 = vadd.f32 %v3882, %v3886
        %vm3888 = vcmp.eq.s32.totalorder %v476, 2
        %vm3889 = vmand %vm3877, %vm3888
        %v3890 = vstv %s3864
        %v3891 = vsel %vm3889, %v3890, 0.0
        %v3892 = vadd.f32 %v3887, %v3891
        %vm3893 = vcmp.eq.s32.totalorder %v476, 3
        %vm3894 = vmand %vm3877, %vm3893
        %v3895 = vstv %s3867
        %v3896 = vsel %vm3894, %v3895, 0.0
        %v3897 = vadd.f32 %v3892, %v3896
        %vm3898 = vcmp.eq.s32.totalorder %v476, 4
        %vm3899 = vmand %vm3877, %vm3898
        %v3900 = vstv %s3870
        %v3901 = vsel %vm3899, %v3900, 0.0
        %v3902 = vadd.f32 %v3897, %v3901
        %vm3903 = vcmp.eq.s32.totalorder %v476, 5
        %vm3904 = vmand %vm3877, %vm3903
        %v3905 = vstv %s3873
        %v3906 = vsel %vm3904, %v3905, 0.0
        %v3907 = vadd.f32 %v3902, %v3906
        %vm3908 = vcmp.eq.s32.totalorder %v476, 6
        %vm3909 = vmand %vm3877, %vm3908
        %v3910 = vstv %s3876
        %v3911 = vsel %vm3909, %v3910, 0.0
        %v3912 = vadd.f32 %v3907, %v3911
        %vm3913 = vcmp.eq.s32.totalorder %v476, 7
        %vm3914 = vmand %vm3877, %vm3913
        %v3915 = vstv %s2740
        %v3916 = vsel %vm3914, %v3915, 0.0
        %v3917 = vadd.f32 %v3912, %v3916
        %3918 = vst [vmem:[%s430] sm:$0xff] %v3917
        %s3919 = sand.u32 %s301, 1
        %s3920 = scalar_lea.sflag [#allocation3], %s3919
        %s3921 = sand.u32 %s301, 1
        %s3922 = smul.addr %s3921, 8
        %s3923 = scalar_lea.vmem [#allocation2], %s3922
        // Predicated region
        $region69: #{tpu_custom_call.1} parent=67 // pred_check
          %p3924 = pneg %p311
        $region70: #{tpu_custom_call.1} parent=67 // pred_check_branch
          %3926 = sbr.rel (%p3924) target = $region72
        $region71: #{tpu_custom_call.1} parent=67 // pred_region
          %s3928 = ssub.s32 128, 128
          %3929 = vsyncadd %s3920, %s3928
          %s3930 = smul.addr %s26, 128
          %s3931 = scalar_lea.hbm %s12, %s3930
          %s3933 = sshll.u32 %s3923, 4
          %s3934 = int_to_ptr.vmem [resolvable:$true] %s3933
          %3936 = dma.vmem_to_hbm [thread:$0]  %s3934, 128, %s3931, %s3920
        $region72: #{tpu_custom_call.1} parent=67 // pred_fallthru
          _
      $region68: #{tpu_custom_call.1} parent=5 // pred_fallthru
        _
      %p3937 = scmp.le.s32.totalorder 2, %s21
      // Predicated region
      $region73: #{tpu_custom_call.1} parent=5 // pred_check
        %p3938 = pneg %p3937
      $region74: #{tpu_custom_call.1} parent=5 // pred_check_branch
        %3940 = sbr.rel (%p3938) target = $region76
      $region75: #{tpu_custom_call.1} parent=5 // pred_region
        %s3941 = ssub.s32 %s21, 2
        // Predicated region
        $region77: #{tpu_custom_call.1} parent=75 // pred_check
          %p3942 = pneg %p317
        $region78: #{tpu_custom_call.1} parent=75 // pred_check_branch
          %3944 = sbr.rel (%p3942) target = $region80
        $region79: #{tpu_custom_call.1} parent=75 // pred_region
          %s3945 = sand.u32 %s302, 1
          %s3946 = scalar_lea.sflag [#allocation3], %s3945
          %s3947 = sand.u32 %s302, 1
          %s3948 = smul.addr %s3947, 8
          %s3949 = scalar_lea.vmem [#allocation2], %s3948
          %3950 = dma.done %s3946, 128
        $region80: #{tpu_custom_call.1} parent=75 // pred_fallthru
          _
      $region76: #{tpu_custom_call.1} parent=5 // pred_fallthru
        _
    $region6: #{tpu_custom_call.1} parent=1 // loop_footer
      %s25 = sadd.s32 1, %s21
    $region7: #{tpu_custom_call.1} parent=1 // loop_footer_branch
      %20 = sbr.rel target = $region3
    $region8: #{tpu_custom_call.1} parent=1 // loop_exit
      _
    %3951 = vsyncpa [#allocation3], 1
    %s3952 = scalar_lea.sflag [#allocation3], 1
    %3953 = vsyncpa %s3952, 1

</llo_original>
